<compile_context>
chip_gen: v6e
topology: v6e:2x2x1
jax: 0.10.0
libtpu: 0.0.40
codegen_flags: <defaults>
</compile_context>

<pallas_src>
import functools
import math

import jax
import jax.numpy as jnp
from jax.experimental import pallas as pl
from jax.experimental.pallas import tpu as pltpu


# ----------------------------------------------------------------------------
# In-kernel helpers (f32 vector math)
# ----------------------------------------------------------------------------
def _layernorm(x, gamma, beta, eps=1e-5):
    # PyTorch nn.LayerNorm over last dim, biased variance, eps=1e-5
    mean = jnp.mean(x, axis=-1, keepdims=True)
    var = jnp.mean((x - mean) ** 2, axis=-1, keepdims=True)
    return (x - mean) * jax.lax.rsqrt(var + eps) * gamma + beta


def _gelu_exact(x):
    # PyTorch F.gelu default: exact erf-based GELU
    return 0.5 * x * (1.0 + jax.lax.erf(x * (1.0 / math.sqrt(2.0))))


# ----------------------------------------------------------------------------
# Pallas kernel: one TransformerBlock, grid = (batch, q-tile, kv-tile)
#   kv axis is "arbitrary": online-softmax accumulation in VMEM scratch,
#   attention output + MLP + LayerNorms run on the last kv step only.
# ----------------------------------------------------------------------------
def transformer_block_kernel(num_heads, separate_q, *refs):
    if separate_q:
        (xq_ref, xkv_ref, mask_ref, wq_ref, wk_ref, wv_ref, wo_ref,
         w1_ref, w2_ref, vec_ref, b1_ref,
         out_ref, q_scr, m_scr, l_scr, acc_scr) = refs
    else:
        (xq_ref, mask_ref, wq_ref, wk_ref, wv_ref, wo_ref,
         w1_ref, w2_ref, vec_ref, b1_ref,
         out_ref, q_scr, m_scr, l_scr, acc_scr) = refs
        xkv_ref = xq_ref

    ki = pl.program_id(2)
    n_kv = pl.num_programs(2)

    _, TQ, H = xq_ref.shape
    TK = xkv_ref.shape[1]
    nh = num_heads
    d = H // nh

    # packed per-layer vectors: rows = [bq, bk, bv, bo, b2, g1, be1, g2, be2]
    vec = vec_ref[...]                                   # (9, H) f32
    bq, bk, bv, bo = vec[0:1], vec[1:2], vec[2:3], vec[3:4]
    b2 = vec[4:5]
    g1, be1, g2, be2 = vec[5:6], vec[6:7], vec[7:8], vec[8:9]

    # ---- once per (batch, q-tile): reset running stats, project queries ----
    @pl.when(ki == 0)
    def _init():
        m_scr[...] = jnp.full_like(m_scr, -1e30)
        l_scr[...] = jnp.zeros_like(l_scr)
        acc_scr[...] = jnp.zeros_like(acc_scr)
        # 1/sqrt(d) is pre-folded into wq/bq by prepare_layer_params.
        q = jnp.dot(xq_ref[0].astype(jnp.bfloat16), wq_ref[...],
                    preferred_element_type=jnp.float32) + bq
        q_scr[...] = q.reshape(TQ, nh, d).astype(jnp.bfloat16)

    # ---- every kv step: K/V projection for this tile + online softmax ------
    xkv_b = xkv_ref[0].astype(jnp.bfloat16)
    k = jnp.dot(xkv_b, wk_ref[...], preferred_element_type=jnp.float32) + bk
    v = jnp.dot(xkv_b, wv_ref[...], preferred_element_type=jnp.float32) + bv
    kh = k.reshape(TK, nh, d).astype(jnp.bfloat16)       # (TK, nh, d)
    vh = v.reshape(TK, nh, d).astype(jnp.bfloat16)
    qh = q_scr[...]                                      # (TQ, nh, d) bf16

    # all heads in one batched MXU contraction -> (nh, TQ, TK), f32 acc
    s = jnp.einsum("qhd,khd->hqk", qh, kh,
                   preferred_element_type=jnp.float32)
    # masked_fill(mask == 0, -1e9) exactly (keep is 0/1 in f32)
    keep = (mask_ref[0].astype(jnp.int32) != 0).astype(jnp.float32)  # (TQ, TK)
    s = s * keep[None, :, :] + (keep[None, :, :] - 1.0) * jnp.float32(1e9)

    m_prev = m_scr[...]                                  # (nh, TQ, 1)
    m_new = jnp.maximum(m_prev, jnp.max(s, axis=-1, keepdims=True))
    alpha = jnp.exp(m_prev - m_new)
    p = jnp.exp(s - m_new)
    l_scr[...] = alpha * l_scr[...] + jnp.sum(p, axis=-1, keepdims=True)
    pv = jnp.einsum("hqk,khd->hqd", p.astype(jnp.bfloat16), vh,
                    preferred_element_type=jnp.float32)  # (nh, TQ, d)
    acc_scr[...] = alpha * acc_scr[...] + pv
    m_scr[...] = m_new

    # ---- last kv step: out-proj, residual+LN, MLP, residual+LN -------------
    @pl.when(ki == n_kv - 1)
    def _finalize():
        inv_l = 1.0 / l_scr[...]                         # exact; tiny tensor
        oh = acc_scr[...] * inv_l                        # (nh, TQ, d) f32
        attn = jnp.transpose(oh, (1, 0, 2)).reshape(TQ, H)
        attn = jnp.dot(attn.astype(jnp.bfloat16), wo_ref[...],
                       preferred_element_type=jnp.float32) + bo

        xq = xq_ref[0].astype(jnp.float32)
        y = _layernorm(attn + xq, g1, be1)

        # TODO(synk): stream w1/w2 over ff tiles for very large H/ff.
        h1 = jnp.dot(y.astype(jnp.bfloat16), w1_ref[...],
                     preferred_element_type=jnp.float32) + b1_ref[...]
        h1 = _gelu_exact(h1)
        h2 = jnp.dot(h1.astype(jnp.bfloat16), w2_ref[...],
                     preferred_element_type=jnp.float32) + b2

        out_ref[0] = _layernorm(h2 + y, g2, be2).astype(out_ref.dtype)


# ----------------------------------------------------------------------------
# Parameter / mask preparation (do ONCE, outside the per-layer launch path)
# ----------------------------------------------------------------------------
_VEC_ORDER = ("bq", "bk", "bv", "bo", "b2", "g1", "be1", "g2", "be2")


def prepare_layer_params(params, num_heads):
    H = params["wq"].shape[0]
    ff = params["w1"].shape[-1]
    d = H // num_heads
    scale = 1.0 / math.sqrt(d)
    prepped = {
        # fold the 1/sqrt(d) attention scale into the query projection
        "wq": (params["wq"] * scale).astype(jnp.bfloat16),
        "wk": params["wk"].astype(jnp.bfloat16),
        "wv": params["wv"].astype(jnp.bfloat16),
        "wo": params["wo"].astype(jnp.bfloat16),
        "w1": params["w1"].astype(jnp.bfloat16),
        "w2": params["w2"].astype(jnp.bfloat16),
        "b1": params["b1"].reshape(1, ff).astype(jnp.float32),
    }
    rows = []
    for name in _VEC_ORDER:
        r = params[name].reshape(1, H).astype(jnp.float32)
        if name == "bq":
            r = r * scale
        rows.append(r)
    prepped["vec"] = jnp.concatenate(rows, axis=0)       # (9, H) slab, one DMA
    return prepped


def prepare_decoder_params(layer_params, num_heads):
    return [prepare_layer_params(p, num_heads) for p in layer_params]


def prepare_mask(mask):
    # compress the attention mask to int8 once (4x less HBM traffic per layer)
    return (mask != 0).astype(jnp.int8)


# ----------------------------------------------------------------------------
# Tiling / VMEM helpers
# ----------------------------------------------------------------------------
def _default_q_tile(S, B):
    if S > 256:
        for t in (256, 128, 64, 32, 16, 8):     # 256-aligned preferred (v6e/v7x)
            if S % t == 0:
                return t
        return S
    # small sequences: if B == 1 split the sequence so dual-TC chips (v7x)
    # still get >= 2 parallel grid items
    if B == 1 and S >= 16 and S % 2 == 0 and (S // 2) % 8 == 0:
        return S // 2
    return S


def _default_kv_tile(S):
    if S > 512:
        for t in (512, 256, 128):               # lane-dim of the mask block
            if S % t == 0:
                return t
    return S


@functools.lru_cache(maxsize=None)
def _single_buffer_supported():
    """Probe whether pl.Buffered(1) (single-buffered grid-invariant blocks) is
    supported by the installed jax; fall back to default double-buffering."""
    try:
        def _k(x_ref, o_ref):
            o_ref[...] = x_ref[...] * 2.0
        out = pl.pallas_call(
            _k,
            out_shape=jax.ShapeDtypeStruct((16, 128), jnp.float32),
            grid=(2,),
            in_specs=[pl.BlockSpec((8, 128), lambda i: (0, 0),
                                   pipeline_mode=pl.Buffered(1))],
            out_specs=pl.BlockSpec((8, 128), lambda i: (i, 0)),
        )(jnp.ones((8, 128), jnp.float32))
        out = jax.block_until_ready(out)
        return bool(jnp.allclose(out, 2.0))
    except Exception:
        return False


def _vmem_limit_bytes(requested):
    try:
        cap = int(pltpu.get_tpu_info().vmem_capacity_bytes)
    except Exception:
        cap = 128 << 20
    ceiling = int(cap * 0.85)        # headroom for Mosaic-internal scratch
    return int(max(min(requested, ceiling), min(32 << 20, ceiling)))


# ----------------------------------------------------------------------------
# Wrappers
# ----------------------------------------------------------------------------
def transformer_block(x, mask_i8, p, num_heads, *, q_tile=None, kv_tile=None):
    B, S, H = x.shape
    ff = p["w1"].shape[-1]
    assert H % num_heads == 0
    d = H // num_heads
    # NOTE: for realistic configs keep d a multiple of 128 (256 preferred on
    # v6e/v7x) so the per-head contractions keep the MXU full.

    q_tile = _default_q_tile(S, B) if q_tile is None else q_tile
    kv_tile = _default_kv_tile(S) if kv_tile is None else kv_tile
    if q_tile != S and (S % q_tile != 0 or q_tile % 8 != 0):
        q_tile = S
    if kv_tile != S and (S % kv_tile != 0 or kv_tile % 128 != 0):
        kv_tile = S
    nq, nkv = S // q_tile, S // kv_tile
    separate_q = not (nq == 1 and nkv == 1)

    buffered1 = pl.Buffered(1) if _single_buffer_supported() else None

    def const_spec(shape):
        idx = lambda b, qi, ki: (0,) * len(shape)
        if buffered1 is not None:
            return pl.BlockSpec(shape, idx, pipeline_mode=buffered1)
        return pl.BlockSpec(shape, idx)

    xq_spec = pl.BlockSpec((1, q_tile, H), lambda b, qi, ki: (b, qi, 0))
    xkv_spec = pl.BlockSpec((1, kv_tile, H), lambda b, qi, ki: (b, ki, 0))
    mask_spec = pl.BlockSpec((1, q_tile, kv_tile), lambda b, qi, ki: (b, qi, ki))
    weight_specs = [const_spec((H, H)), const_spec((H, H)),
                    const_spec((H, H)), const_spec((H, H)),
                    const_spec((H, ff)), const_spec((ff, H)),
                    const_spec((9, H)), const_spec((1, ff))]
    weights = (p["wq"], p["wk"], p["wv"], p["wo"],
               p["w1"], p["w2"], p["vec"], p["b1"])

    if separate_q:
        in_specs = [xq_spec, xkv_spec, mask_spec] + weight_specs
        operands = (x, x, mask_i8) + weights
    else:
        # nq == nkv == 1: the query tile and the KV tile are the same block;
        # pass x once (saves a full (S,H) DMA + its double buffer)
        in_specs = [xq_spec, mask_spec] + weight_specs
        operands = (x, mask_i8) + weights

    out_spec = pl.BlockSpec((1, q_tile, H), lambda b, qi, ki: (b, qi, 0))

    scratch_shapes = [
        pltpu.VMEM((q_tile, num_heads, d), jnp.bfloat16),   # cached scaled q
        pltpu.VMEM((num_heads, q_tile, 1), jnp.float32),    # running max
        pltpu.VMEM((num_heads, q_tile, 1), jnp.float32),    # running denom
        pltpu.VMEM((num_heads, q_tile, d), jnp.float32),    # output accumulator
    ]

    # explicit scoped-VMEM budget for the block working set
    wbuf = 1 if buffered1 is not None else 2
    weight_bytes = wbuf * ((4 * H * H + 2 * H * ff) * 2 + (9 * H + ff) * 4)
    stream_bytes = 2 * (q_tile * H * 4 + kv_tile * H * 4
                        + q_tile * kv_tile + q_tile * H * 4)
    scratch_bytes = (q_tile * H * 2
                     + num_heads * q_tile * (2 * 128 + max(d, 128)) * 4)
    temp_bytes = (3 * num_heads * q_tile * kv_tile * 4      # s, p, mask math
                  + 6 * kv_tile * H * 4                     # k, v, casts
                  + 2 * q_tile * ff * 4                     # MLP hidden
                  + 8 * q_tile * H * 4)                     # misc activations
    requested = weight_bytes + stream_bytes + scratch_bytes + temp_bytes + (4 << 20)

    kernel = functools.partial(transformer_block_kernel, num_heads, separate_q)
    return pl.pallas_call(
        kernel,
        out_shape=jax.ShapeDtypeStruct((B, S, H), x.dtype),
        grid=(B, nq, nkv),
        in_specs=in_specs,
        out_specs=out_spec,
        scratch_shapes=scratch_shapes,
        compiler_params=pltpu.CompilerParams(
            dimension_semantics=("parallel", "parallel", "arbitrary"),
            vmem_limit_bytes=_vmem_limit_bytes(requested)),
    )(*operands)


def decoder_forward_prepared(x, mask_i8, prepared_layers, num_heads,
                             *, q_tile=None, kv_tile=None):
    for p in prepared_layers:
        x = transformer_block(x, mask_i8, p, num_heads,
                              q_tile=q_tile, kv_tile=kv_tile)
    return x


def decoder_forward(x, mask, layer_params, num_heads, **kw):
    # convenience wrapper; for repeated calls prepare once and reuse the
    # prepared params / int8 mask (see __main__).
    return decoder_forward_prepared(
        x, prepare_mask(mask), prepare_decoder_params(layer_params, num_heads),
        num_heads, **kw)


# ----------------------------------------------------------------------------
# Pure-JAX f32 reference (for correctness check)
# ----------------------------------------------------------------------------
def _ref_block(x, mask, p, num_heads):
    B, S, H = x.shape
    d = H // num_heads
    q = x @ p["wq"] + p["bq"]
    k = x @ p["wk"] + p["bk"]
    v = x @ p["wv"] + p["bv"]
    q = q.reshape(B, S, num_heads, d).transpose(0, 2, 1, 3)
    k = k.reshape(B, S, num_heads, d).transpose(0, 2, 1, 3)
    v = v.reshape(B, S, num_heads, d).transpose(0, 2, 1, 3)
    s = jnp.einsum("bhqd,bhkd->bhqk", q, k) / jnp.sqrt(jnp.float32(d))
    s = jnp.where(mask[:, None, :, :] == 0, -1e9, s)
    a = jax.nn.softmax(s, axis=-1)
    o = jnp.einsum("bhqk,bhkd->bhqd", a, v).transpose(0, 2, 1, 3).reshape(B, S, H)
    o = o @ p["wo"] + p["bo"]

    def ln(z, g, b):
        m = jnp.mean(z, -1, keepdims=True)
        var = jnp.mean((z - m) ** 2, -1, keepdims=True)
        return (z - m) / jnp.sqrt(var + 1e-5) * g + b

    x = ln(o + x, p["g1"], p["be1"])
    h = jax.nn.gelu(x @ p["w1"] + p["b1"], approximate=False)
    h = h @ p["w2"] + p["b2"]
    x = ln(h + x, p["g2"], p["be2"])
    return x


def _ref_decoder(x, mask, layer_params, num_heads):
    for p in layer_params:
        x = _ref_block(x, mask, p, num_heads)
    return x


# ----------------------------------------------------------------------------
# Deterministic parameter init (shapes follow the PyTorch module's __init__)
# ----------------------------------------------------------------------------
def init_layer_params(key, hidden_dim, ff_dim):
    ks = jax.random.split(key, 16)
    s = 0.05

    def nrm(k, shape, scale):
        return jax.random.normal(k, shape, jnp.float32) * scale

    return {
        "wq": nrm(ks[0], (hidden_dim, hidden_dim), s),
        "bq": nrm(ks[1], (1, hidden_dim), 0.02),
        "wk": nrm(ks[2], (hidden_dim, hidden_dim), s),
        "bk": nrm(ks[3], (1, hidden_dim), 0.02),
        "wv": nrm(ks[4], (hidden_dim, hidden_dim), s),
        "bv": nrm(ks[5], (1, hidden_dim), 0.02),
        "wo": nrm(ks[6], (hidden_dim, hidden_dim), s),
        "bo": nrm(ks[7], (1, hidden_dim), 0.02),
        "w1": nrm(ks[8], (hidden_dim, ff_dim), s),
        "b1": nrm(ks[9], (1, ff_dim), 0.02),
        "w2": nrm(ks[10], (ff_dim, hidden_dim), s),
        "b2": nrm(ks[11], (1, hidden_dim), 0.02),
        "g1": 1.0 + nrm(ks[12], (1, hidden_dim), 0.05),
        "be1": nrm(ks[13], (1, hidden_dim), 0.02),
        "g2": 1.0 + nrm(ks[14], (1, hidden_dim), 0.05),
        "be2": nrm(ks[15], (1, hidden_dim), 0.02),
    }


if __name__ == "__main__":
    _single_buffer_supported()   # warm the single-buffering probe once

    def run_case(B, S, H, num_heads, ff_dim, num_layers, q_tile, kv_tile, key):
        kx, *kls = jax.random.split(key, 1 + num_layers)
        x = jax.random.normal(kx, (B, S, H), jnp.float32)
        # causal attention mask (B, S, S): 1 = attend, 0 = masked
        mask = jnp.broadcast_to(
            jnp.tril(jnp.ones((S, S), jnp.float32))[None, :, :], (B, S, S))
        layer_params = [init_layer_params(k, H, ff_dim) for k in kls]

        # prepare once (bf16 weights, packed vec slab, folded 1/sqrt(d), int8 mask)
        mask_i8 = prepare_mask(mask)
        prepped = prepare_decoder_params(layer_params, num_heads)
        fwd = jax.jit(functools.partial(decoder_forward_prepared,
                                        num_heads=num_heads,
                                        q_tile=q_tile, kv_tile=kv_tile))
        out = jax.block_until_ready(fwd(x, mask_i8, prepped))

        ref = _ref_decoder(x, mask, layer_params, num_heads)
        assert out.shape == (B, S, H)
        err = float(jnp.max(jnp.abs(out - ref)))
        # tolerance vs. the pure-f32 reference: kernel matmuls use bf16 inputs
        # with f32 accumulation
        assert jnp.allclose(out, ref, atol=3e-2, rtol=3e-2), err
        return err

    # Case 1: module-scale shapes; single q/kv tile -> single-x fast path.
    run_case(B=2, S=8, H=32, num_heads=4, ff_dim=64, num_layers=2,
             q_tile=None, kv_tile=None, key=jax.random.PRNGKey(0))
    # Case 2: exercises q tiling + flash-style KV streaming (online softmax
    # across kv grid steps) + int8 mask tiling (nq=2, nkv=2).
    run_case(B=2, S=256, H=64, num_heads=4, ff_dim=128, num_layers=2,
             q_tile=128, kv_tile=128, key=jax.random.PRNGKey(1))

    print("KERNEL_OK")
</pallas_src>

<mosaic_0001>
module attributes {stable_mosaic.version = 11 : i64} {
  func.func @_k(%arg0: i32, %arg1: memref<8x128xf32, #tpu.memory_space<vmem>>, %arg2: memref<8x128xf32, #tpu.memory_space<vmem>>) attributes {dimension_semantics = [#tpu.dimension_semantics<arbitrary>], iteration_bounds = array<i64: 2>, scalar_prefetch = 0 : i64, scratch_operands = 0 : i64, tpu.core_type = #tpu.core_type<tc>, window_params = [{pipeline_mode = #tpu.pipeline_mode<synchronous>, transform_indices = @transform_0, window_bounds = array<i64: 8, 128>}, {transform_indices = @transform_1, window_bounds = array<i64: 8, 128>}]} {
    %c0 = arith.constant 0 : index
    %c0_0 = arith.constant 0 : index
    %0 = vector.load %arg1[%c0, %c0_0] : memref<8x128xf32, #tpu.memory_space<vmem>>, vector<8x128xf32>
    %cst = arith.constant 2.000000e+00 : f32
    %1 = vector.broadcast %cst : f32 to vector<8x128xf32>
    %2 = arith.mulf %0, %1 : vector<8x128xf32>
    %c0_1 = arith.constant 0 : index
    %c0_2 = arith.constant 0 : index
    %3 = vector.load %arg2[%c0_1, %c0_2] : memref<8x128xf32, #tpu.memory_space<vmem>>, vector<8x128xf32>
    tpu.vector_store %arg2[%c0_1, %c0_2], %2 {strides = array<i32>} : memref<8x128xf32, #tpu.memory_space<vmem>>, vector<8x128xf32>,
    return
  }
  func.func @transform_0(%arg0: i32) -> (i32, i32) {
    %c0_i32 = arith.constant 0 : i32
    %c0_i32_0 = arith.constant 0 : i32
    %c0_i32_1 = arith.constant 0 : i32
    return %c0_i32, %c0_i32_0 : i32, i32
  }
  func.func @transform_1(%arg0: i32) -> (i32, i32) {
    %c0_i32 = arith.constant 0 : i32
    %c0_i32_0 = arith.constant 0 : i32
    return %arg0, %c0_i32 : i32, i32
  }
}

module attributes {stable_mosaic.version = 11 : i64} {
  func.func @transformer_block_kernel(%arg0: i32, %arg1: i32, %arg2: i32, %arg3: memref<1x8x32xf32, #tpu.memory_space<vmem>>, %arg4: memref<1x8x8xi8, #tpu.memory_space<vmem>>, %arg5: memref<32x32xbf16, #tpu.memory_space<vmem>>, %arg6: memref<32x32xbf16, #tpu.memory_space<vmem>>, %arg7: memref<32x32xbf16, #tpu.memory_space<vmem>>, %arg8: memref<32x32xbf16, #tpu.memory_space<vmem>>, %arg9: memref<32x64xbf16, #tpu.memory_space<vmem>>, %arg10: memref<64x32xbf16, #tpu.memory_space<vmem>>, %arg11: memref<9x32xf32, #tpu.memory_space<vmem>>, %arg12: memref<1x64xf32, #tpu.memory_space<vmem>>, %arg13: memref<1x8x32xf32, #tpu.memory_space<vmem>>, %arg14: memref<8x4x8xbf16, #tpu.memory_space<vmem>>, %arg15: memref<4x8x1xf32, #tpu.memory_space<vmem>>, %arg16: memref<4x8x1xf32, #tpu.memory_space<vmem>>, %arg17: memref<4x8x8xf32, #tpu.memory_space<vmem>>) attributes {dimension_semantics = [#tpu.dimension_semantics<parallel>, #tpu.dimension_semantics<parallel>, #tpu.dimension_semantics<arbitrary>], iteration_bounds = array<i64: 2, 1, 1>, scalar_prefetch = 0 : i64, scratch_operands = 4 : i64, tpu.core_type = #tpu.core_type<tc>, window_params = [{transform_indices = @transform_0, window_bounds = array<i64: 1, 8, 32>}, {transform_indices = @transform_1, window_bounds = array<i64: 1, 8, 8>}, {pipeline_mode = #tpu.pipeline_mode<synchronous>, transform_indices = @transform_2, window_bounds = array<i64: 32, 32>}, {pipeline_mode = #tpu.pipeline_mode<synchronous>, transform_indices = @transform_3, window_bounds = array<i64: 32, 32>}, {pipeline_mode = #tpu.pipeline_mode<synchronous>, transform_indices = @transform_4, window_bounds = array<i64: 32, 32>}, {pipeline_mode = #tpu.pipeline_mode<synchronous>, transform_indices = @transform_5, window_bounds = array<i64: 32, 32>}, {pipeline_mode = #tpu.pipeline_mode<synchronous>, transform_indices = @transform_6, window_bounds = array<i64: 32, 64>}, {pipeline_mode = #tpu.pipeline_mode<synchronous>, transform_indices = @transform_7, window_bounds = array<i64: 64, 32>}, {pipeline_mode = #tpu.pipeline_mode<synchronous>, transform_indices = @transform_8, window_bounds = array<i64: 9, 32>}, {pipeline_mode = #tpu.pipeline_mode<synchronous>, transform_indices = @transform_9, window_bounds = array<i64: 1, 64>}, {transform_indices = @transform_10, window_bounds = array<i64: 1, 8, 32>}]} {
    %c0 = arith.constant 0 : index
    %c0_0 = arith.constant 0 : index
    %0 = vector.load %arg11[%c0, %c0_0] : memref<9x32xf32, #tpu.memory_space<vmem>>, vector<9x32xf32>
    %1 = vector.extract_strided_slice %0 {offsets = [0, 0], sizes = [1, 32], strides = [1, 1]} : vector<9x32xf32> to vector<1x32xf32>
    %2 = vector.extract_strided_slice %0 {offsets = [1, 0], sizes = [1, 32], strides = [1, 1]} : vector<9x32xf32> to vector<1x32xf32>
    %3 = vector.extract_strided_slice %0 {offsets = [2, 0], sizes = [1, 32], strides = [1, 1]} : vector<9x32xf32> to vector<1x32xf32>
    %4 = vector.extract_strided_slice %0 {offsets = [3, 0], sizes = [1, 32], strides = [1, 1]} : vector<9x32xf32> to vector<1x32xf32>
    %5 = vector.extract_strided_slice %0 {offsets = [4, 0], sizes = [1, 32], strides = [1, 1]} : vector<9x32xf32> to vector<1x32xf32>
    %6 = vector.extract_strided_slice %0 {offsets = [5, 0], sizes = [1, 32], strides = [1, 1]} : vector<9x32xf32> to vector<1x32xf32>
    %7 = vector.extract_strided_slice %0 {offsets = [6, 0], sizes = [1, 32], strides = [1, 1]} : vector<9x32xf32> to vector<1x32xf32>
    %8 = vector.extract_strided_slice %0 {offsets = [7, 0], sizes = [1, 32], strides = [1, 1]} : vector<9x32xf32> to vector<1x32xf32>
    %9 = vector.extract_strided_slice %0 {offsets = [8, 0], sizes = [1, 32], strides = [1, 1]} : vector<9x32xf32> to vector<1x32xf32>
    %c0_i32 = arith.constant 0 : i32
    %10 = arith.cmpi eq, %arg2, %c0_i32 : i32
    %11 = arith.extui %10 : i1 to i32
    %c0_i32_1 = arith.constant 0 : i32
    %12 = arith.cmpi ne, %11, %c0_i32_1 : i32
    scf.if %12 {
      %cst_43 = arith.constant -1.000000e+30 : f32
      %73 = vector.broadcast %cst_43 : f32 to vector<4x8x1xf32>
      %c0_44 = arith.constant 0 : index
      %c0_45 = arith.constant 0 : index
      %c0_46 = arith.constant 0 : index
      %74 = vector.load %arg15[%c0_44, %c0_45, %c0_46] : memref<4x8x1xf32, #tpu.memory_space<vmem>>, vector<4x8x1xf32>
      tpu.vector_store %arg15[%c0_44, %c0_45, %c0_46], %73 {strides = array<i32>} : memref<4x8x1xf32, #tpu.memory_space<vmem>>, vector<4x8x1xf32>,
      %cst_47 = arith.constant 0.000000e+00 : f32
      %75 = vector.broadcast %cst_47 : f32 to vector<4x8x1xf32>
      %c0_48 = arith.constant 0 : index
      %c0_49 = arith.constant 0 : index
      %c0_50 = arith.constant 0 : index
      %76 = vector.load %arg16[%c0_48, %c0_49, %c0_50] : memref<4x8x1xf32, #tpu.memory_space<vmem>>, vector<4x8x1xf32>
      tpu.vector_store %arg16[%c0_48, %c0_49, %c0_50], %75 {strides = array<i32>} : memref<4x8x1xf32, #tpu.memory_space<vmem>>, vector<4x8x1xf32>,
      %cst_51 = arith.constant 0.000000e+00 : f32
      %77 = vector.broadcast %cst_51 : f32 to vector<4x8x8xf32>
      %c0_52 = arith.constant 0 : index
      %c0_53 = arith.constant 0 : index
      %c0_54 = arith.constant 0 : index
      %78 = vector.load %arg17[%c0_52, %c0_53, %c0_54] : memref<4x8x8xf32, #tpu.memory_space<vmem>>, vector<4x8x8xf32>
      tpu.vector_store %arg17[%c0_52, %c0_53, %c0_54], %77 {strides = array<i32>} : memref<4x8x8xf32, #tpu.memory_space<vmem>>, vector<4x8x8xf32>,
      %c0_55 = arith.constant 0 : index
      %c0_56 = arith.constant 0 : index
      %c0_57 = arith.constant 0 : index
      %79 = vector.load %arg3[%c0_55, %c0_56, %c0_57] : memref<1x8x32xf32, #tpu.memory_space<vmem>>, vector<1x8x32xf32>
      %80 = vector.shape_cast %79 : vector<1x8x32xf32> to vector<8x32xf32>
      %81 = arith.truncf %80 : vector<8x32xf32> to vector<8x32xbf16>
      %c0_58 = arith.constant 0 : index
      %c0_59 = arith.constant 0 : index
      %82 = vector.load %arg5[%c0_58, %c0_59] : memref<32x32xbf16, #tpu.memory_space<vmem>>, vector<32x32xbf16>
      %cst_60 = arith.constant dense<0.000000e+00> : vector<8x32xf32>
      %83 = tpu.matmul %81, %82, %cst_60 {dimension_numbers = #tpu.dot_dimension_numbers<[1], [0], [0], [1], [0, 0, 1, 1], [], []>} : vector<8x32xbf16>, vector<32x32xbf16>, vector<8x32xf32> -> vector<8x32xf32>
      %84 = vector.broadcast %1 : vector<1x32xf32> to vector<8x32xf32>
      %85 = arith.addf %83, %84 : vector<8x32xf32>
      %86 = vector.shape_cast %85 : vector<8x32xf32> to vector<8x4x8xf32>
      %87 = arith.truncf %86 : vector<8x4x8xf32> to vector<8x4x8xbf16>
      %c0_61 = arith.constant 0 : index
      %c0_62 = arith.constant 0 : index
      %c0_63 = arith.constant 0 : index
      %88 = vector.load %arg14[%c0_61, %c0_62, %c0_63] : memref<8x4x8xbf16, #tpu.memory_space<vmem>>, vector<8x4x8xbf16>
      tpu.vector_store %arg14[%c0_61, %c0_62, %c0_63], %87 {strides = array<i32>} : memref<8x4x8xbf16, #tpu.memory_space<vmem>>, vector<8x4x8xbf16>,
    } else {
    }
    %c0_2 = arith.constant 0 : index
    %c0_3 = arith.constant 0 : index
    %c0_4 = arith.constant 0 : index
    %13 = vector.load %arg3[%c0_2, %c0_3, %c0_4] : memref<1x8x32xf32, #tpu.memory_space<vmem>>, vector<1x8x32xf32>
    %14 = vector.shape_cast %13 : vector<1x8x32xf32> to vector<8x32xf32>
    %15 = arith.truncf %14 : vector<8x32xf32> to vector<8x32xbf16>
    %c0_5 = arith.constant 0 : index
    %c0_6 = arith.constant 0 : index
    %16 = vector.load %arg6[%c0_5, %c0_6] : memref<32x32xbf16, #tpu.memory_space<vmem>>, vector<32x32xbf16>
    %cst = arith.constant dense<0.000000e+00> : vector<8x32xf32>
    %17 = tpu.matmul %15, %16, %cst {dimension_numbers = #tpu.dot_dimension_numbers<[1], [0], [0], [1], [0, 0, 1, 1], [], []>} : vector<8x32xbf16>, vector<32x32xbf16>, vector<8x32xf32> -> vector<8x32xf32>
    %18 = vector.broadcast %2 : vector<1x32xf32> to vector<8x32xf32>
    %19 = arith.addf %17, %18 : vector<8x32xf32>
    %c0_7 = arith.constant 0 : index
    %c0_8 = arith.constant 0 : index
    %20 = vector.load %arg7[%c0_7, %c0_8] : memref<32x32xbf16, #tpu.memory_space<vmem>>, vector<32x32xbf16>
    %cst_9 = arith.constant dense<0.000000e+00> : vector<8x32xf32>
    %21 = tpu.matmul %15, %20, %cst_9 {dimension_numbers = #tpu.dot_dimension_numbers<[1], [0], [0], [1], [0, 0, 1, 1], [], []>} : vector<8x32xbf16>, vector<32x32xbf16>, vector<8x32xf32> -> vector<8x32xf32>
    %22 = vector.broadcast %3 : vector<1x32xf32> to vector<8x32xf32>
    %23 = arith.addf %21, %22 : vector<8x32xf32>
    %24 = vector.shape_cast %19 : vector<8x32xf32> to vector<8x4x8xf32>
    %25 = arith.truncf %24 : vector<8x4x8xf32> to vector<8x4x8xbf16>
    %26 = vector.shape_cast %23 : vector<8x32xf32> to vector<8x4x8xf32>
    %27 = arith.truncf %26 : vector<8x4x8xf32> to vector<8x4x8xbf16>
    %c0_10 = arith.constant 0 : index
    %c0_11 = arith.constant 0 : index
    %c0_12 = arith.constant 0 : index
    %28 = vector.load %arg14[%c0_10, %c0_11, %c0_12] : memref<8x4x8xbf16, #tpu.memory_space<vmem>>, vector<8x4x8xbf16>
    "tpu.trace_start"() <{level = 10 : i32, message = "qhd,khd->hqk"}> : () -> ()
    %cst_13 = arith.constant dense<0.000000e+00> : vector<4x8x8xf32>
    %29 = tpu.matmul %28, %25, %cst_13 {dimension_numbers = #tpu.dot_dimension_numbers<[2], [2], [0], [0], [0, 1, 0, 0, 1, 0], [1], [1]>} : vector<8x4x8xbf16>, vector<8x4x8xbf16>, vector<4x8x8xf32> -> vector<4x8x8xf32>
    "tpu.trace_stop"() : () -> ()
    %c0_14 = arith.constant 0 : index
    %c0_15 = arith.constant 0 : index
    %c0_16 = arith.constant 0 : index
    %30 = vector.load %arg4[%c0_14, %c0_15, %c0_16] : memref<1x8x8xi8, #tpu.memory_space<vmem>>, vector<1x8x8xi8>
    %31 = vector.shape_cast %30 : vector<1x8x8xi8> to vector<8x8xi8>
    %32 = arith.extsi %31 : vector<8x8xi8> to vector<8x8xi32>
    %c0_i32_17 = arith.constant 0 : i32
    %33 = vector.broadcast %c0_i32_17 : i32 to vector<8x8xi32>
    %34 = arith.cmpi ne, %32, %33 : vector<8x8xi32>
    %35 = arith.extui %34 : vector<8x8xi1> to vector<8x8xi32>
    %36 = arith.sitofp %35 : vector<8x8xi32> to vector<8x8xf32>
    %37 = vector.shape_cast %36 : vector<8x8xf32> to vector<1x8x8xf32>
    %38 = vector.broadcast %37 : vector<1x8x8xf32> to vector<4x8x8xf32>
    %39 = arith.mulf %29, %38 : vector<4x8x8xf32>
    %40 = vector.shape_cast %36 : vector<8x8xf32> to vector<1x8x8xf32>
    %cst_18 = arith.constant 1.000000e+00 : f32
    %41 = vector.broadcast %cst_18 : f32 to vector<1x8x8xf32>
    %42 = arith.subf %40, %41 : vector<1x8x8xf32>
    %cst_19 = arith.constant 1.000000e+09 : f32
    %43 = vector.broadcast %cst_19 : f32 to vector<1x8x8xf32>
    %44 = arith.mulf %42, %43 : vector<1x8x8xf32>
    %45 = vector.broadcast %44 : vector<1x8x8xf32> to vector<4x8x8xf32>
    %46 = arith.addf %39, %45 : vector<4x8x8xf32>
    %c0_20 = arith.constant 0 : index
    %c0_21 = arith.constant 0 : index
    %c0_22 = arith.constant 0 : index
    %47 = vector.load %arg15[%c0_20, %c0_21, %c0_22] : memref<4x8x1xf32, #tpu.memory_space<vmem>>, vector<4x8x1xf32>
    %cst_23 = arith.constant dense<0xFF800000> : vector<4x8xf32>
    %48 = vector.multi_reduction <maximumf>, %46, %cst_23 [2] : vector<4x8x8xf32> to vector<4x8xf32>
    %49 = vector.shape_cast %48 : vector<4x8xf32> to vector<4x8x1xf32>
    %50 = arith.maximumf %47, %49 : vector<4x8x1xf32>
    %51 = arith.subf %47, %50 : vector<4x8x1xf32>
    %52 = math.exp %51 : vector<4x8x1xf32>
    %53 = vector.broadcast %50 : vector<4x8x1xf32> to vector<4x8x8xf32>
    %54 = arith.subf %46, %53 : vector<4x8x8xf32>
    %55 = math.exp %54 : vector<4x8x8xf32>
    %c0_24 = arith.constant 0 : index
    %c0_25 = arith.constant 0 : index
    %c0_26 = arith.constant 0 : index
    %56 = vector.load %arg16[%c0_24, %c0_25, %c0_26] : memref<4x8x1xf32, #tpu.memory_space<vmem>>, vector<4x8x1xf32>
    %57 = arith.mulf %52, %56 : vector<4x8x1xf32>
    %cst_27 = arith.constant dense<0.000000e+00> : vector<4x8xf32>
    %58 = vector.multi_reduction <add>, %55, %cst_27 [2] : vector<4x8x8xf32> to vector<4x8xf32>
    %59 = vector.shape_cast %58 : vector<4x8xf32> to vector<4x8x1xf32>
    %60 = arith.addf %57, %59 : vector<4x8x1xf32>
    %c0_28 = arith.constant 0 : index
    %c0_29 = arith.constant 0 : index
    %c0_30 = arith.constant 0 : index
    %61 = vector.load %arg16[%c0_28, %c0_29, %c0_30] : memref<4x8x1xf32, #tpu.memory_space<vmem>>, vector<4x8x1xf32>
    tpu.vector_store %arg16[%c0_28, %c0_29, %c0_30], %60 {strides = array<i32>} : memref<4x8x1xf32, #tpu.memory_space<vmem>>, vector<4x8x1xf32>,
    %62 = arith.truncf %55 : vector<4x8x8xf32> to vector<4x8x8xbf16>
    "tpu.trace_start"() <{level = 10 : i32, message = "hqk,khd->hqd"}> : () -> ()
    %cst_31 = arith.constant dense<0.000000e+00> : vector<4x8x8xf32>
    %63 = tpu.matmul %62, %27, %cst_31 {dimension_numbers = #tpu.dot_dimension_numbers<[2], [0], [1], [2], [0, 0, 0, 1, 1, 2], [0], [1]>} : vector<4x8x8xbf16>, vector<8x4x8xbf16>, vector<4x8x8xf32> -> vector<4x8x8xf32>
    "tpu.trace_stop"() : () -> ()
    %c0_32 = arith.constant 0 : index
    %c0_33 = arith.constant 0 : index
    %c0_34 = arith.constant 0 : index
    %64 = vector.load %arg17[%c0_32, %c0_33, %c0_34] : memref<4x8x8xf32, #tpu.memory_space<vmem>>, vector<4x8x8xf32>
    %65 = vector.broadcast %52 : vector<4x8x1xf32> to vector<4x8x8xf32>
    %66 = arith.mulf %65, %64 : vector<4x8x8xf32>
    %67 = arith.addf %66, %63 : vector<4x8x8xf32>
    %c0_35 = arith.constant 0 : index
    %c0_36 = arith.constant 0 : index
    %c0_37 = arith.constant 0 : index
    %68 = vector.load %arg17[%c0_35, %c0_36, %c0_37] : memref<4x8x8xf32, #tpu.memory_space<vmem>>, vector<4x8x8xf32>
    tpu.vector_store %arg17[%c0_35, %c0_36, %c0_37], %67 {strides = array<i32>} : memref<4x8x8xf32, #tpu.memory_space<vmem>>, vector<4x8x8xf32>,
    %c0_38 = arith.constant 0 : index
    %c0_39 = arith.constant 0 : index
    %c0_40 = arith.constant 0 : index
    %69 = vector.load %arg15[%c0_38, %c0_39, %c0_40] : memref<4x8x1xf32, #tpu.memory_space<vmem>>, vector<4x8x1xf32>
    tpu.vector_store %arg15[%c0_38, %c0_39, %c0_40], %50 {strides = array<i32>} : memref<4x8x1xf32, #tpu.memory_space<vmem>>, vector<4x8x1xf32>,
    %c0_i32_41 = arith.constant 0 : i32
    %70 = arith.cmpi eq, %arg2, %c0_i32_41 : i32
    %71 = arith.extui %70 : i1 to i32
    %c0_i32_42 = arith.constant 0 : i32
    %72 = arith.cmpi ne, %71, %c0_i32_42 : i32
    scf.if %72 {
      %c0_43 = arith.constant 0 : index
      %c0_44 = arith.constant 0 : index
      %c0_45 = arith.constant 0 : index
      %73 = vector.load %arg16[%c0_43, %c0_44, %c0_45] : memref<4x8x1xf32, #tpu.memory_space<vmem>>, vector<4x8x1xf32>
      %cst_46 = arith.constant 1.000000e+00 : f32
      %74 = vector.broadcast %cst_46 : f32 to vector<4x8x1xf32>
      %75 = arith.divf %74, %73 : vector<4x8x1xf32>
      %c0_47 = arith.constant 0 : index
      %c0_48 = arith.constant 0 : index
      %c0_49 = arith.constant 0 : index
      %76 = vector.load %arg17[%c0_47, %c0_48, %c0_49] : memref<4x8x8xf32, #tpu.memory_space<vmem>>, vector<4x8x8xf32>
      %77 = vector.broadcast %75 : vector<4x8x1xf32> to vector<4x8x8xf32>
      %78 = arith.mulf %76, %77 : vector<4x8x8xf32>
      %79 = tpu.transpose %78, [1, 0, 2] : vector<4x8x8xf32> -> vector<8x4x8xf32>
      %80 = vector.shape_cast %79 : vector<8x4x8xf32> to vector<8x32xf32>
      %81 = arith.truncf %80 : vector<8x32xf32> to vector<8x32xbf16>
      %c0_50 = arith.constant 0 : index
      %c0_51 = arith.constant 0 : index
      %82 = vector.load %arg8[%c0_50, %c0_51] : memref<32x32xbf16, #tpu.memory_space<vmem>>, vector<32x32xbf16>
      %cst_52 = arith.constant dense<0.000000e+00> : vector<8x32xf32>
      %83 = tpu.matmul %81, %82, %cst_52 {dimension_numbers = #tpu.dot_dimension_numbers<[1], [0], [0], [1], [0, 0, 1, 1], [], []>} : vector<8x32xbf16>, vector<32x32xbf16>, vector<8x32xf32> -> vector<8x32xf32>
      %84 = vector.broadcast %4 : vector<1x32xf32> to vector<8x32xf32>
      %85 = arith.addf %83, %84 : vector<8x32xf32>
      %c0_53 = arith.constant 0 : index
      %c0_54 = arith.constant 0 : index
      %c0_55 = arith.constant 0 : index
      %86 = vector.load %arg3[%c0_53, %c0_54, %c0_55] : memref<1x8x32xf32, #tpu.memory_space<vmem>>, vector<1x8x32xf32>
      %87 = vector.shape_cast %86 : vector<1x8x32xf32> to vector<8x32xf32>
      %88 = arith.addf %85, %87 : vector<8x32xf32>
      %cst_56 = arith.constant dense<0.000000e+00> : vector<8xf32>
      %89 = vector.multi_reduction <add>, %88, %cst_56 [1] : vector<8x32xf32> to vector<8xf32>
      %90 = vector.shape_cast %89 : vector<8xf32> to vector<8x1xf32>
      %cst_57 = arith.constant 3.200000e+01 : f32
      %91 = vector.broadcast %cst_57 : f32 to vector<8x1xf32>
      %92 = arith.divf %90, %91 : vector<8x1xf32>
      %93 = vector.broadcast %92 : vector<8x1xf32> to vector<8x32xf32>
      %94 = arith.subf %88, %93 : vector<8x32xf32>
      %95 = arith.mulf %94, %94 : vector<8x32xf32>
      %cst_58 = arith.constant dense<0.000000e+00> : vector<8xf32>
      %96 = vector.multi_reduction <add>, %95, %cst_58 [1] : vector<8x32xf32> to vector<8xf32>
      %97 = vector.shape_cast %96 : vector<8xf32> to vector<8x1xf32>
      %cst_59 = arith.constant 3.200000e+01 : f32
      %98 = vector.broadcast %cst_59 : f32 to vector<8x1xf32>
      %99 = arith.divf %97, %98 : vector<8x1xf32>
      %100 = vector.broadcast %92 : vector<8x1xf32> to vector<8x32xf32>
      %101 = arith.subf %88, %100 : vector<8x32xf32>
      %cst_60 = arith.constant 9.99999974E-6 : f32
      %102 = vector.broadcast %cst_60 : f32 to vector<8x1xf32>
      %103 = arith.addf %99, %102 : vector<8x1xf32>
      %104 = math.rsqrt %103 : vector<8x1xf32>
      %105 = vector.broadcast %104 : vector<8x1xf32> to vector<8x32xf32>
      %106 = arith.mulf %101, %105 : vector<8x32xf32>
      %107 = vector.broadcast %6 : vector<1x32xf32> to vector<8x32xf32>
      %108 = arith.mulf %106, %107 : vector<8x32xf32>
      %109 = vector.broadcast %7 : vector<1x32xf32> to vector<8x32xf32>
      %110 = arith.addf %108, %109 : vector<8x32xf32>
      %111 = arith.truncf %110 : vector<8x32xf32> to vector<8x32xbf16>
      %c0_61 = arith.constant 0 : index
      %c0_62 = arith.constant 0 : index
      %112 = vector.load %arg9[%c0_61, %c0_62] : memref<32x64xbf16, #tpu.memory_space<vmem>>, vector<32x64xbf16>
      %cst_63 = arith.constant dense<0.000000e+00> : vector<8x64xf32>
      %113 = tpu.matmul %111, %112, %cst_63 {dimension_numbers = #tpu.dot_dimension_numbers<[1], [0], [0], [1], [0, 0, 1, 1], [], []>} : vector<8x32xbf16>, vector<32x64xbf16>, vector<8x64xf32> -> vector<8x64xf32>
      %c0_64 = arith.constant 0 : index
      %c0_65 = arith.constant 0 : index
      %114 = vector.load %arg12[%c0_64, %c0_65] : memref<1x64xf32, #tpu.memory_space<vmem>>, vector<1x64xf32>
      %115 = vector.broadcast %114 : vector<1x64xf32> to vector<8x64xf32>
      %116 = arith.addf %113, %115 : vector<8x64xf32>
      %cst_66 = arith.constant 5.000000e-01 : f32
      %117 = vector.broadcast %cst_66 : f32 to vector<8x64xf32>
      %118 = arith.mulf %117, %116 : vector<8x64xf32>
      %cst_67 = arith.constant 0.707106769 : f32
      %119 = vector.broadcast %cst_67 : f32 to vector<8x64xf32>
      %120 = arith.mulf %116, %119 : vector<8x64xf32>
      %121 = math.erf %120 : vector<8x64xf32>
      %cst_68 = arith.constant 1.000000e+00 : f32
      %122 = vector.broadcast %cst_68 : f32 to vector<8x64xf32>
      %123 = arith.addf %122, %121 : vector<8x64xf32>
      %124 = arith.mulf %118, %123 : vector<8x64xf32>
      %125 = arith.truncf %124 : vector<8x64xf32> to vector<8x64xbf16>
      %c0_69 = arith.constant 0 : index
      %c0_70 = arith.constant 0 : index
      %126 = vector.load %arg10[%c0_69, %c0_70] : memref<64x32xbf16, #tpu.memory_space<vmem>>, vector<64x32xbf16>
      %cst_71 = arith.constant dense<0.000000e+00> : vector<8x32xf32>
      %127 = tpu.matmul %125, %126, %cst_71 {dimension_numbers = #tpu.dot_dimension_numbers<[1], [0], [0], [1], [0, 0, 1, 1], [], []>} : vector<8x64xbf16>, vector<64x32xbf16>, vector<8x32xf32> -> vector<8x32xf32>
      %128 = vector.broadcast %5 : vector<1x32xf32> to vector<8x32xf32>
      %129 = arith.addf %127, %128 : vector<8x32xf32>
      %130 = arith.addf %129, %110 : vector<8x32xf32>
      %cst_72 = arith.constant dense<0.000000e+00> : vector<8xf32>
      %131 = vector.multi_reduction <add>, %130, %cst_72 [1] : vector<8x32xf32> to vector<8xf32>
      %132 = vector.shape_cast %131 : vector<8xf32> to vector<8x1xf32>
      %cst_73 = arith.constant 3.200000e+01 : f32
      %133 = vector.broadcast %cst_73 : f32 to vector<8x1xf32>
      %134 = arith.divf %132, %133 : vector<8x1xf32>
      %135 = vector.broadcast %134 : vector<8x1xf32> to vector<8x32xf32>
      %136 = arith.subf %130, %135 : vector<8x32xf32>
      %137 = arith.mulf %136, %136 : vector<8x32xf32>
      %cst_74 = arith.constant dense<0.000000e+00> : vector<8xf32>
      %138 = vector.multi_reduction <add>, %137, %cst_74 [1] : vector<8x32xf32> to vector<8xf32>
      %139 = vector.shape_cast %138 : vector<8xf32> to vector<8x1xf32>
      %cst_75 = arith.constant 3.200000e+01 : f32
      %140 = vector.broadcast %cst_75 : f32 to vector<8x1xf32>
      %141 = arith.divf %139, %140 : vector<8x1xf32>
      %142 = vector.broadcast %134 : vector<8x1xf32> to vector<8x32xf32>
      %143 = arith.subf %130, %142 : vector<8x32xf32>
      %cst_76 = arith.constant 9.99999974E-6 : f32
      %144 = vector.broadcast %cst_76 : f32 to vector<8x1xf32>
      %145 = arith.addf %141, %144 : vector<8x1xf32>
      %146 = math.rsqrt %145 : vector<8x1xf32>
      %147 = vector.broadcast %146 : vector<8x1xf32> to vector<8x32xf32>
      %148 = arith.mulf %143, %147 : vector<8x32xf32>
      %149 = vector.broadcast %8 : vector<1x32xf32> to vector<8x32xf32>
      %150 = arith.mulf %148, %149 : vector<8x32xf32>
      %151 = vector.broadcast %9 : vector<1x32xf32> to vector<8x32xf32>
      %152 = arith.addf %150, %151 : vector<8x32xf32>
      %c0_77 = arith.constant 0 : index
      %c0_78 = arith.constant 0 : index
      %c0_79 = arith.constant 0 : index
      %153 = vector.load %arg13[%c0_77, %c0_78, %c0_79] : memref<1x8x32xf32, #tpu.memory_space<vmem>>, vector<1x8x32xf32>
      %154 = vector.shape_cast %153 : vector<1x8x32xf32> to vector<8x32xf32>
      %155 = vector.shape_cast %152 : vector<8x32xf32> to vector<1x8x32xf32>
      tpu.vector_store %arg13[%c0_77, %c0_78, %c0_79], %155 {strides = array<i32>} : memref<1x8x32xf32, #tpu.memory_space<vmem>>, vector<1x8x32xf32>,
    } else {
    }
    return
  }
  func.func @transform_0(%arg0: i32, %arg1: i32, %arg2: i32) -> (i32, i32, i32) {
    %c0_i32 = arith.constant 0 : i32
    %c0_i32_0 = arith.constant 0 : i32
    return %arg0, %arg1, %c0_i32 : i32, i32, i32
  }
  func.func @transform_1(%arg0: i32, %arg1: i32, %arg2: i32) -> (i32, i32, i32) {
    %c0_i32 = arith.constant 0 : i32
    return %arg0, %arg1, %arg2 : i32, i32, i32
  }
  func.func @transform_2(%arg0: i32, %arg1: i32, %arg2: i32) -> (i32, i32) {
    %c0_i32 = arith.constant 0 : i32
    %c0_i32_0 = arith.constant 0 : i32
    %c0_i32_1 = arith.constant 0 : i32
    return %c0_i32, %c0_i32_0 : i32, i32
  }
  func.func @transform_3(%arg0: i32, %arg1: i32, %arg2: i32) -> (i32, i32) {
    %c0_i32 = arith.constant 0 : i32
    %c0_i32_0 = arith.constant 0 : i32
    %c0_i32_1 = arith.constant 0 : i32
    return %c0_i32, %c0_i32_0 : i32, i32
  }
  func.func @transform_4(%arg0: i32, %arg1: i32, %arg2: i32) -> (i32, i32) {
    %c0_i32 = arith.constant 0 : i32
    %c0_i32_0 = arith.constant 0 : i32
    %c0_i32_1 = arith.constant 0 : i32
    return %c0_i32, %c0_i32_0 : i32, i32
  }
  func.func @transform_5(%arg0: i32, %arg1: i32, %arg2: i32) -> (i32, i32) {
    %c0_i32 = arith.constant 0 : i32
    %c0_i32_0 = arith.constant 0 : i32
    %c0_i32_1 = arith.constant 0 : i32
    return %c0_i32, %c0_i32_0 : i32, i32
  }
  func.func @transform_6(%arg0: i32, %arg1: i32, %arg2: i32) -> (i32, i32) {
    %c0_i32 = arith.constant 0 : i32
    %c0_i32_0 = arith.constant 0 : i32
    %c0_i32_1 = arith.constant 0 : i32
    return %c0_i32, %c0_i32_0 : i32, i32
  }
  func.func @transform_7(%arg0: i32, %arg1: i32, %arg2: i32) -> (i32, i32) {
    %c0_i32 = arith.constant 0 : i32
    %c0_i32_0 = arith.constant 0 : i32
    %c0_i32_1 = arith.constant 0 : i32
    return %c0_i32, %c0_i32_0 : i32, i32
  }
  func.func @transform_8(%arg0: i32, %arg1: i32, %arg2: i32) -> (i32, i32) {
    %c0_i32 = arith.constant 0 : i32
    %c0_i32_0 = arith.constant 0 : i32
    %c0_i32_1 = arith.constant 0 : i32
    return %c0_i32, %c0_i32_0 : i32, i32
  }
  func.func @transform_9(%arg0: i32, %arg1: i32, %arg2: i32) -> (i32, i32) {
    %c0_i32 = arith.constant 0 : i32
    %c0_i32_0 = arith.constant 0 : i32
    %c0_i32_1 = arith.constant 0 : i32
    return %c0_i32, %c0_i32_0 : i32, i32
  }
  func.func @transform_10(%arg0: i32, %arg1: i32, %arg2: i32) -> (i32, i32, i32) {
    %c0_i32 = arith.constant 0 : i32
    %c0_i32_0 = arith.constant 0 : i32
    return %arg0, %arg1, %c0_i32 : i32, i32, i32
  }
}

module attributes {stable_mosaic.version = 11 : i64} {
  func.func @transformer_block_kernel(%arg0: i32, %arg1: i32, %arg2: i32, %arg3: memref<1x8x32xf32, #tpu.memory_space<vmem>>, %arg4: memref<1x8x8xi8, #tpu.memory_space<vmem>>, %arg5: memref<32x32xbf16, #tpu.memory_space<vmem>>, %arg6: memref<32x32xbf16, #tpu.memory_space<vmem>>, %arg7: memref<32x32xbf16, #tpu.memory_space<vmem>>, %arg8: memref<32x32xbf16, #tpu.memory_space<vmem>>, %arg9: memref<32x64xbf16, #tpu.memory_space<vmem>>, %arg10: memref<64x32xbf16, #tpu.memory_space<vmem>>, %arg11: memref<9x32xf32, #tpu.memory_space<vmem>>, %arg12: memref<1x64xf32, #tpu.memory_space<vmem>>, %arg13: memref<1x8x32xf32, #tpu.memory_space<vmem>>, %arg14: memref<8x4x8xbf16, #tpu.memory_space<vmem>>, %arg15: memref<4x8x1xf32, #tpu.memory_space<vmem>>, %arg16: memref<4x8x1xf32, #tpu.memory_space<vmem>>, %arg17: memref<4x8x8xf32, #tpu.memory_space<vmem>>) attributes {dimension_semantics = [#tpu.dimension_semantics<parallel>, #tpu.dimension_semantics<parallel>, #tpu.dimension_semantics<arbitrary>], iteration_bounds = array<i64: 2, 1, 1>, scalar_prefetch = 0 : i64, scratch_operands = 4 : i64, tpu.core_type = #tpu.core_type<tc>, window_params = [{transform_indices = @transform_0, window_bounds = array<i64: 1, 8, 32>}, {transform_indices = @transform_1, window_bounds = array<i64: 1, 8, 8>}, {pipeline_mode = #tpu.pipeline_mode<synchronous>, transform_indices = @transform_2, window_bounds = array<i64: 32, 32>}, {pipeline_mode = #tpu.pipeline_mode<synchronous>, transform_indices = @transform_3, window_bounds = array<i64: 32, 32>}, {pipeline_mode = #tpu.pipeline_mode<synchronous>, transform_indices = @transform_4, window_bounds = array<i64: 32, 32>}, {pipeline_mode = #tpu.pipeline_mode<synchronous>, transform_indices = @transform_5, window_bounds = array<i64: 32, 32>}, {pipeline_mode = #tpu.pipeline_mode<synchronous>, transform_indices = @transform_6, window_bounds = array<i64: 32, 64>}, {pipeline_mode = #tpu.pipeline_mode<synchronous>, transform_indices = @transform_7, window_bounds = array<i64: 64, 32>}, {pipeline_mode = #tpu.pipeline_mode<synchronous>, transform_indices = @transform_8, window_bounds = array<i64: 9, 32>}, {pipeline_mode = #tpu.pipeline_mode<synchronous>, transform_indices = @transform_9, window_bounds = array<i64: 1, 64>}, {transform_indices = @transform_10, window_bounds = array<i64: 1, 8, 32>}]} {
    %c0 = arith.constant 0 : index
    %c0_0 = arith.constant 0 : index
    %0 = vector.load %arg11[%c0, %c0_0] : memref<9x32xf32, #tpu.memory_space<vmem>>, vector<9x32xf32>
    %1 = vector.extract_strided_slice %0 {offsets = [0, 0], sizes = [1, 32], strides = [1, 1]} : vector<9x32xf32> to vector<1x32xf32>
    %2 = vector.extract_strided_slice %0 {offsets = [1, 0], sizes = [1, 32], strides = [1, 1]} : vector<9x32xf32> to vector<1x32xf32>
    %3 = vector.extract_strided_slice %0 {offsets = [2, 0], sizes = [1, 32], strides = [1, 1]} : vector<9x32xf32> to vector<1x32xf32>
    %4 = vector.extract_strided_slice %0 {offsets = [3, 0], sizes = [1, 32], strides = [1, 1]} : vector<9x32xf32> to vector<1x32xf32>
    %5 = vector.extract_strided_slice %0 {offsets = [4, 0], sizes = [1, 32], strides = [1, 1]} : vector<9x32xf32> to vector<1x32xf32>
    %6 = vector.extract_strided_slice %0 {offsets = [5, 0], sizes = [1, 32], strides = [1, 1]} : vector<9x32xf32> to vector<1x32xf32>
    %7 = vector.extract_strided_slice %0 {offsets = [6, 0], sizes = [1, 32], strides = [1, 1]} : vector<9x32xf32> to vector<1x32xf32>
    %8 = vector.extract_strided_slice %0 {offsets = [7, 0], sizes = [1, 32], strides = [1, 1]} : vector<9x32xf32> to vector<1x32xf32>
    %9 = vector.extract_strided_slice %0 {offsets = [8, 0], sizes = [1, 32], strides = [1, 1]} : vector<9x32xf32> to vector<1x32xf32>
    %c0_i32 = arith.constant 0 : i32
    %10 = arith.cmpi eq, %arg2, %c0_i32 : i32
    %11 = arith.extui %10 : i1 to i32
    %c0_i32_1 = arith.constant 0 : i32
    %12 = arith.cmpi ne, %11, %c0_i32_1 : i32
    scf.if %12 {
      %cst_43 = arith.constant -1.000000e+30 : f32
      %73 = vector.broadcast %cst_43 : f32 to vector<4x8x1xf32>
      %c0_44 = arith.constant 0 : index
      %c0_45 = arith.constant 0 : index
      %c0_46 = arith.constant 0 : index
      %74 = vector.load %arg15[%c0_44, %c0_45, %c0_46] : memref<4x8x1xf32, #tpu.memory_space<vmem>>, vector<4x8x1xf32>
      tpu.vector_store %arg15[%c0_44, %c0_45, %c0_46], %73 {strides = array<i32>} : memref<4x8x1xf32, #tpu.memory_space<vmem>>, vector<4x8x1xf32>,
      %cst_47 = arith.constant 0.000000e+00 : f32
      %75 = vector.broadcast %cst_47 : f32 to vector<4x8x1xf32>
      %c0_48 = arith.constant 0 : index
      %c0_49 = arith.constant 0 : index
      %c0_50 = arith.constant 0 : index
      %76 = vector.load %arg16[%c0_48, %c0_49, %c0_50] : memref<4x8x1xf32, #tpu.memory_space<vmem>>, vector<4x8x1xf32>
      tpu.vector_store %arg16[%c0_48, %c0_49, %c0_50], %75 {strides = array<i32>} : memref<4x8x1xf32, #tpu.memory_space<vmem>>, vector<4x8x1xf32>,
      %cst_51 = arith.constant 0.000000e+00 : f32
      %77 = vector.broadcast %cst_51 : f32 to vector<4x8x8xf32>
      %c0_52 = arith.constant 0 : index
      %c0_53 = arith.constant 0 : index
      %c0_54 = arith.constant 0 : index
      %78 = vector.load %arg17[%c0_52, %c0_53, %c0_54] : memref<4x8x8xf32, #tpu.memory_space<vmem>>, vector<4x8x8xf32>
      tpu.vector_store %arg17[%c0_52, %c0_53, %c0_54], %77 {strides = array<i32>} : memref<4x8x8xf32, #tpu.memory_space<vmem>>, vector<4x8x8xf32>,
      %c0_55 = arith.constant 0 : index
      %c0_56 = arith.constant 0 : index
      %c0_57 = arith.constant 0 : index
      %79 = vector.load %arg3[%c0_55, %c0_56, %c0_57] : memref<1x8x32xf32, #tpu.memory_space<vmem>>, vector<1x8x32xf32>
      %80 = vector.shape_cast %79 : vector<1x8x32xf32> to vector<8x32xf32>
      %81 = arith.truncf %80 : vector<8x32xf32> to vector<8x32xbf16>
      %c0_58 = arith.constant 0 : index
      %c0_59 = arith.constant 0 : index
      %82 = vector.load %arg5[%c0_58, %c0_59] : memref<32x32xbf16, #tpu.memory_space<vmem>>, vector<32x32xbf16>
      %cst_60 = arith.constant dense<0.000000e+00> : vector<8x32xf32>
      %83 = tpu.matmul %81, %82, %cst_60 {dimension_numbers = #tpu.dot_dimension_numbers<[1], [0], [0], [1], [0, 0, 1, 1], [], []>} : vector<8x32xbf16>, vector<32x32xbf16>, vector<8x32xf32> -> vector<8x32xf32>
      %84 = vector.broadcast %1 : vector<1x32xf32> to vector<8x32xf32>
      %85 = arith.addf %83, %84 : vector<8x32xf32>
      %86 = vector.shape_cast %85 : vector<8x32xf32> to vector<8x4x8xf32>
      %87 = arith.truncf %86 : vector<8x4x8xf32> to vector<8x4x8xbf16>
      %c0_61 = arith.constant 0 : index
      %c0_62 = arith.constant 0 : index
      %c0_63 = arith.constant 0 : index
      %88 = vector.load %arg14[%c0_61, %c0_62, %c0_63] : memref<8x4x8xbf16, #tpu.memory_space<vmem>>, vector<8x4x8xbf16>
      tpu.vector_store %arg14[%c0_61, %c0_62, %c0_63], %87 {strides = array<i32>} : memref<8x4x8xbf16, #tpu.memory_space<vmem>>, vector<8x4x8xbf16>,
    } else {
    }
    %c0_2 = arith.constant 0 : index
    %c0_3 = arith.constant 0 : index
    %c0_4 = arith.constant 0 : index
    %13 = vector.load %arg3[%c0_2, %c0_3, %c0_4] : memref<1x8x32xf32, #tpu.memory_space<vmem>>, vector<1x8x32xf32>
    %14 = vector.shape_cast %13 : vector<1x8x32xf32> to vector<8x32xf32>
    %15 = arith.truncf %14 : vector<8x32xf32> to vector<8x32xbf16>
    %c0_5 = arith.constant 0 : index
    %c0_6 = arith.constant 0 : index
    %16 = vector.load %arg6[%c0_5, %c0_6] : memref<32x32xbf16, #tpu.memory_space<vmem>>, vector<32x32xbf16>
    %cst = arith.constant dense<0.000000e+00> : vector<8x32xf32>
    %17 = tpu.matmul %15, %16, %cst {dimension_numbers = #tpu.dot_dimension_numbers<[1], [0], [0], [1], [0, 0, 1, 1], [], []>} : vector<8x32xbf16>, vector<32x32xbf16>, vector<8x32xf32> -> vector<8x32xf32>
    %18 = vector.broadcast %2 : vector<1x32xf32> to vector<8x32xf32>
    %19 = arith.addf %17, %18 : vector<8x32xf32>
    %c0_7 = arith.constant 0 : index
    %c0_8 = arith.constant 0 : index
    %20 = vector.load %arg7[%c0_7, %c0_8] : memref<32x32xbf16, #tpu.memory_space<vmem>>, vector<32x32xbf16>
    %cst_9 = arith.constant dense<0.000000e+00> : vector<8x32xf32>
    %21 = tpu.matmul %15, %20, %cst_9 {dimension_numbers = #tpu.dot_dimension_numbers<[1], [0], [0], [1], [0, 0, 1, 1], [], []>} : vector<8x32xbf16>, vector<32x32xbf16>, vector<8x32xf32> -> vector<8x32xf32>
    %22 = vector.broadcast %3 : vector<1x32xf32> to vector<8x32xf32>
    %23 = arith.addf %21, %22 : vector<8x32xf32>
    %24 = vector.shape_cast %19 : vector<8x32xf32> to vector<8x4x8xf32>
    %25 = arith.truncf %24 : vector<8x4x8xf32> to vector<8x4x8xbf16>
    %26 = vector.shape_cast %23 : vector<8x32xf32> to vector<8x4x8xf32>
    %27 = arith.truncf %26 : vector<8x4x8xf32> to vector<8x4x8xbf16>
    %c0_10 = arith.constant 0 : index
    %c0_11 = arith.constant 0 : index
    %c0_12 = arith.constant 0 : index
    %28 = vector.load %arg14[%c0_10, %c0_11, %c0_12] : memref<8x4x8xbf16, #tpu.memory_space<vmem>>, vector<8x4x8xbf16>
    "tpu.trace_start"() <{level = 10 : i32, message = "qhd,khd->hqk"}> : () -> ()
    %cst_13 = arith.constant dense<0.000000e+00> : vector<4x8x8xf32>
    %29 = tpu.matmul %28, %25, %cst_13 {dimension_numbers = #tpu.dot_dimension_numbers<[2], [2], [0], [0], [0, 1, 0, 0, 1, 0], [1], [1]>} : vector<8x4x8xbf16>, vector<8x4x8xbf16>, vector<4x8x8xf32> -> vector<4x8x8xf32>
    "tpu.trace_stop"() : () -> ()
    %c0_14 = arith.constant 0 : index
    %c0_15 = arith.constant 0 : index
    %c0_16 = arith.constant 0 : index
    %30 = vector.load %arg4[%c0_14, %c0_15, %c0_16] : memref<1x8x8xi8, #tpu.memory_space<vmem>>, vector<1x8x8xi8>
    %31 = vector.shape_cast %30 : vector<1x8x8xi8> to vector<8x8xi8>
    %32 = arith.extsi %31 : vector<8x8xi8> to vector<8x8xi32>
    %c0_i32_17 = arith.constant 0 : i32
    %33 = vector.broadcast %c0_i32_17 : i32 to vector<8x8xi32>
    %34 = arith.cmpi ne, %32, %33 : vector<8x8xi32>
    %35 = arith.extui %34 : vector<8x8xi1> to vector<8x8xi32>
    %36 = arith.sitofp %35 : vector<8x8xi32> to vector<8x8xf32>
    %37 = vector.shape_cast %36 : vector<8x8xf32> to vector<1x8x8xf32>
    %38 = vector.broadcast %37 : vector<1x8x8xf32> to vector<4x8x8xf32>
    %39 = arith.mulf %29, %38 : vector<4x8x8xf32>
    %40 = vector.shape_cast %36 : vector<8x8xf32> to vector<1x8x8xf32>
    %cst_18 = arith.constant 1.000000e+00 : f32
    %41 = vector.broadcast %cst_18 : f32 to vector<1x8x8xf32>
    %42 = arith.subf %40, %41 : vector<1x8x8xf32>
    %cst_19 = arith.constant 1.000000e+09 : f32
    %43 = vector.broadcast %cst_19 : f32 to vector<1x8x8xf32>
    %44 = arith.mulf %42, %43 : vector<1x8x8xf32>
    %45 = vector.broadcast %44 : vector<1x8x8xf32> to vector<4x8x8xf32>
    %46 = arith.addf %39, %45 : vector<4x8x8xf32>
    %c0_20 = arith.constant 0 : index
    %c0_21 = arith.constant 0 : index
    %c0_22 = arith.constant 0 : index
    %47 = vector.load %arg15[%c0_20, %c0_21, %c0_22] : memref<4x8x1xf32, #tpu.memory_space<vmem>>, vector<4x8x1xf32>
    %cst_23 = arith.constant dense<0xFF800000> : vector<4x8xf32>
    %48 = vector.multi_reduction <maximumf>, %46, %cst_23 [2] : vector<4x8x8xf32> to vector<4x8xf32>
    %49 = vector.shape_cast %48 : vector<4x8xf32> to vector<4x8x1xf32>
    %50 = arith.maximumf %47, %49 : vector<4x8x1xf32>
    %51 = arith.subf %47, %50 : vector<4x8x1xf32>
    %52 = math.exp %51 : vector<4x8x1xf32>
    %53 = vector.broadcast %50 : vector<4x8x1xf32> to vector<4x8x8xf32>
    %54 = arith.subf %46, %53 : vector<4x8x8xf32>
    %55 = math.exp %54 : vector<4x8x8xf32>
    %c0_24 = arith.constant 0 : index
    %c0_25 = arith.constant 0 : index
    %c0_26 = arith.constant 0 : index
    %56 = vector.load %arg16[%c0_24, %c0_25, %c0_26] : memref<4x8x1xf32, #tpu.memory_space<vmem>>, vector<4x8x1xf32>
    %57 = arith.mulf %52, %56 : vector<4x8x1xf32>
    %cst_27 = arith.constant dense<0.000000e+00> : vector<4x8xf32>
    %58 = vector.multi_reduction <add>, %55, %cst_27 [2] : vector<4x8x8xf32> to vector<4x8xf32>
    %59 = vector.shape_cast %58 : vector<4x8xf32> to vector<4x8x1xf32>
    %60 = arith.addf %57, %59 : vector<4x8x1xf32>
    %c0_28 = arith.constant 0 : index
    %c0_29 = arith.constant 0 : index
    %c0_30 = arith.constant 0 : index
    %61 = vector.load %arg16[%c0_28, %c0_29, %c0_30] : memref<4x8x1xf32, #tpu.memory_space<vmem>>, vector<4x8x1xf32>
    tpu.vector_store %arg16[%c0_28, %c0_29, %c0_30], %60 {strides = array<i32>} : memref<4x8x1xf32, #tpu.memory_space<vmem>>, vector<4x8x1xf32>,
    %62 = arith.truncf %55 : vector<4x8x8xf32> to vector<4x8x8xbf16>
    "tpu.trace_start"() <{level = 10 : i32, message = "hqk,khd->hqd"}> : () -> ()
    %cst_31 = arith.constant dense<0.000000e+00> : vector<4x8x8xf32>
    %63 = tpu.matmul %62, %27, %cst_31 {dimension_numbers = #tpu.dot_dimension_numbers<[2], [0], [1], [2], [0, 0, 0, 1, 1, 2], [0], [1]>} : vector<4x8x8xbf16>, vector<8x4x8xbf16>, vector<4x8x8xf32> -> vector<4x8x8xf32>
    "tpu.trace_stop"() : () -> ()
    %c0_32 = arith.constant 0 : index
    %c0_33 = arith.constant 0 : index
    %c0_34 = arith.constant 0 : index
    %64 = vector.load %arg17[%c0_32, %c0_33, %c0_34] : memref<4x8x8xf32, #tpu.memory_space<vmem>>, vector<4x8x8xf32>
    %65 = vector.broadcast %52 : vector<4x8x1xf32> to vector<4x8x8xf32>
    %66 = arith.mulf %65, %64 : vector<4x8x8xf32>
    %67 = arith.addf %66, %63 : vector<4x8x8xf32>
    %c0_35 = arith.constant 0 : index
    %c0_36 = arith.constant 0 : index
    %c0_37 = arith.constant 0 : index
    %68 = vector.load %arg17[%c0_35, %c0_36, %c0_37] : memref<4x8x8xf32, #tpu.memory_space<vmem>>, vector<4x8x8xf32>
    tpu.vector_store %arg17[%c0_35, %c0_36, %c0_37], %67 {strides = array<i32>} : memref<4x8x8xf32, #tpu.memory_space<vmem>>, vector<4x8x8xf32>,
    %c0_38 = arith.constant 0 : index
    %c0_39 = arith.constant 0 : index
    %c0_40 = arith.constant 0 : index
    %69 = vector.load %arg15[%c0_38, %c0_39, %c0_40] : memref<4x8x1xf32, #tpu.memory_space<vmem>>, vector<4x8x1xf32>
    tpu.vector_store %arg15[%c0_38, %c0_39, %c0_40], %50 {strides = array<i32>} : memref<4x8x1xf32, #tpu.memory_space<vmem>>, vector<4x8x1xf32>,
    %c0_i32_41 = arith.constant 0 : i32
    %70 = arith.cmpi eq, %arg2, %c0_i32_41 : i32
    %71 = arith.extui %70 : i1 to i32
    %c0_i32_42 = arith.constant 0 : i32
    %72 = arith.cmpi ne, %71, %c0_i32_42 : i32
    scf.if %72 {
      %c0_43 = arith.constant 0 : index
      %c0_44 = arith.constant 0 : index
      %c0_45 = arith.constant 0 : index
      %73 = vector.load %arg16[%c0_43, %c0_44, %c0_45] : memref<4x8x1xf32, #tpu.memory_space<vmem>>, vector<4x8x1xf32>
      %cst_46 = arith.constant 1.000000e+00 : f32
      %74 = vector.broadcast %cst_46 : f32 to vector<4x8x1xf32>
      %75 = arith.divf %74, %73 : vector<4x8x1xf32>
      %c0_47 = arith.constant 0 : index
      %c0_48 = arith.constant 0 : index
      %c0_49 = arith.constant 0 : index
      %76 = vector.load %arg17[%c0_47, %c0_48, %c0_49] : memref<4x8x8xf32, #tpu.memory_space<vmem>>, vector<4x8x8xf32>
      %77 = vector.broadcast %75 : vector<4x8x1xf32> to vector<4x8x8xf32>
      %78 = arith.mulf %76, %77 : vector<4x8x8xf32>
      %79 = tpu.transpose %78, [1, 0, 2] : vector<4x8x8xf32> -> vector<8x4x8xf32>
      %80 = vector.shape_cast %79 : vector<8x4x8xf32> to vector<8x32xf32>
      %81 = arith.truncf %80 : vector<8x32xf32> to vector<8x32xbf16>
      %c0_50 = arith.constant 0 : index
      %c0_51 = arith.constant 0 : index
      %82 = vector.load %arg8[%c0_50, %c0_51] : memref<32x32xbf16, #tpu.memory_space<vmem>>, vector<32x32xbf16>
      %cst_52 = arith.constant dense<0.000000e+00> : vector<8x32xf32>
      %83 = tpu.matmul %81, %82, %cst_52 {dimension_numbers = #tpu.dot_dimension_numbers<[1], [0], [0], [1], [0, 0, 1, 1], [], []>} : vector<8x32xbf16>, vector<32x32xbf16>, vector<8x32xf32> -> vector<8x32xf32>
      %84 = vector.broadcast %4 : vector<1x32xf32> to vector<8x32xf32>
      %85 = arith.addf %83, %84 : vector<8x32xf32>
      %c0_53 = arith.constant 0 : index
      %c0_54 = arith.constant 0 : index
      %c0_55 = arith.constant 0 : index
      %86 = vector.load %arg3[%c0_53, %c0_54, %c0_55] : memref<1x8x32xf32, #tpu.memory_space<vmem>>, vector<1x8x32xf32>
      %87 = vector.shape_cast %86 : vector<1x8x32xf32> to vector<8x32xf32>
      %88 = arith.addf %85, %87 : vector<8x32xf32>
      %cst_56 = arith.constant dense<0.000000e+00> : vector<8xf32>
      %89 = vector.multi_reduction <add>, %88, %cst_56 [1] : vector<8x32xf32> to vector<8xf32>
      %90 = vector.shape_cast %89 : vector<8xf32> to vector<8x1xf32>
      %cst_57 = arith.constant 3.200000e+01 : f32
      %91 = vector.broadcast %cst_57 : f32 to vector<8x1xf32>
      %92 = arith.divf %90, %91 : vector<8x1xf32>
      %93 = vector.broadcast %92 : vector<8x1xf32> to vector<8x32xf32>
      %94 = arith.subf %88, %93 : vector<8x32xf32>
      %95 = arith.mulf %94, %94 : vector<8x32xf32>
      %cst_58 = arith.constant dense<0.000000e+00> : vector<8xf32>
      %96 = vector.multi_reduction <add>, %95, %cst_58 [1] : vector<8x32xf32> to vector<8xf32>
      %97 = vector.shape_cast %96 : vector<8xf32> to vector<8x1xf32>
      %cst_59 = arith.constant 3.200000e+01 : f32
      %98 = vector.broadcast %cst_59 : f32 to vector<8x1xf32>
      %99 = arith.divf %97, %98 : vector<8x1xf32>
      %100 = vector.broadcast %92 : vector<8x1xf32> to vector<8x32xf32>
      %101 = arith.subf %88, %100 : vector<8x32xf32>
      %cst_60 = arith.constant 9.99999974E-6 : f32
      %102 = vector.broadcast %cst_60 : f32 to vector<8x1xf32>
      %103 = arith.addf %99, %102 : vector<8x1xf32>
      %104 = math.rsqrt %103 : vector<8x1xf32>
      %105 = vector.broadcast %104 : vector<8x1xf32> to vector<8x32xf32>
      %106 = arith.mulf %101, %105 : vector<8x32xf32>
      %107 = vector.broadcast %6 : vector<1x32xf32> to vector<8x32xf32>
      %108 = arith.mulf %106, %107 : vector<8x32xf32>
      %109 = vector.broadcast %7 : vector<1x32xf32> to vector<8x32xf32>
      %110 = arith.addf %108, %109 : vector<8x32xf32>
      %111 = arith.truncf %110 : vector<8x32xf32> to vector<8x32xbf16>
      %c0_61 = arith.constant 0 : index
      %c0_62 = arith.constant 0 : index
      %112 = vector.load %arg9[%c0_61, %c0_62] : memref<32x64xbf16, #tpu.memory_space<vmem>>, vector<32x64xbf16>
      %cst_63 = arith.constant dense<0.000000e+00> : vector<8x64xf32>
      %113 = tpu.matmul %111, %112, %cst_63 {dimension_numbers = #tpu.dot_dimension_numbers<[1], [0], [0], [1], [0, 0, 1, 1], [], []>} : vector<8x32xbf16>, vector<32x64xbf16>, vector<8x64xf32> -> vector<8x64xf32>
      %c0_64 = arith.constant 0 : index
      %c0_65 = arith.constant 0 : index
      %114 = vector.load %arg12[%c0_64, %c0_65] : memref<1x64xf32, #tpu.memory_space<vmem>>, vector<1x64xf32>
      %115 = vector.broadcast %114 : vector<1x64xf32> to vector<8x64xf32>
      %116 = arith.addf %113, %115 : vector<8x64xf32>
      %cst_66 = arith.constant 5.000000e-01 : f32
      %117 = vector.broadcast %cst_66 : f32 to vector<8x64xf32>
      %118 = arith.mulf %117, %116 : vector<8x64xf32>
      %cst_67 = arith.constant 0.707106769 : f32
      %119 = vector.broadcast %cst_67 : f32 to vector<8x64xf32>
      %120 = arith.mulf %116, %119 : vector<8x64xf32>
      %121 = math.erf %120 : vector<8x64xf32>
      %cst_68 = arith.constant 1.000000e+00 : f32
      %122 = vector.broadcast %cst_68 : f32 to vector<8x64xf32>
      %123 = arith.addf %122, %121 : vector<8x64xf32>
      %124 = arith.mulf %118, %123 : vector<8x64xf32>
      %125 = arith.truncf %124 : vector<8x64xf32> to vector<8x64xbf16>
      %c0_69 = arith.constant 0 : index
      %c0_70 = arith.constant 0 : index
      %126 = vector.load %arg10[%c0_69, %c0_70] : memref<64x32xbf16, #tpu.memory_space<vmem>>, vector<64x32xbf16>
      %cst_71 = arith.constant dense<0.000000e+00> : vector<8x32xf32>
      %127 = tpu.matmul %125, %126, %cst_71 {dimension_numbers = #tpu.dot_dimension_numbers<[1], [0], [0], [1], [0, 0, 1, 1], [], []>} : vector<8x64xbf16>, vector<64x32xbf16>, vector<8x32xf32> -> vector<8x32xf32>
      %128 = vector.broadcast %5 : vector<1x32xf32> to vector<8x32xf32>
      %129 = arith.addf %127, %128 : vector<8x32xf32>
      %130 = arith.addf %129, %110 : vector<8x32xf32>
      %cst_72 = arith.constant dense<0.000000e+00> : vector<8xf32>
      %131 = vector.multi_reduction <add>, %130, %cst_72 [1] : vector<8x32xf32> to vector<8xf32>
      %132 = vector.shape_cast %131 : vector<8xf32> to vector<8x1xf32>
      %cst_73 = arith.constant 3.200000e+01 : f32
      %133 = vector.broadcast %cst_73 : f32 to vector<8x1xf32>
      %134 = arith.divf %132, %133 : vector<8x1xf32>
      %135 = vector.broadcast %134 : vector<8x1xf32> to vector<8x32xf32>
      %136 = arith.subf %130, %135 : vector<8x32xf32>
      %137 = arith.mulf %136, %136 : vector<8x32xf32>
      %cst_74 = arith.constant dense<0.000000e+00> : vector<8xf32>
      %138 = vector.multi_reduction <add>, %137, %cst_74 [1] : vector<8x32xf32> to vector<8xf32>
      %139 = vector.shape_cast %138 : vector<8xf32> to vector<8x1xf32>
      %cst_75 = arith.constant 3.200000e+01 : f32
      %140 = vector.broadcast %cst_75 : f32 to vector<8x1xf32>
      %141 = arith.divf %139, %140 : vector<8x1xf32>
      %142 = vector.broadcast %134 : vector<8x1xf32> to vector<8x32xf32>
      %143 = arith.subf %130, %142 : vector<8x32xf32>
      %cst_76 = arith.constant 9.99999974E-6 : f32
      %144 = vector.broadcast %cst_76 : f32 to vector<8x1xf32>
      %145 = arith.addf %141, %144 : vector<8x1xf32>
      %146 = math.rsqrt %145 : vector<8x1xf32>
      %147 = vector.broadcast %146 : vector<8x1xf32> to vector<8x32xf32>
      %148 = arith.mulf %143, %147 : vector<8x32xf32>
      %149 = vector.broadcast %8 : vector<1x32xf32> to vector<8x32xf32>
      %150 = arith.mulf %148, %149 : vector<8x32xf32>
      %151 = vector.broadcast %9 : vector<1x32xf32> to vector<8x32xf32>
      %152 = arith.addf %150, %151 : vector<8x32xf32>
      %c0_77 = arith.constant 0 : index
      %c0_78 = arith.constant 0 : index
      %c0_79 = arith.constant 0 : index
      %153 = vector.load %arg13[%c0_77, %c0_78, %c0_79] : memref<1x8x32xf32, #tpu.memory_space<vmem>>, vector<1x8x32xf32>
      %154 = vector.shape_cast %153 : vector<1x8x32xf32> to vector<8x32xf32>
      %155 = vector.shape_cast %152 : vector<8x32xf32> to vector<1x8x32xf32>
      tpu.vector_store %arg13[%c0_77, %c0_78, %c0_79], %155 {strides = array<i32>} : memref<1x8x32xf32, #tpu.memory_space<vmem>>, vector<1x8x32xf32>,
    } else {
    }
    return
  }
  func.func @transform_0(%arg0: i32, %arg1: i32, %arg2: i32) -> (i32, i32, i32) {
    %c0_i32 = arith.constant 0 : i32
    %c0_i32_0 = arith.constant 0 : i32
    return %arg0, %arg1, %c0_i32 : i32, i32, i32
  }
  func.func @transform_1(%arg0: i32, %arg1: i32, %arg2: i32) -> (i32, i32, i32) {
    %c0_i32 = arith.constant 0 : i32
    return %arg0, %arg1, %arg2 : i32, i32, i32
  }
  func.func @transform_2(%arg0: i32, %arg1: i32, %arg2: i32) -> (i32, i32) {
    %c0_i32 = arith.constant 0 : i32
    %c0_i32_0 = arith.constant 0 : i32
    %c0_i32_1 = arith.constant 0 : i32
    return %c0_i32, %c0_i32_0 : i32, i32
  }
  func.func @transform_3(%arg0: i32, %arg1: i32, %arg2: i32) -> (i32, i32) {
    %c0_i32 = arith.constant 0 : i32
    %c0_i32_0 = arith.constant 0 : i32
    %c0_i32_1 = arith.constant 0 : i32
    return %c0_i32, %c0_i32_0 : i32, i32
  }
  func.func @transform_4(%arg0: i32, %arg1: i32, %arg2: i32) -> (i32, i32) {
    %c0_i32 = arith.constant 0 : i32
    %c0_i32_0 = arith.constant 0 : i32
    %c0_i32_1 = arith.constant 0 : i32
    return %c0_i32, %c0_i32_0 : i32, i32
  }
  func.func @transform_5(%arg0: i32, %arg1: i32, %arg2: i32) -> (i32, i32) {
    %c0_i32 = arith.constant 0 : i32
    %c0_i32_0 = arith.constant 0 : i32
    %c0_i32_1 = arith.constant 0 : i32
    return %c0_i32, %c0_i32_0 : i32, i32
  }
  func.func @transform_6(%arg0: i32, %arg1: i32, %arg2: i32) -> (i32, i32) {
    %c0_i32 = arith.constant 0 : i32
    %c0_i32_0 = arith.constant 0 : i32
    %c0_i32_1 = arith.constant 0 : i32
    return %c0_i32, %c0_i32_0 : i32, i32
  }
  func.func @transform_7(%arg0: i32, %arg1: i32, %arg2: i32) -> (i32, i32) {
    %c0_i32 = arith.constant 0 : i32
    %c0_i32_0 = arith.constant 0 : i32
    %c0_i32_1 = arith.constant 0 : i32
    return %c0_i32, %c0_i32_0 : i32, i32
  }
  func.func @transform_8(%arg0: i32, %arg1: i32, %arg2: i32) -> (i32, i32) {
    %c0_i32 = arith.constant 0 : i32
    %c0_i32_0 = arith.constant 0 : i32
    %c0_i32_1 = arith.constant 0 : i32
    return %c0_i32, %c0_i32_0 : i32, i32
  }
  func.func @transform_9(%arg0: i32, %arg1: i32, %arg2: i32) -> (i32, i32) {
    %c0_i32 = arith.constant 0 : i32
    %c0_i32_0 = arith.constant 0 : i32
    %c0_i32_1 = arith.constant 0 : i32
    return %c0_i32, %c0_i32_0 : i32, i32
  }
  func.func @transform_10(%arg0: i32, %arg1: i32, %arg2: i32) -> (i32, i32, i32) {
    %c0_i32 = arith.constant 0 : i32
    %c0_i32_0 = arith.constant 0 : i32
    return %arg0, %arg1, %c0_i32 : i32, i32, i32
  }
}

</mosaic_0001>

<llo_original>
// kernel: tpu_custom_call.1
$region0: #{tpu_custom_call.1}
  #allocation0 [shape = 'u32[]', space=smem, size = 0x4, offset = 0x4, fixed_abs, tag = 'smem constant byte address 0x4 - core index']
  #allocation1 [shape = 'u32[144,128]{1,0:T(1,128)}', space=vmem, size = 0x12000, scoped, tag = 'internal scratch']
  %s0 = inlined_call_operand.hbm [shape: f32[8,128], index: 0, kind: input, shape index: {}]
  %s1 = inlined_call_operand.hbm [shape: f32[16,128], index: 1, kind: output, shape index: {}]
  %s2 = sld [smem:[#allocation0]]
  $region41: #{tpu_custom_call.1} parent=0
    _
  %s4 = ssub.s32 1, %s2
  %s5 = scalar_select 0, %s4, %s2
  $region1: #{tpu_custom_call.1} parent=0
    #allocation2 [shape = 'u8[4096]{0}', space=vmem, size = 0x1000, scoped, tag = 'input window, operand 0, single buffered']
    #allocation3 [shape = 's32[2]{0}', space=sflag, size = 0x8, scoped, tag = 'scoped memory for tpu_custom_call.1']
    #allocation4 [shape = 's32[2]{0}', space=sflag, size = 0x8, scoped, tag = 'scoped memory for tpu_custom_call.1']
    #allocation5 [shape = 'u8[8192]{0}', space=vmem, size = 0x2000, scoped, tag = 'output window, operand 0']
    %6 = vsyncpa [#allocation3], 0
    %7 = vsyncpa [#allocation4], 0
    %s8 = scalar_lea.sflag [#allocation4], 1
    %9 = vsyncpa %s8, 0
    loop: start=0, step=1, limit=4
    $region2: #{tpu_custom_call.1} parent=1 // loop_pre_header
      _
    $region3: #{tpu_custom_call.1} parent=1 // loop_header
      %s11 = sphi 0, %s15
      %p12 = scmp.ge.s32.totalorder %s11, 4
      %s19 = sphi 0, %s19
      %s21 = sphi 0, %s19
      %s22 = sphi 0, %s21
      %s36 = sphi 0, %s22
      %s42 = sphi 0, %s44
      %s45 = sphi 0, %s42
      %s46 = sphi 0, %s45
      %s62 = sphi 0, %s46
    $region4: #{tpu_custom_call.1} parent=1 // loop_header_branch
      %14 = sbr.rel (%p12) target = $region8
    $region5: #{tpu_custom_call.1} parent=1 // loop_body
      %s16 = ssub.s32 %s11, 1
      %s17 = ssub.s32 %s11, 2
      %s18 = sadd.s32 %s11, 1
      %s20 = sadd.s32 %s19, 1
      %p23 = scmp.eq.s32.totalorder %s11, 1
      %p24 = scmp.ne.s32.totalorder %s19, %s21
      %p25 = scmp.eq.s32.totalorder %s11, 0
      %p26 = por %p24, %p25
      %p27 = scmp.ne.s32.totalorder %s19, %s21
      %p28 = scmp.eq.s32.totalorder %s16, 1
      %p29 = por %p27, %p28
      %p30 = scmp.ne.s32.totalorder %s21, %s22
      %p31 = scmp.eq.s32.totalorder %s16, 0
      %p32 = por %p30, %p31
      %p33 = scmp.ne.s32.totalorder %s21, %s22
      %p34 = scmp.eq.s32.totalorder %s17, 1
      %p35 = por %p33, %p34
      %p37 = scmp.ne.s32.totalorder %s22, %s36
      %p38 = scmp.eq.s32.totalorder %s17, 0
      %p39 = por %p37, %p38
      %s40 = ssub.s32 %s11, %s18
      %p41 = scmp.eq.s32.totalorder %s40, 0
      %s43 = sadd.s32 %s42, 1
      %s44 = scalar_select %p41, %s42, %s43
      %p47 = pneg %p41
      %p48 = scmp.eq.s32.totalorder %s11, 1
      %p49 = por %p47, %p48
      %p50 = scmp.ne.s32.totalorder %s42, %s45
      %p51 = scmp.eq.s32.totalorder %s11, 0
      %p52 = por %p50, %p51
      %p53 = scmp.ne.s32.totalorder %s42, %s45
      %p54 = scmp.eq.s32.totalorder %s16, 1
      %p55 = por %p53, %p54
      %p56 = scmp.ne.s32.totalorder %s45, %s46
      %p57 = scmp.eq.s32.totalorder %s16, 0
      %p58 = por %p56, %p57
      %p59 = scmp.ne.s32.totalorder %s45, %s46
      %p60 = scmp.eq.s32.totalorder %s17, 1
      %p61 = por %p59, %p60
      %p63 = scmp.ne.s32.totalorder %s46, %s62
      %p64 = scmp.eq.s32.totalorder %s17, 0
      %p65 = por %p63, %p64
      %p66 = scmp.le.s32.totalorder 1, %s11
      %p67 = scmp.lt.s32.totalorder %s11, 3
      %p68 = pnand %p66, %p67
      %p69 = pneg %p68
      // Predicated region
      $region9: #{tpu_custom_call.1} parent=5 // pred_check
        _
      $region10: #{tpu_custom_call.1} parent=5 // pred_check_branch
        %71 = sbr.rel (%p68) target = $region12
      $region11: #{tpu_custom_call.1} parent=5 // pred_region
        %s72 = ssub.s32 %s11, 1
        // Predicated region
        $region13: #{tpu_custom_call.1} parent=11 // pred_check
          %p73 = pneg %p32
        $region14: #{tpu_custom_call.1} parent=11 // pred_check_branch
          %75 = sbr.rel (%p73) target = $region16
        $region15: #{tpu_custom_call.1} parent=11 // pred_region
          %s77 = ssub.s32 128, 128
          %78 = vsyncadd [#allocation3], %s77
          %s80 = sshll.u32 [#allocation2], 4
          %s81 = int_to_ptr.vmem [resolvable:$true] %s80
          %83 = dma.hbm_to_vmem [thread:$0]  %s0, 128, %s81, [#allocation3]
        $region16: #{tpu_custom_call.1} parent=11 // pred_fallthru
          _
      $region12: #{tpu_custom_call.1} parent=5 // pred_fallthru
        _
      %p84 = scmp.lt.s32.totalorder %s11, 2
      // Predicated region
      $region17: #{tpu_custom_call.1} parent=5 // pred_check
        %p85 = pneg %p84
      $region18: #{tpu_custom_call.1} parent=5 // pred_check_branch
        %87 = sbr.rel (%p85) target = $region20
      $region19: #{tpu_custom_call.1} parent=5 // pred_region
        _
      $region20: #{tpu_custom_call.1} parent=5 // pred_fallthru
        _
      %p88 = scmp.le.s32.totalorder 1, %s11
      %p89 = scmp.lt.s32.totalorder %s11, 3
      %p90 = pnand %p88, %p89
      %p91 = pneg %p90
      // Predicated region
      $region21: #{tpu_custom_call.1} parent=5 // pred_check
        _
      $region22: #{tpu_custom_call.1} parent=5 // pred_check_branch
        %93 = sbr.rel (%p90) target = $region24
      $region23: #{tpu_custom_call.1} parent=5 // pred_region
        %s94 = ssub.s32 %s11, 1
        // Predicated region
        $region25: #{tpu_custom_call.1} parent=23 // pred_check
          %p95 = pneg %p32
        $region26: #{tpu_custom_call.1} parent=23 // pred_check_branch
          %97 = sbr.rel (%p95) target = $region28
        $region27: #{tpu_custom_call.1} parent=23 // pred_region
          %98 = dma.done [#allocation3], 128
        $region28: #{tpu_custom_call.1} parent=23 // pred_fallthru
          _
        %p99 = pneg %p32
        %p100 = pneg %p29
        %p101 = pneg %p58
        %p102 = pneg %p55
        %s103 = sand.u32 %s45, 1
        %s104 = scalar_lea.sflag [#allocation4], %s103
        %s105 = sand.u32 %s45, 1
        %s106 = smul.addr %s105, 8
        %s107 = scalar_lea.vmem [#allocation5], %s106
        %v108 = vld [vmem:[#allocation2] sm:$0xff]
        %v109 = vmul.f32 %v108, 2.0
        %110 = vst [vmem:[%s107] sm:$0xff] %v109
        %s111 = sand.u32 %s45, 1
        %s112 = scalar_lea.sflag [#allocation4], %s111
        %s113 = sand.u32 %s45, 1
        %s114 = smul.addr %s113, 8
        %s115 = scalar_lea.vmem [#allocation5], %s114
        // Predicated region
        $region29: #{tpu_custom_call.1} parent=23 // pred_check
          %p116 = pneg %p55
        $region30: #{tpu_custom_call.1} parent=23 // pred_check_branch
          %118 = sbr.rel (%p116) target = $region32
        $region31: #{tpu_custom_call.1} parent=23 // pred_region
          %s120 = ssub.s32 128, 128
          %121 = vsyncadd %s112, %s120
          %s122 = smul.addr %s16, 128
          %s123 = scalar_lea.hbm %s1, %s122
          %s125 = sshll.u32 %s115, 4
          %s126 = int_to_ptr.vmem [resolvable:$true] %s125
          %128 = dma.vmem_to_hbm [thread:$0]  %s126, 128, %s123, %s112
        $region32: #{tpu_custom_call.1} parent=23 // pred_fallthru
          _
      $region24: #{tpu_custom_call.1} parent=5 // pred_fallthru
        _
      %p129 = scmp.le.s32.totalorder 2, %s11
      // Predicated region
      $region33: #{tpu_custom_call.1} parent=5 // pred_check
        %p130 = pneg %p129
      $region34: #{tpu_custom_call.1} parent=5 // pred_check_branch
        %132 = sbr.rel (%p130) target = $region36
      $region35: #{tpu_custom_call.1} parent=5 // pred_region
        %s133 = ssub.s32 %s11, 2
        // Predicated region
        $region37: #{tpu_custom_call.1} parent=35 // pred_check
          %p134 = pneg %p61
        $region38: #{tpu_custom_call.1} parent=35 // pred_check_branch
          %136 = sbr.rel (%p134) target = $region40
        $region39: #{tpu_custom_call.1} parent=35 // pred_region
          %s137 = sand.u32 %s46, 1
          %s138 = scalar_lea.sflag [#allocation4], %s137
          %s139 = sand.u32 %s46, 1
          %s140 = smul.addr %s139, 8
          %s141 = scalar_lea.vmem [#allocation5], %s140
          %142 = dma.done %s138, 128
        $region40: #{tpu_custom_call.1} parent=35 // pred_fallthru
          _
      $region36: #{tpu_custom_call.1} parent=5 // pred_fallthru
        _
    $region6: #{tpu_custom_call.1} parent=1 // loop_footer
      %s15 = sadd.s32 1, %s11
    $region7: #{tpu_custom_call.1} parent=1 // loop_footer_branch
      %10 = sbr.rel target = $region3
    $region8: #{tpu_custom_call.1} parent=1 // loop_exit
      _
    %143 = vsyncpa [#allocation3], 1
    %s144 = scalar_lea.sflag [#allocation3], 1
    %145 = vsyncpa %s144, 1
    %146 = vsyncpa [#allocation4], 1
    %s147 = scalar_lea.sflag [#allocation4], 1
    %148 = vsyncpa %s147, 1

// kernel: decoder_forward_prepared.3
$region0: #{decoder_forward_prepared.3}
  #allocation0 [shape = 'u32[]', space=smem, size = 0x4, offset = 0x4, fixed_abs, tag = 'smem constant byte address 0x4 - core index']
  #allocation1 [shape = 'u32[144,128]{1,0:T(1,128)}', space=vmem, size = 0x12000, scoped, tag = 'internal scratch']
  #allocation2 [shape = 'bf16[8,4,8]{2,1,0:T(4,128)(2,1)}', space=vmem, size = 0x2000, scoped, tag = 'scratch operand']
  #allocation3 [shape = 'f32[4,8,1]{2,1,0:T(8,128)}', space=vmem, size = 0x4000, scoped, tag = 'scratch operand']
  #allocation4 [shape = 'f32[4,8,1]{2,1,0:T(8,128)}', space=vmem, size = 0x4000, scoped, tag = 'scratch operand']
  #allocation5 [shape = 'f32[4,8,8]{2,1,0:T(8,128)}', space=vmem, size = 0x4000, scoped, tag = 'scratch operand']
  %s0 = inlined_call_operand.vmem [shape: f32[2,8,32], index: 0, kind: input, shape index: {}]
  %s1 = inlined_call_operand.vmem [shape: s8[2,8,8], index: 1, kind: input, shape index: {}]
  %s2 = inlined_call_operand.vmem [shape: bf16[32,32], index: 2, kind: input, shape index: {}]
  %s3 = inlined_call_operand.vmem [shape: bf16[32,32], index: 3, kind: input, shape index: {}]
  %s4 = inlined_call_operand.vmem [shape: bf16[32,32], index: 4, kind: input, shape index: {}]
  %s5 = inlined_call_operand.vmem [shape: bf16[32,32], index: 5, kind: input, shape index: {}]
  %s6 = inlined_call_operand.vmem [shape: bf16[32,64], index: 6, kind: input, shape index: {}]
  %s7 = inlined_call_operand.vmem [shape: bf16[64,32], index: 7, kind: input, shape index: {}]
  %s8 = inlined_call_operand.vmem [shape: f32[9,32], index: 8, kind: input, shape index: {}]
  %s9 = inlined_call_operand.vmem [shape: f32[1,64], index: 9, kind: input, shape index: {}]
  %s10 = inlined_call_operand.hbm [shape: f32[2,8,32], index: 10, kind: output, shape index: {}]
  %s11 = sld [smem:[#allocation0]]
  $region81: #{decoder_forward_prepared.3} parent=0
    _
  %s13 = ssub.s32 1, %s11
  %s14 = scalar_select 0, %s13, %s11
  $region1: #{decoder_forward_prepared.3} parent=0
    #allocation6 [shape = 'u8[8192]{0}', space=vmem, size = 0x2000, scoped, tag = 'output window, operand 0']
    #allocation7 [shape = 's32[2]{0}', space=sflag, size = 0x8, scoped, tag = 'scoped memory for decoder_forward_prepared.3']
    %15 = vsyncpa [#allocation7], 0
    %s16 = scalar_lea.sflag [#allocation7], 1
    %17 = vsyncpa %s16, 0
    loop: start=0, step=1, limit=4
    $region2: #{decoder_forward_prepared.3} parent=1 // loop_pre_header
      _
    $region3: #{decoder_forward_prepared.3} parent=1 // loop_header
      %s19 = sphi 0, %s23
      %p20 = scmp.ge.s32.totalorder %s19, 4
      %s26 = sphi 0, %s45
      %s27 = sphi 0, %s41
      %s28 = sphi 0, %s37
      %s29 = sphi 0, %s26
      %s30 = sphi 0, %s27
      %s31 = sphi 0, %s28
      %s32 = sphi 0, %s29
      %s33 = sphi 0, %s30
      %s34 = sphi 0, %s31
      %s50 = sphi 0, %s52
      %s53 = sphi 0, %s50
      %s54 = sphi 0, %s53
      %s70 = sphi 0, %s54
      %s80 = sphi 0, %s82
      %s83 = sphi 0, %s80
      %s84 = sphi 0, %s83
      %s100 = sphi 0, %s84
      %s104 = sphi 0, %s104
      %s106 = sphi 0, %s104
      %s107 = sphi 0, %s106
      %s121 = sphi 0, %s107
      %s125 = sphi 0, %s125
      %s127 = sphi 0, %s125
      %s128 = sphi 0, %s127
      %s142 = sphi 0, %s128
      %s146 = sphi 0, %s146
      %s148 = sphi 0, %s146
      %s149 = sphi 0, %s148
      %s163 = sphi 0, %s149
      %s167 = sphi 0, %s167
      %s169 = sphi 0, %s167
      %s170 = sphi 0, %s169
      %s184 = sphi 0, %s170
      %s188 = sphi 0, %s188
      %s190 = sphi 0, %s188
      %s191 = sphi 0, %s190
      %s205 = sphi 0, %s191
      %s209 = sphi 0, %s209
      %s211 = sphi 0, %s209
      %s212 = sphi 0, %s211
      %s226 = sphi 0, %s212
      %s230 = sphi 0, %s230
      %s232 = sphi 0, %s230
      %s233 = sphi 0, %s232
      %s247 = sphi 0, %s233
      %s251 = sphi 0, %s251
      %s253 = sphi 0, %s251
      %s254 = sphi 0, %s253
      %s268 = sphi 0, %s254
      %s276 = sphi 0, %s278
      %s279 = sphi 0, %s276
      %s280 = sphi 0, %s279
      %s296 = sphi 0, %s280
    $region4: #{decoder_forward_prepared.3} parent=1 // loop_header_branch
      %22 = sbr.rel (%p20) target = $region8
    $region5: #{decoder_forward_prepared.3} parent=1 // loop_body
      %s24 = ssub.s32 %s19, 1
      %s25 = ssub.s32 %s19, 2
      %s35 = sadd.s32 1, %s28
      %p36 = scmp.ge.s32.totalorder %s35, 1
      %s37 = scalar_select %p36, 0, %s35
      %s38 = sadd.s32 1, %s27
      %s39 = scalar_select %p36, %s38, %s27
      %p40 = scmp.ge.s32.totalorder %s39, 1
      %s41 = scalar_select %p40, 0, %s39
      %s42 = sadd.s32 1, %s26
      %s43 = scalar_select %p40, %s42, %s26
      %p44 = scmp.ge.s32.totalorder %s43, 2
      %s45 = scalar_select %p44, 0, %s43
      %s46 = ssub.s32 %s26, %s45
      %s47 = ssub.s32 %s27, %s41
      %s48 = sor.u32 %s46, %s47
      %p49 = scmp.eq.s32.totalorder %s48, 0
      %s51 = sadd.s32 %s50, 1
      %s52 = scalar_select %p49, %s50, %s51
      %p55 = pneg %p49
      %p56 = scmp.eq.s32.totalorder %s19, 1
      %p57 = por %p55, %p56
      %p58 = scmp.ne.s32.totalorder %s50, %s53
      %p59 = scmp.eq.s32.totalorder %s19, 0
      %p60 = por %p58, %p59
      %p61 = scmp.ne.s32.totalorder %s50, %s53
      %p62 = scmp.eq.s32.totalorder %s24, 1
      %p63 = por %p61, %p62
      %p64 = scmp.ne.s32.totalorder %s53, %s54
      %p65 = scmp.eq.s32.totalorder %s24, 0
      %p66 = por %p64, %p65
      %p67 = scmp.ne.s32.totalorder %s53, %s54
      %p68 = scmp.eq.s32.totalorder %s25, 1
      %p69 = por %p67, %p68
      %p71 = scmp.ne.s32.totalorder %s54, %s70
      %p72 = scmp.eq.s32.totalorder %s25, 0
      %p73 = por %p71, %p72
      %s74 = ssub.s32 %s26, %s45
      %s75 = ssub.s32 %s27, %s41
      %s76 = sor.u32 %s74, %s75
      %s77 = ssub.s32 %s28, %s37
      %s78 = sor.u32 %s76, %s77
      %p79 = scmp.eq.s32.totalorder %s78, 0
      %s81 = sadd.s32 %s80, 1
      %s82 = scalar_select %p79, %s80, %s81
      %p85 = pneg %p79
      %p86 = scmp.eq.s32.totalorder %s19, 1
      %p87 = por %p85, %p86
      %p88 = scmp.ne.s32.totalorder %s80, %s83
      %p89 = scmp.eq.s32.totalorder %s19, 0
      %p90 = por %p88, %p89
      %p91 = scmp.ne.s32.totalorder %s80, %s83
      %p92 = scmp.eq.s32.totalorder %s24, 1
      %p93 = por %p91, %p92
      %p94 = scmp.ne.s32.totalorder %s83, %s84
      %p95 = scmp.eq.s32.totalorder %s24, 0
      %p96 = por %p94, %p95
      %p97 = scmp.ne.s32.totalorder %s83, %s84
      %p98 = scmp.eq.s32.totalorder %s25, 1
      %p99 = por %p97, %p98
      %p101 = scmp.ne.s32.totalorder %s84, %s100
      %p102 = scmp.eq.s32.totalorder %s25, 0
      %p103 = por %p101, %p102
      %s105 = sadd.s32 %s104, 1
      %p108 = scmp.eq.s32.totalorder %s19, 1
      %p109 = scmp.ne.s32.totalorder %s104, %s106
      %p110 = scmp.eq.s32.totalorder %s19, 0
      %p111 = por %p109, %p110
      %p112 = scmp.ne.s32.totalorder %s104, %s106
      %p113 = scmp.eq.s32.totalorder %s24, 1
      %p114 = por %p112, %p113
      %p115 = scmp.ne.s32.totalorder %s106, %s107
      %p116 = scmp.eq.s32.totalorder %s24, 0
      %p117 = por %p115, %p116
      %p118 = scmp.ne.s32.totalorder %s106, %s107
      %p119 = scmp.eq.s32.totalorder %s25, 1
      %p120 = por %p118, %p119
      %p122 = scmp.ne.s32.totalorder %s107, %s121
      %p123 = scmp.eq.s32.totalorder %s25, 0
      %p124 = por %p122, %p123
      %s126 = sadd.s32 %s125, 1
      %p129 = scmp.eq.s32.totalorder %s19, 1
      %p130 = scmp.ne.s32.totalorder %s125, %s127
      %p131 = scmp.eq.s32.totalorder %s19, 0
      %p132 = por %p130, %p131
      %p133 = scmp.ne.s32.totalorder %s125, %s127
      %p134 = scmp.eq.s32.totalorder %s24, 1
      %p135 = por %p133, %p134
      %p136 = scmp.ne.s32.totalorder %s127, %s128
      %p137 = scmp.eq.s32.totalorder %s24, 0
      %p138 = por %p136, %p137
      %p139 = scmp.ne.s32.totalorder %s127, %s128
      %p140 = scmp.eq.s32.totalorder %s25, 1
      %p141 = por %p139, %p140
      %p143 = scmp.ne.s32.totalorder %s128, %s142
      %p144 = scmp.eq.s32.totalorder %s25, 0
      %p145 = por %p143, %p144
      %s147 = sadd.s32 %s146, 1
      %p150 = scmp.eq.s32.totalorder %s19, 1
      %p151 = scmp.ne.s32.totalorder %s146, %s148
      %p152 = scmp.eq.s32.totalorder %s19, 0
      %p153 = por %p151, %p152
      %p154 = scmp.ne.s32.totalorder %s146, %s148
      %p155 = scmp.eq.s32.totalorder %s24, 1
      %p156 = por %p154, %p155
      %p157 = scmp.ne.s32.totalorder %s148, %s149
      %p158 = scmp.eq.s32.totalorder %s24, 0
      %p159 = por %p157, %p158
      %p160 = scmp.ne.s32.totalorder %s148, %s149
      %p161 = scmp.eq.s32.totalorder %s25, 1
      %p162 = por %p160, %p161
      %p164 = scmp.ne.s32.totalorder %s149, %s163
      %p165 = scmp.eq.s32.totalorder %s25, 0
      %p166 = por %p164, %p165
      %s168 = sadd.s32 %s167, 1
      %p171 = scmp.eq.s32.totalorder %s19, 1
      %p172 = scmp.ne.s32.totalorder %s167, %s169
      %p173 = scmp.eq.s32.totalorder %s19, 0
      %p174 = por %p172, %p173
      %p175 = scmp.ne.s32.totalorder %s167, %s169
      %p176 = scmp.eq.s32.totalorder %s24, 1
      %p177 = por %p175, %p176
      %p178 = scmp.ne.s32.totalorder %s169, %s170
      %p179 = scmp.eq.s32.totalorder %s24, 0
      %p180 = por %p178, %p179
      %p181 = scmp.ne.s32.totalorder %s169, %s170
      %p182 = scmp.eq.s32.totalorder %s25, 1
      %p183 = por %p181, %p182
      %p185 = scmp.ne.s32.totalorder %s170, %s184
      %p186 = scmp.eq.s32.totalorder %s25, 0
      %p187 = por %p185, %p186
      %s189 = sadd.s32 %s188, 1
      %p192 = scmp.eq.s32.totalorder %s19, 1
      %p193 = scmp.ne.s32.totalorder %s188, %s190
      %p194 = scmp.eq.s32.totalorder %s19, 0
      %p195 = por %p193, %p194
      %p196 = scmp.ne.s32.totalorder %s188, %s190
      %p197 = scmp.eq.s32.totalorder %s24, 1
      %p198 = por %p196, %p197
      %p199 = scmp.ne.s32.totalorder %s190, %s191
      %p200 = scmp.eq.s32.totalorder %s24, 0
      %p201 = por %p199, %p200
      %p202 = scmp.ne.s32.totalorder %s190, %s191
      %p203 = scmp.eq.s32.totalorder %s25, 1
      %p204 = por %p202, %p203
      %p206 = scmp.ne.s32.totalorder %s191, %s205
      %p207 = scmp.eq.s32.totalorder %s25, 0
      %p208 = por %p206, %p207
      %s210 = sadd.s32 %s209, 1
      %p213 = scmp.eq.s32.totalorder %s19, 1
      %p214 = scmp.ne.s32.totalorder %s209, %s211
      %p215 = scmp.eq.s32.totalorder %s19, 0
      %p216 = por %p214, %p215
      %p217 = scmp.ne.s32.totalorder %s209, %s211
      %p218 = scmp.eq.s32.totalorder %s24, 1
      %p219 = por %p217, %p218
      %p220 = scmp.ne.s32.totalorder %s211, %s212
      %p221 = scmp.eq.s32.totalorder %s24, 0
      %p222 = por %p220, %p221
      %p223 = scmp.ne.s32.totalorder %s211, %s212
      %p224 = scmp.eq.s32.totalorder %s25, 1
      %p225 = por %p223, %p224
      %p227 = scmp.ne.s32.totalorder %s212, %s226
      %p228 = scmp.eq.s32.totalorder %s25, 0
      %p229 = por %p227, %p228
      %s231 = sadd.s32 %s230, 1
      %p234 = scmp.eq.s32.totalorder %s19, 1
      %p235 = scmp.ne.s32.totalorder %s230, %s232
      %p236 = scmp.eq.s32.totalorder %s19, 0
      %p237 = por %p235, %p236
      %p238 = scmp.ne.s32.totalorder %s230, %s232
      %p239 = scmp.eq.s32.totalorder %s24, 1
      %p240 = por %p238, %p239
      %p241 = scmp.ne.s32.totalorder %s232, %s233
      %p242 = scmp.eq.s32.totalorder %s24, 0
      %p243 = por %p241, %p242
      %p244 = scmp.ne.s32.totalorder %s232, %s233
      %p245 = scmp.eq.s32.totalorder %s25, 1
      %p246 = por %p244, %p245
      %p248 = scmp.ne.s32.totalorder %s233, %s247
      %p249 = scmp.eq.s32.totalorder %s25, 0
      %p250 = por %p248, %p249
      %s252 = sadd.s32 %s251, 1
      %p255 = scmp.eq.s32.totalorder %s19, 1
      %p256 = scmp.ne.s32.totalorder %s251, %s253
      %p257 = scmp.eq.s32.totalorder %s19, 0
      %p258 = por %p256, %p257
      %p259 = scmp.ne.s32.totalorder %s251, %s253
      %p260 = scmp.eq.s32.totalorder %s24, 1
      %p261 = por %p259, %p260
      %p262 = scmp.ne.s32.totalorder %s253, %s254
      %p263 = scmp.eq.s32.totalorder %s24, 0
      %p264 = por %p262, %p263
      %p265 = scmp.ne.s32.totalorder %s253, %s254
      %p266 = scmp.eq.s32.totalorder %s25, 1
      %p267 = por %p265, %p266
      %p269 = scmp.ne.s32.totalorder %s254, %s268
      %p270 = scmp.eq.s32.totalorder %s25, 0
      %p271 = por %p269, %p270
      %s272 = ssub.s32 %s26, %s45
      %s273 = ssub.s32 %s27, %s41
      %s274 = sor.u32 %s272, %s273
      %p275 = scmp.eq.s32.totalorder %s274, 0
      %s277 = sadd.s32 %s276, 1
      %s278 = scalar_select %p275, %s276, %s277
      %p281 = pneg %p275
      %p282 = scmp.eq.s32.totalorder %s19, 1
      %p283 = por %p281, %p282
      %p284 = scmp.ne.s32.totalorder %s276, %s279
      %p285 = scmp.eq.s32.totalorder %s19, 0
      %p286 = por %p284, %p285
      %p287 = scmp.ne.s32.totalorder %s276, %s279
      %p288 = scmp.eq.s32.totalorder %s24, 1
      %p289 = por %p287, %p288
      %p290 = scmp.ne.s32.totalorder %s279, %s280
      %p291 = scmp.eq.s32.totalorder %s24, 0
      %p292 = por %p290, %p291
      %p293 = scmp.ne.s32.totalorder %s279, %s280
      %p294 = scmp.eq.s32.totalorder %s25, 1
      %p295 = por %p293, %p294
      %p297 = scmp.ne.s32.totalorder %s280, %s296
      %p298 = scmp.eq.s32.totalorder %s25, 0
      %p299 = por %p297, %p298
      %p300 = scmp.le.s32.totalorder 1, %s19
      %p301 = scmp.lt.s32.totalorder %s19, 3
      %p302 = pnand %p300, %p301
      %p303 = pneg %p302
      // Predicated region
      $region9: #{decoder_forward_prepared.3} parent=5 // pred_check
        _
      $region10: #{decoder_forward_prepared.3} parent=5 // pred_check_branch
        %305 = sbr.rel (%p302) target = $region12
      $region11: #{decoder_forward_prepared.3} parent=5 // pred_region
        %s306 = ssub.s32 %s19, 1
        // Predicated region
        $region13: #{decoder_forward_prepared.3} parent=11 // pred_check
          %p307 = pneg %p117
        $region14: #{decoder_forward_prepared.3} parent=11 // pred_check_branch
          %309 = sbr.rel (%p307) target = $region16
        $region15: #{decoder_forward_prepared.3} parent=11 // pred_region
          _
        $region16: #{decoder_forward_prepared.3} parent=11 // pred_fallthru
          _
        // Predicated region
        $region17: #{decoder_forward_prepared.3} parent=11 // pred_check
          %p310 = pneg %p138
        $region18: #{decoder_forward_prepared.3} parent=11 // pred_check_branch
          %312 = sbr.rel (%p310) target = $region20
        $region19: #{decoder_forward_prepared.3} parent=11 // pred_region
          _
        $region20: #{decoder_forward_prepared.3} parent=11 // pred_fallthru
          _
        // Predicated region
        $region21: #{decoder_forward_prepared.3} parent=11 // pred_check
          %p313 = pneg %p159
        $region22: #{decoder_forward_prepared.3} parent=11 // pred_check_branch
          %315 = sbr.rel (%p313) target = $region24
        $region23: #{decoder_forward_prepared.3} parent=11 // pred_region
          _
        $region24: #{decoder_forward_prepared.3} parent=11 // pred_fallthru
          _
        // Predicated region
        $region25: #{decoder_forward_prepared.3} parent=11 // pred_check
          %p316 = pneg %p180
        $region26: #{decoder_forward_prepared.3} parent=11 // pred_check_branch
          %318 = sbr.rel (%p316) target = $region28
        $region27: #{decoder_forward_prepared.3} parent=11 // pred_region
          _
        $region28: #{decoder_forward_prepared.3} parent=11 // pred_fallthru
          _
        // Predicated region
        $region29: #{decoder_forward_prepared.3} parent=11 // pred_check
          %p319 = pneg %p201
        $region30: #{decoder_forward_prepared.3} parent=11 // pred_check_branch
          %321 = sbr.rel (%p319) target = $region32
        $region31: #{decoder_forward_prepared.3} parent=11 // pred_region
          _
        $region32: #{decoder_forward_prepared.3} parent=11 // pred_fallthru
          _
        // Predicated region
        $region33: #{decoder_forward_prepared.3} parent=11 // pred_check
          %p322 = pneg %p222
        $region34: #{decoder_forward_prepared.3} parent=11 // pred_check_branch
          %324 = sbr.rel (%p322) target = $region36
        $region35: #{decoder_forward_prepared.3} parent=11 // pred_region
          _
        $region36: #{decoder_forward_prepared.3} parent=11 // pred_fallthru
          _
        // Predicated region
        $region37: #{decoder_forward_prepared.3} parent=11 // pred_check
          %p325 = pneg %p243
        $region38: #{decoder_forward_prepared.3} parent=11 // pred_check_branch
          %327 = sbr.rel (%p325) target = $region40
        $region39: #{decoder_forward_prepared.3} parent=11 // pred_region
          _
        $region40: #{decoder_forward_prepared.3} parent=11 // pred_fallthru
          _
        // Predicated region
        $region41: #{decoder_forward_prepared.3} parent=11 // pred_check
          %p328 = pneg %p264
        $region42: #{decoder_forward_prepared.3} parent=11 // pred_check_branch
          %330 = sbr.rel (%p328) target = $region44
        $region43: #{decoder_forward_prepared.3} parent=11 // pred_region
          _
        $region44: #{decoder_forward_prepared.3} parent=11 // pred_fallthru
          _
      $region12: #{decoder_forward_prepared.3} parent=5 // pred_fallthru
        _
      %p331 = scmp.lt.s32.totalorder %s19, 2
      // Predicated region
      $region45: #{decoder_forward_prepared.3} parent=5 // pred_check
        %p332 = pneg %p331
      $region46: #{decoder_forward_prepared.3} parent=5 // pred_check_branch
        %334 = sbr.rel (%p332) target = $region48
      $region47: #{decoder_forward_prepared.3} parent=5 // pred_region
        // Predicated region
        $region49: #{decoder_forward_prepared.3} parent=47 // pred_check
          %p335 = pneg %p60
        $region50: #{decoder_forward_prepared.3} parent=47 // pred_check_branch
          %337 = sbr.rel (%p335) target = $region52
        $region51: #{decoder_forward_prepared.3} parent=47 // pred_region
          %p338 = scmp.lt.s32.totalorder %s26, 1
          %s339 = scalar_select %p338, %s26, 1
          %p340 = scmp.lt.s32.totalorder %s27, 0
          %s341 = scalar_select %p340, %s27, 0
          %s342 = sadd.s32 %s341, %s339
          %s343 = smul.addr %s342, 8
          %s344 = scalar_lea.vmem %s0, %s343
        $region52: #{decoder_forward_prepared.3} parent=47 // pred_fallthru
          _
        // Predicated region
        $region53: #{decoder_forward_prepared.3} parent=47 // pred_check
          %p345 = pneg %p90
        $region54: #{decoder_forward_prepared.3} parent=47 // pred_check_branch
          %347 = sbr.rel (%p345) target = $region56
        $region55: #{decoder_forward_prepared.3} parent=47 // pred_region
          %p348 = scmp.lt.s32.totalorder %s26, 1
          %s349 = scalar_select %p348, %s26, 1
          %p350 = scmp.lt.s32.totalorder %s27, 0
          %s351 = scalar_select %p350, %s27, 0
          %p352 = scmp.lt.s32.totalorder %s28, 0
          %s353 = scalar_select %p352, %s28, 0
          %s354 = sadd.s32 %s353, %s351
          %s355 = sadd.s32 %s354, %s349
          %s356 = smul.addr %s355, 2
          %s357 = scalar_lea.vmem %s1, %s356
        $region56: #{decoder_forward_prepared.3} parent=47 // pred_fallthru
          _
      $region48: #{decoder_forward_prepared.3} parent=5 // pred_fallthru
        _
      %p358 = scmp.le.s32.totalorder 1, %s19
      %p359 = scmp.lt.s32.totalorder %s19, 3
      %p360 = pnand %p358, %p359
      %p361 = pneg %p360
      // Predicated region
      $region57: #{decoder_forward_prepared.3} parent=5 // pred_check
        _
      $region58: #{decoder_forward_prepared.3} parent=5 // pred_check_branch
        %363 = sbr.rel (%p360) target = $region60
      $region59: #{decoder_forward_prepared.3} parent=5 // pred_region
        %s364 = ssub.s32 %s19, 1
        %p365 = scmp.lt.s32.totalorder %s29, 1
        %s366 = scalar_select %p365, %s29, 1
        %p367 = scmp.lt.s32.totalorder %s30, 0
        %s368 = scalar_select %p367, %s30, 0
        %s369 = sadd.s32 %s368, %s366
        %s370 = smul.addr %s369, 8
        %s371 = scalar_lea.vmem %s0, %s370
        %p372 = pneg %p66
        %p373 = pneg %p63
        %p374 = scmp.lt.s32.totalorder %s29, 1
        %s375 = scalar_select %p374, %s29, 1
        %p376 = scmp.lt.s32.totalorder %s30, 0
        %s377 = scalar_select %p376, %s30, 0
        %p378 = scmp.lt.s32.totalorder %s31, 0
        %s379 = scalar_select %p378, %s31, 0
        %s380 = sadd.s32 %s379, %s377
        %s381 = sadd.s32 %s380, %s375
        %s382 = smul.addr %s381, 2
        %s383 = scalar_lea.vmem %s1, %s382
        %p384 = pneg %p96
        %p385 = pneg %p93
        %p386 = pneg %p117
        %p387 = pneg %p114
        %p388 = pneg %p138
        %p389 = pneg %p135
        %p390 = pneg %p159
        %p391 = pneg %p156
        %p392 = pneg %p180
        %p393 = pneg %p177
        %p394 = pneg %p201
        %p395 = pneg %p198
        %p396 = pneg %p222
        %p397 = pneg %p219
        %p398 = pneg %p243
        %p399 = pneg %p240
        %p400 = pneg %p264
        %p401 = pneg %p261
        %p402 = pneg %p292
        %p403 = pneg %p289
        %s404 = sand.u32 %s279, 1
        %s405 = scalar_lea.sflag [#allocation7], %s404
        %s406 = sand.u32 %s279, 1
        %s407 = smul.addr %s406, 8
        %s408 = scalar_lea.vmem [#allocation6], %s407
        %p409 = scmp.lt.s32.totalorder %s29, 1
        %s410 = scalar_select %p409, %s29, 1
        %p411 = scmp.lt.s32.totalorder %s30, 0
        %s412 = scalar_select %p411, %s30, 0
        %s413 = sadd.s32 %s412, %s410
        %s414 = smul.addr %s413, 8
        %s415 = scalar_lea.vmem %s0, %s414
        %p416 = scmp.lt.s32.totalorder %s29, 1
        %s417 = scalar_select %p416, %s29, 1
        %p418 = scmp.lt.s32.totalorder %s30, 0
        %s419 = scalar_select %p418, %s30, 0
        %p420 = scmp.lt.s32.totalorder %s31, 0
        %s421 = scalar_select %p420, %s31, 0
        %s422 = sadd.s32 %s421, %s419
        %s423 = sadd.s32 %s422, %s417
        %s424 = smul.addr %s423, 2
        %s425 = scalar_lea.vmem %s1, %s424
        %v427 = vld [vmem:[%s8] sm:$0xff]
        %v428 = vld [vmem:[%s8 + $0x8] sm:$0x1]
        %p429 = scmp.eq.s32.totalorder %s31, 0
        // Predicated region
        $region61: #{decoder_forward_prepared.3} parent=59 // pred_check
          %p430 = pneg %p429
        $region62: #{decoder_forward_prepared.3} parent=59 // pred_check_branch
          %432 = sbr.rel (%p430) target = $region64
        $region63: #{decoder_forward_prepared.3} parent=59 // pred_region
          %vm433 = vcmask 7168
          %434 = vst.msk [vmem:[#allocation3] sm:$0xff] %vm433, -1e+30
          %435 = vst.msk [vmem:[#allocation3 + $0x8] sm:$0xff] %vm433, -1e+30
          %436 = vst.msk [vmem:[#allocation3 + $0x10] sm:$0xff] %vm433, -1e+30
          %437 = vst.msk [vmem:[#allocation3 + $0x18] sm:$0xff] %vm433, -1e+30
          %438 = vst.msk [vmem:[#allocation4] sm:$0xff] %vm433, 0.0
          %439 = vst.msk [vmem:[#allocation4 + $0x8] sm:$0xff] %vm433, 0.0
          %440 = vst.msk [vmem:[#allocation4 + $0x10] sm:$0xff] %vm433, 0.0
          %441 = vst.msk [vmem:[#allocation4 + $0x18] sm:$0xff] %vm433, 0.0
          %vm442 = vcmask 64512
          %443 = vst.msk [vmem:[#allocation5] sm:$0xff] %vm442, 0.0
          %444 = vst.msk [vmem:[#allocation5 + $0x8] sm:$0xff] %vm442, 0.0
          %445 = vst.msk [vmem:[#allocation5 + $0x10] sm:$0xff] %vm442, 0.0
          %446 = vst.msk [vmem:[#allocation5 + $0x18] sm:$0xff] %vm442, 0.0
          %v447 = vld [vmem:[%s415] sm:$0xff]
          %v448 = vpack.c.bf16 %v447, %v447
          %v449 = vld [vmem:[%s2] sm:$0xf]
          %v450 = vld [vmem:[%s2 + $0x4] sm:$0xf]
          %v451 = vld [vmem:[%s2 + $0x8] sm:$0xf]
          %v452 = vld [vmem:[%s2 + $0xc] sm:$0xf]
          %v453 = vlaneseq
          %v454 = vshrl.u32 %v453, 7
          %v455 = vsub.s32 0, %v454
          %v456 = vrot.slane %v427, %v455
          %v461 = vunpack.c.l.b16 %v449
          %v462 = vunpack.c.l.b16 %v450
          %v463 = vunpack.c.l.b16 %v451
          %v464 = vunpack.c.l.b16 %v452
          %v465 = vpack.c.b16 %v462, %v461
          %v466 = vpack.c.b16 %v464, %v463
          %vm469 = vcmask 261120
          %v471 = vsel %vm469, %v448, 0
          %473 = vmatprep.subr.bf16.mxu0 0
          %474 = vmatpush1.bf16.msra.mxu0 0
          %475 = vmatprep.subr.bf16.mxu0 0
          %476 = vmatpush1.bf16.msra.mxu0 0
          %477 = vmatprep.subr.bf16.mxu0 0
          %478 = vmatpush1.bf16.msra.mxu0 0
          %479 = vmatprep.subr.bf16.mxu0 0
          %480 = vmatpush1.bf16.msra.mxu0 0
          %481 = vmatprep.subr.bf16.mxu0 0
          %482 = vmatpush1.bf16.msra.mxu0 0
          %483 = vmatprep.subr.bf16.mxu0 0
          %484 = vmatpush1.bf16.msra.mxu0 0
          %485 = vmatprep.subr.bf16.mxu0 0
          %486 = vmatpush1.bf16.msra.mxu0 %v466
          %487 = vmatprep.subr.bf16.mxu0 0
          %488 = vmatpush1.bf16.msra.mxu0 %v465
          %489 = vmatprep.subr.bf16.mxu0 0
          %490 = vmatpush2.bf16.msra.mxu0 0
          %491 = vmatprep.subr.bf16.mxu0 0
          %492 = vmatpush2.bf16.msra.mxu0 0
          %493 = vmatprep.subr.bf16.mxu0 0
          %494 = vmatpush2.bf16.msra.mxu0 0
          %495 = vmatprep.subr.bf16.mxu0 0
          %496 = vmatpush2.bf16.msra.mxu0 0
          %497 = vmatprep.subr.bf16.mxu0 0
          %498 = vmatpush2.bf16.msra.mxu0 0
          %499 = vmatprep.subr.bf16.mxu0 0
          %500 = vmatpush2.bf16.msra.mxu0 0
          %501 = vmatprep.subr.bf16.mxu0 0
          %502 = vmatpush2.bf16.msra.mxu0 0
          %503 = vmatprep.subr.bf16.mxu0 0
          %504 = vmatpush2.bf16.msra.mxu0 0
          %505 = vmatprep.mubr.bf16.mxu0 0
          %506 = vmatmul.mubr.bf16.gmra.mxu0 %v471
          %v507 = vpop.f32.mrf.mxu0
          %v508 = vadd.f32 %v456, %v507
          %v509 = vpop.f32.mrf.mxu0
          %v510 = vpop.f32.mrf.mxu0
          %v511 = vpop.f32.mrf.mxu0
          %512 = vdwg.mxu0
          %514 = vrot.lane.b32.xlu0 %v508, 120
          %v515 = vpop.permute.xlu0 %514
          %517 = vrot.lane.b32.xlu0 %v508, 112
          %v518 = vpop.permute.xlu0 %517
          %520 = vrot.lane.b32.xlu0 %v508, 104
          %v521 = vpop.permute.xlu0 %520
          %v523 = vcombine.low %v508, %v518
          %v524 = vcombine.high %v508, %v518
          %v526 = vunpack.c.l.s4 1983009808
          %v527 = vunpack.c.0.s8 %v526
          %v528 = vlaneseq
          %v529 = vshrl.u32 %v528, 7
          %v530 = vsub.s32 %v527, %v529
          %v531 = vrot.slane %v523, %v530
          %v533 = vunpack.c.l.s4 1983009808
          %v534 = vunpack.c.0.s8 %v533
          %v535 = vlaneseq
          %v536 = vshrl.u32 %v535, 7
          %v537 = vsub.s32 %v534, %v536
          %v538 = vrot.slane %v524, %v537
          %v539 = vcombine.low %v515, %v521
          %v540 = vcombine.high %v515, %v521
          %v542 = vunpack.c.l.s4 1983009808
          %v543 = vunpack.c.0.s8 %v542
          %v544 = vlaneseq
          %v545 = vshrl.u32 %v544, 7
          %v546 = vsub.s32 %v543, %v545
          %v547 = vrot.slane %v539, %v546
          %v549 = vunpack.c.l.s4 1983009808
          %v550 = vunpack.c.0.s8 %v549
          %v551 = vlaneseq
          %v552 = vshrl.u32 %v551, 7
          %v553 = vsub.s32 %v550, %v552
          %v554 = vrot.slane %v540, %v553
          %v555 = vcombine.low %v531, %v547
          %v556 = vcombine.high %v531, %v547
          %v558 = vunpack.c.l.s4 1934713408
          %v559 = vunpack.c.0.s8 %v558
          %v560 = vlaneseq
          %v561 = vshrl.u32 %v560, 7
          %v562 = vsub.s32 %v559, %v561
          %v563 = vrot.slane %v555, %v562
          %v565 = vunpack.c.l.s4 1934713408
          %v566 = vunpack.c.0.s8 %v565
          %v567 = vlaneseq
          %v568 = vshrl.u32 %v567, 7
          %v569 = vsub.s32 %v566, %v568
          %v570 = vrot.slane %v556, %v569
          %v571 = vcombine.low %v538, %v554
          %v572 = vcombine.high %v538, %v554
          %v574 = vunpack.c.l.s4 1934713408
          %v575 = vunpack.c.0.s8 %v574
          %v576 = vlaneseq
          %v577 = vshrl.u32 %v576, 7
          %v578 = vsub.s32 %v575, %v577
          %v579 = vrot.slane %v571, %v578
          %v581 = vunpack.c.l.s4 1934713408
          %v582 = vunpack.c.0.s8 %v581
          %v583 = vlaneseq
          %v584 = vshrl.u32 %v583, 7
          %v585 = vsub.s32 %v582, %v584
          %v586 = vrot.slane %v572, %v585
          %v587 = vcombine.high %v563, 0.0
          %v588 = vcombine.high %v570, 0.0
          %v589 = vcombine.high %v579, 0.0
          %v590 = vcombine.high %v586, 0.0
          %v591 = vpack.c.bf16 %v563, %v563
          %v592 = vpack.c.bf16 %v587, %v587
          %v593 = vpack.c.bf16 %v570, %v570
          %v594 = vpack.c.bf16 %v588, %v588
          %v595 = vpack.c.bf16 %v579, %v579
          %v596 = vpack.c.bf16 %v589, %v589
          %v597 = vpack.c.bf16 %v586, %v586
          %v598 = vpack.c.bf16 %v590, %v590
          %vm599 = vcmask 58368
          %600 = vst.msk [vmem:[#allocation2] sm:$0x3] %vm599, %v591
          %601 = vst.msk [vmem:[#allocation2 + $0x2] sm:$0x3] %vm599, %v592
          %602 = vst.msk [vmem:[#allocation2 + $0x4] sm:$0x3] %vm599, %v593
          %603 = vst.msk [vmem:[#allocation2 + $0x6] sm:$0x3] %vm599, %v594
          %604 = vst.msk [vmem:[#allocation2 + $0x8] sm:$0x3] %vm599, %v595
          %605 = vst.msk [vmem:[#allocation2 + $0xa] sm:$0x3] %vm599, %v596
          %606 = vst.msk [vmem:[#allocation2 + $0xc] sm:$0x3] %vm599, %v597
          %607 = vst.msk [vmem:[#allocation2 + $0xe] sm:$0x3] %vm599, %v598
        $region64: #{decoder_forward_prepared.3} parent=59 // pred_fallthru
          _
        %v608 = vld [vmem:[%s415] sm:$0xff]
        %v609 = vpack.c.bf16 %v608, %v608
        %v610 = vld [vmem:[%s3] sm:$0xf]
        %v611 = vld [vmem:[%s3 + $0x4] sm:$0xf]
        %v612 = vld [vmem:[%s3 + $0x8] sm:$0xf]
        %v613 = vld [vmem:[%s3 + $0xc] sm:$0xf]
        %v614 = vlaneseq
        %v615 = vshrl.u32 %v614, 7
        %v616 = vsub.s32 1, %v615
        %v617 = vrot.slane %v427, %v616
        %v622 = vunpack.c.l.b16 %v610
        %v623 = vunpack.c.l.b16 %v611
        %v624 = vunpack.c.l.b16 %v612
        %v625 = vunpack.c.l.b16 %v613
        %v626 = vpack.c.b16 %v623, %v622
        %v627 = vpack.c.b16 %v625, %v624
        %vm630 = vcmask 261120
        %v632 = vsel %vm630, %v609, 0
        %634 = vmatprep.subr.bf16.mxu0 0
        %635 = vmatpush1.bf16.msra.mxu0 0
        %636 = vmatprep.subr.bf16.mxu0 0
        %637 = vmatpush1.bf16.msra.mxu0 0
        %638 = vmatprep.subr.bf16.mxu0 0
        %639 = vmatpush1.bf16.msra.mxu0 0
        %640 = vmatprep.subr.bf16.mxu0 0
        %641 = vmatpush1.bf16.msra.mxu0 0
        %642 = vmatprep.subr.bf16.mxu0 0
        %643 = vmatpush1.bf16.msra.mxu0 0
        %644 = vmatprep.subr.bf16.mxu0 0
        %645 = vmatpush1.bf16.msra.mxu0 0
        %646 = vmatprep.subr.bf16.mxu0 0
        %647 = vmatpush1.bf16.msra.mxu0 %v627
        %648 = vmatprep.subr.bf16.mxu0 0
        %649 = vmatpush1.bf16.msra.mxu0 %v626
        %650 = vmatprep.subr.bf16.mxu0 0
        %651 = vmatpush2.bf16.msra.mxu0 0
        %652 = vmatprep.subr.bf16.mxu0 0
        %653 = vmatpush2.bf16.msra.mxu0 0
        %654 = vmatprep.subr.bf16.mxu0 0
        %655 = vmatpush2.bf16.msra.mxu0 0
        %656 = vmatprep.subr.bf16.mxu0 0
        %657 = vmatpush2.bf16.msra.mxu0 0
        %658 = vmatprep.subr.bf16.mxu0 0
        %659 = vmatpush2.bf16.msra.mxu0 0
        %660 = vmatprep.subr.bf16.mxu0 0
        %661 = vmatpush2.bf16.msra.mxu0 0
        %662 = vmatprep.subr.bf16.mxu0 0
        %663 = vmatpush2.bf16.msra.mxu0 0
        %664 = vmatprep.subr.bf16.mxu0 0
        %665 = vmatpush2.bf16.msra.mxu0 0
        %666 = vmatprep.mubr.bf16.mxu0 0
        %667 = vmatmul.mubr.bf16.gmra.mxu0 %v632
        %v668 = vpop.f32.mrf.mxu0
        %v669 = vadd.f32 %v617, %v668
        %v670 = vpop.f32.mrf.mxu0
        %v671 = vpop.f32.mrf.mxu0
        %v672 = vpop.f32.mrf.mxu0
        %673 = vdwg.mxu0
        %v674 = vld [vmem:[%s4] sm:$0xf]
        %v675 = vld [vmem:[%s4 + $0x4] sm:$0xf]
        %v676 = vld [vmem:[%s4 + $0x8] sm:$0xf]
        %v677 = vld [vmem:[%s4 + $0xc] sm:$0xf]
        %v678 = vlaneseq
        %v679 = vshrl.u32 %v678, 7
        %v680 = vsub.s32 2, %v679
        %v681 = vrot.slane %v427, %v680
        %v686 = vunpack.c.l.b16 %v674
        %v687 = vunpack.c.l.b16 %v675
        %v688 = vunpack.c.l.b16 %v676
        %v689 = vunpack.c.l.b16 %v677
        %v690 = vpack.c.b16 %v687, %v686
        %v691 = vpack.c.b16 %v689, %v688
        %694 = vmatprep.subr.bf16.mxu0 0
        %695 = vmatpush1.bf16.msra.mxu0 0
        %696 = vmatprep.subr.bf16.mxu0 0
        %697 = vmatpush1.bf16.msra.mxu0 0
        %698 = vmatprep.subr.bf16.mxu0 0
        %699 = vmatpush1.bf16.msra.mxu0 0
        %700 = vmatprep.subr.bf16.mxu0 0
        %701 = vmatpush1.bf16.msra.mxu0 0
        %702 = vmatprep.subr.bf16.mxu0 0
        %703 = vmatpush1.bf16.msra.mxu0 0
        %704 = vmatprep.subr.bf16.mxu0 0
        %705 = vmatpush1.bf16.msra.mxu0 0
        %706 = vmatprep.subr.bf16.mxu0 0
        %707 = vmatpush1.bf16.msra.mxu0 %v691
        %708 = vmatprep.subr.bf16.mxu0 0
        %709 = vmatpush1.bf16.msra.mxu0 %v690
        %710 = vmatprep.subr.bf16.mxu0 0
        %711 = vmatpush2.bf16.msra.mxu0 0
        %712 = vmatprep.subr.bf16.mxu0 0
        %713 = vmatpush2.bf16.msra.mxu0 0
        %714 = vmatprep.subr.bf16.mxu0 0
        %715 = vmatpush2.bf16.msra.mxu0 0
        %716 = vmatprep.subr.bf16.mxu0 0
        %717 = vmatpush2.bf16.msra.mxu0 0
        %718 = vmatprep.subr.bf16.mxu0 0
        %719 = vmatpush2.bf16.msra.mxu0 0
        %720 = vmatprep.subr.bf16.mxu0 0
        %721 = vmatpush2.bf16.msra.mxu0 0
        %722 = vmatprep.subr.bf16.mxu0 0
        %723 = vmatpush2.bf16.msra.mxu0 0
        %724 = vmatprep.subr.bf16.mxu0 0
        %725 = vmatpush2.bf16.msra.mxu0 0
        %726 = vmatprep.mubr.bf16.mxu0 0
        %727 = vmatmul.mubr.bf16.gmra.mxu0 %v632
        %v728 = vpop.f32.mrf.mxu0
        %v729 = vadd.f32 %v681, %v728
        %v730 = vpop.f32.mrf.mxu0
        %v731 = vpop.f32.mrf.mxu0
        %v732 = vpop.f32.mrf.mxu0
        %733 = vdwg.mxu0
        %735 = vrot.lane.b32.xlu0 %v669, 120
        %v736 = vpop.permute.xlu0 %735
        %738 = vrot.lane.b32.xlu0 %v669, 112
        %v739 = vpop.permute.xlu0 %738
        %741 = vrot.lane.b32.xlu0 %v669, 104
        %v742 = vpop.permute.xlu0 %741
        %v744 = vcombine.low %v669, %v739
        %v745 = vcombine.high %v669, %v739
        %v747 = vunpack.c.l.s4 1983009808
        %v748 = vunpack.c.0.s8 %v747
        %v749 = vlaneseq
        %v750 = vshrl.u32 %v749, 7
        %v751 = vsub.s32 %v748, %v750
        %v752 = vrot.slane %v744, %v751
        %v754 = vunpack.c.l.s4 1983009808
        %v755 = vunpack.c.0.s8 %v754
        %v756 = vlaneseq
        %v757 = vshrl.u32 %v756, 7
        %v758 = vsub.s32 %v755, %v757
        %v759 = vrot.slane %v745, %v758
        %v760 = vcombine.low %v736, %v742
        %v761 = vcombine.high %v736, %v742
        %v763 = vunpack.c.l.s4 1983009808
        %v764 = vunpack.c.0.s8 %v763
        %v765 = vlaneseq
        %v766 = vshrl.u32 %v765, 7
        %v767 = vsub.s32 %v764, %v766
        %v768 = vrot.slane %v760, %v767
        %v770 = vunpack.c.l.s4 1983009808
        %v771 = vunpack.c.0.s8 %v770
        %v772 = vlaneseq
        %v773 = vshrl.u32 %v772, 7
        %v774 = vsub.s32 %v771, %v773
        %v775 = vrot.slane %v761, %v774
        %v776 = vcombine.low %v752, %v768
        %v777 = vcombine.high %v752, %v768
        %v779 = vunpack.c.l.s4 1934713408
        %v780 = vunpack.c.0.s8 %v779
        %v781 = vlaneseq
        %v782 = vshrl.u32 %v781, 7
        %v783 = vsub.s32 %v780, %v782
        %v784 = vrot.slane %v776, %v783
        %v786 = vunpack.c.l.s4 1934713408
        %v787 = vunpack.c.0.s8 %v786
        %v788 = vlaneseq
        %v789 = vshrl.u32 %v788, 7
        %v790 = vsub.s32 %v787, %v789
        %v791 = vrot.slane %v777, %v790
        %v792 = vcombine.low %v759, %v775
        %v793 = vcombine.high %v759, %v775
        %v795 = vunpack.c.l.s4 1934713408
        %v796 = vunpack.c.0.s8 %v795
        %v797 = vlaneseq
        %v798 = vshrl.u32 %v797, 7
        %v799 = vsub.s32 %v796, %v798
        %v800 = vrot.slane %v792, %v799
        %v802 = vunpack.c.l.s4 1934713408
        %v803 = vunpack.c.0.s8 %v802
        %v804 = vlaneseq
        %v805 = vshrl.u32 %v804, 7
        %v806 = vsub.s32 %v803, %v805
        %v807 = vrot.slane %v793, %v806
        %v808 = vcombine.high %v784, 0.0
        %v809 = vcombine.high %v791, 0.0
        %v810 = vcombine.high %v800, 0.0
        %v811 = vcombine.high %v807, 0.0
        %v812 = vpack.c.bf16 %v784, %v784
        %v813 = vpack.c.bf16 %v808, %v808
        %v814 = vpack.c.bf16 %v791, %v791
        %v815 = vpack.c.bf16 %v809, %v809
        %v816 = vpack.c.bf16 %v800, %v800
        %v817 = vpack.c.bf16 %v810, %v810
        %v818 = vpack.c.bf16 %v807, %v807
        %v819 = vpack.c.bf16 %v811, %v811
        %821 = vrot.lane.b32.xlu0 %v729, 120
        %v822 = vpop.permute.xlu0 %821
        %824 = vrot.lane.b32.xlu0 %v729, 112
        %v825 = vpop.permute.xlu0 %824
        %827 = vrot.lane.b32.xlu0 %v729, 104
        %v828 = vpop.permute.xlu0 %827
        %v830 = vcombine.low %v729, %v825
        %v831 = vcombine.high %v729, %v825
        %v833 = vunpack.c.l.s4 1983009808
        %v834 = vunpack.c.0.s8 %v833
        %v835 = vlaneseq
        %v836 = vshrl.u32 %v835, 7
        %v837 = vsub.s32 %v834, %v836
        %v838 = vrot.slane %v830, %v837
        %v840 = vunpack.c.l.s4 1983009808
        %v841 = vunpack.c.0.s8 %v840
        %v842 = vlaneseq
        %v843 = vshrl.u32 %v842, 7
        %v844 = vsub.s32 %v841, %v843
        %v845 = vrot.slane %v831, %v844
        %v846 = vcombine.low %v822, %v828
        %v847 = vcombine.high %v822, %v828
        %v849 = vunpack.c.l.s4 1983009808
        %v850 = vunpack.c.0.s8 %v849
        %v851 = vlaneseq
        %v852 = vshrl.u32 %v851, 7
        %v853 = vsub.s32 %v850, %v852
        %v854 = vrot.slane %v846, %v853
        %v856 = vunpack.c.l.s4 1983009808
        %v857 = vunpack.c.0.s8 %v856
        %v858 = vlaneseq
        %v859 = vshrl.u32 %v858, 7
        %v860 = vsub.s32 %v857, %v859
        %v861 = vrot.slane %v847, %v860
        %v862 = vcombine.low %v838, %v854
        %v863 = vcombine.high %v838, %v854
        %v865 = vunpack.c.l.s4 1934713408
        %v866 = vunpack.c.0.s8 %v865
        %v867 = vlaneseq
        %v868 = vshrl.u32 %v867, 7
        %v869 = vsub.s32 %v866, %v868
        %v870 = vrot.slane %v862, %v869
        %v872 = vunpack.c.l.s4 1934713408
        %v873 = vunpack.c.0.s8 %v872
        %v874 = vlaneseq
        %v875 = vshrl.u32 %v874, 7
        %v876 = vsub.s32 %v873, %v875
        %v877 = vrot.slane %v863, %v876
        %v878 = vcombine.low %v845, %v861
        %v879 = vcombine.high %v845, %v861
        %v881 = vunpack.c.l.s4 1934713408
        %v882 = vunpack.c.0.s8 %v881
        %v883 = vlaneseq
        %v884 = vshrl.u32 %v883, 7
        %v885 = vsub.s32 %v882, %v884
        %v886 = vrot.slane %v878, %v885
        %v888 = vunpack.c.l.s4 1934713408
        %v889 = vunpack.c.0.s8 %v888
        %v890 = vlaneseq
        %v891 = vshrl.u32 %v890, 7
        %v892 = vsub.s32 %v889, %v891
        %v893 = vrot.slane %v879, %v892
        %v894 = vcombine.high %v870, 0.0
        %v895 = vcombine.high %v877, 0.0
        %v896 = vcombine.high %v886, 0.0
        %v897 = vcombine.high %v893, 0.0
        %v898 = vpack.c.bf16 %v870, %v870
        %v899 = vpack.c.bf16 %v894, %v894
        %v900 = vpack.c.bf16 %v877, %v877
        %v901 = vpack.c.bf16 %v895, %v895
        %v902 = vpack.c.bf16 %v886, %v886
        %v903 = vpack.c.bf16 %v896, %v896
        %v904 = vpack.c.bf16 %v893, %v893
        %v905 = vpack.c.bf16 %v897, %v897
        %v906 = vld [vmem:[#allocation2] sm:$0x3]
        %v907 = vld [vmem:[#allocation2 + $0x2] sm:$0x3]
        %v908 = vld [vmem:[#allocation2 + $0x4] sm:$0x3]
        %v909 = vld [vmem:[#allocation2 + $0x6] sm:$0x3]
        %v910 = vld [vmem:[#allocation2 + $0x8] sm:$0x3]
        %v911 = vld [vmem:[#allocation2 + $0xa] sm:$0x3]
        %v912 = vld [vmem:[#allocation2 + $0xc] sm:$0x3]
        %v913 = vld [vmem:[#allocation2 + $0xe] sm:$0x3]
        %v914 = vcombine.low %v906, %v908
        %v916 = vunpack.c.l.s4 1934713408
        %v917 = vunpack.c.0.s8 %v916
        %v918 = vlaneseq
        %v919 = vshrl.u32 %v918, 7
        %v920 = vsub.s32 %v917, %v919
        %v921 = vrot.slane %v914, %v920
        %v922 = vcombine.high %v921, 0
        %v923 = vcombine.low %v907, %v909
        %v925 = vunpack.c.l.s4 1934713408
        %v926 = vunpack.c.0.s8 %v925
        %v927 = vlaneseq
        %v928 = vshrl.u32 %v927, 7
        %v929 = vsub.s32 %v926, %v928
        %v930 = vrot.slane %v923, %v929
        %v931 = vcombine.high %v930, 0
        %v932 = vcombine.low %v910, %v912
        %v934 = vunpack.c.l.s4 1934713408
        %v935 = vunpack.c.0.s8 %v934
        %v936 = vlaneseq
        %v937 = vshrl.u32 %v936, 7
        %v938 = vsub.s32 %v935, %v937
        %v939 = vrot.slane %v932, %v938
        %v940 = vcombine.high %v939, 0
        %v941 = vcombine.low %v911, %v913
        %v943 = vunpack.c.l.s4 1934713408
        %v944 = vunpack.c.0.s8 %v943
        %v945 = vlaneseq
        %v946 = vshrl.u32 %v945, 7
        %v947 = vsub.s32 %v944, %v946
        %v948 = vrot.slane %v941, %v947
        %v949 = vcombine.high %v948, 0
        %v952 = vpack.i.b16 %v930, %v921
        %v953 = vshrl.u32 %v921, 16
        %v954 = vshrl.u32 %v930, 16
        %v955 = vpack.i.b16 %v954, %v953
        %v958 = vpack.i.b16 %v931, %v922
        %v959 = vshrl.u32 %v922, 16
        %v960 = vshrl.u32 %v931, 16
        %v961 = vpack.i.b16 %v960, %v959
        %v964 = vpack.i.b16 %v948, %v939
        %v965 = vshrl.u32 %v939, 16
        %v966 = vshrl.u32 %v948, 16
        %v967 = vpack.i.b16 %v966, %v965
        %v970 = vpack.i.b16 %v949, %v940
        %v971 = vshrl.u32 %v940, 16
        %v972 = vshrl.u32 %v949, 16
        %v973 = vpack.i.b16 %v972, %v971
        %974 = vxpose.xlu0.c.b16.start [1/8] %v812, 128
        %975 = vxpose.xlu0.c.b16.cont [2/8] 0, 128
        %976 = vxpose.xlu0.c.b16.cont [3/8] 0, 128
        %977 = vxpose.xlu0.c.b16.cont [4/8] 0, 128
        %978 = vxpose.xlu0.c.b16.cont [5/8] 0, 128
        %979 = vxpose.xlu0.c.b16.cont [6/8] 0, 128
        %980 = vxpose.xlu0.c.b16.cont [7/8] 0, 128
        %981 = vxpose.xlu0.c.b16.end [8/8] 0, 128
        %v982 = vpop.trf.xlu0
        %v983 = vpop.trf.xlu0
        %v984 = vpop.trf.xlu0
        %v985 = vpop.trf.xlu0
        %v986 = vpop.trf.xlu0
        %v987 = vpop.trf.xlu0
        %v988 = vpop.trf.xlu0
        %v989 = vpop.trf.xlu0
        %990 = vxpose.xlu0.c.b16.start [1/8] %v813, 128
        %991 = vxpose.xlu0.c.b16.cont [2/8] 0, 128
        %992 = vxpose.xlu0.c.b16.cont [3/8] 0, 128
        %993 = vxpose.xlu0.c.b16.cont [4/8] 0, 128
        %994 = vxpose.xlu0.c.b16.cont [5/8] 0, 128
        %995 = vxpose.xlu0.c.b16.cont [6/8] 0, 128
        %996 = vxpose.xlu0.c.b16.cont [7/8] 0, 128
        %997 = vxpose.xlu0.c.b16.end [8/8] 0, 128
        %v998 = vpop.trf.xlu0
        %v999 = vpop.trf.xlu0
        %v1000 = vpop.trf.xlu0
        %v1001 = vpop.trf.xlu0
        %v1002 = vpop.trf.xlu0
        %v1003 = vpop.trf.xlu0
        %v1004 = vpop.trf.xlu0
        %v1005 = vpop.trf.xlu0
        %1006 = vxpose.xlu0.c.b16.start [1/8] %v814, 128
        %1007 = vxpose.xlu0.c.b16.cont [2/8] 0, 128
        %1008 = vxpose.xlu0.c.b16.cont [3/8] 0, 128
        %1009 = vxpose.xlu0.c.b16.cont [4/8] 0, 128
        %1010 = vxpose.xlu0.c.b16.cont [5/8] 0, 128
        %1011 = vxpose.xlu0.c.b16.cont [6/8] 0, 128
        %1012 = vxpose.xlu0.c.b16.cont [7/8] 0, 128
        %1013 = vxpose.xlu0.c.b16.end [8/8] 0, 128
        %v1014 = vpop.trf.xlu0
        %v1015 = vpop.trf.xlu0
        %v1016 = vpop.trf.xlu0
        %v1017 = vpop.trf.xlu0
        %v1018 = vpop.trf.xlu0
        %v1019 = vpop.trf.xlu0
        %v1020 = vpop.trf.xlu0
        %v1021 = vpop.trf.xlu0
        %1022 = vxpose.xlu0.c.b16.start [1/8] %v815, 128
        %1023 = vxpose.xlu0.c.b16.cont [2/8] 0, 128
        %1024 = vxpose.xlu0.c.b16.cont [3/8] 0, 128
        %1025 = vxpose.xlu0.c.b16.cont [4/8] 0, 128
        %1026 = vxpose.xlu0.c.b16.cont [5/8] 0, 128
        %1027 = vxpose.xlu0.c.b16.cont [6/8] 0, 128
        %1028 = vxpose.xlu0.c.b16.cont [7/8] 0, 128
        %1029 = vxpose.xlu0.c.b16.end [8/8] 0, 128
        %v1030 = vpop.trf.xlu0
        %v1031 = vpop.trf.xlu0
        %v1032 = vpop.trf.xlu0
        %v1033 = vpop.trf.xlu0
        %v1034 = vpop.trf.xlu0
        %v1035 = vpop.trf.xlu0
        %v1036 = vpop.trf.xlu0
        %v1037 = vpop.trf.xlu0
        %1038 = vxpose.xlu0.c.b16.start [1/8] %v816, 128
        %1039 = vxpose.xlu0.c.b16.cont [2/8] 0, 128
        %1040 = vxpose.xlu0.c.b16.cont [3/8] 0, 128
        %1041 = vxpose.xlu0.c.b16.cont [4/8] 0, 128
        %1042 = vxpose.xlu0.c.b16.cont [5/8] 0, 128
        %1043 = vxpose.xlu0.c.b16.cont [6/8] 0, 128
        %1044 = vxpose.xlu0.c.b16.cont [7/8] 0, 128
        %1045 = vxpose.xlu0.c.b16.end [8/8] 0, 128
        %v1046 = vpop.trf.xlu0
        %v1047 = vpop.trf.xlu0
        %v1048 = vpop.trf.xlu0
        %v1049 = vpop.trf.xlu0
        %v1050 = vpop.trf.xlu0
        %v1051 = vpop.trf.xlu0
        %v1052 = vpop.trf.xlu0
        %v1053 = vpop.trf.xlu0
        %1054 = vxpose.xlu0.c.b16.start [1/8] %v817, 128
        %1055 = vxpose.xlu0.c.b16.cont [2/8] 0, 128
        %1056 = vxpose.xlu0.c.b16.cont [3/8] 0, 128
        %1057 = vxpose.xlu0.c.b16.cont [4/8] 0, 128
        %1058 = vxpose.xlu0.c.b16.cont [5/8] 0, 128
        %1059 = vxpose.xlu0.c.b16.cont [6/8] 0, 128
        %1060 = vxpose.xlu0.c.b16.cont [7/8] 0, 128
        %1061 = vxpose.xlu0.c.b16.end [8/8] 0, 128
        %v1062 = vpop.trf.xlu0
        %v1063 = vpop.trf.xlu0
        %v1064 = vpop.trf.xlu0
        %v1065 = vpop.trf.xlu0
        %v1066 = vpop.trf.xlu0
        %v1067 = vpop.trf.xlu0
        %v1068 = vpop.trf.xlu0
        %v1069 = vpop.trf.xlu0
        %1070 = vxpose.xlu0.c.b16.start [1/8] %v818, 128
        %1071 = vxpose.xlu0.c.b16.cont [2/8] 0, 128
        %1072 = vxpose.xlu0.c.b16.cont [3/8] 0, 128
        %1073 = vxpose.xlu0.c.b16.cont [4/8] 0, 128
        %1074 = vxpose.xlu0.c.b16.cont [5/8] 0, 128
        %1075 = vxpose.xlu0.c.b16.cont [6/8] 0, 128
        %1076 = vxpose.xlu0.c.b16.cont [7/8] 0, 128
        %1077 = vxpose.xlu0.c.b16.end [8/8] 0, 128
        %v1078 = vpop.trf.xlu0
        %v1079 = vpop.trf.xlu0
        %v1080 = vpop.trf.xlu0
        %v1081 = vpop.trf.xlu0
        %v1082 = vpop.trf.xlu0
        %v1083 = vpop.trf.xlu0
        %v1084 = vpop.trf.xlu0
        %v1085 = vpop.trf.xlu0
        %1086 = vxpose.xlu0.c.b16.start [1/8] %v819, 128
        %1087 = vxpose.xlu0.c.b16.cont [2/8] 0, 128
        %1088 = vxpose.xlu0.c.b16.cont [3/8] 0, 128
        %1089 = vxpose.xlu0.c.b16.cont [4/8] 0, 128
        %1090 = vxpose.xlu0.c.b16.cont [5/8] 0, 128
        %1091 = vxpose.xlu0.c.b16.cont [6/8] 0, 128
        %1092 = vxpose.xlu0.c.b16.cont [7/8] 0, 128
        %1093 = vxpose.xlu0.c.b16.end [8/8] 0, 128
        %v1094 = vpop.trf.xlu0
        %v1095 = vpop.trf.xlu0
        %v1096 = vpop.trf.xlu0
        %v1097 = vpop.trf.xlu0
        %v1098 = vpop.trf.xlu0
        %v1099 = vpop.trf.xlu0
        %v1100 = vpop.trf.xlu0
        %v1101 = vpop.trf.xlu0
        %v1102 = vcombine.low %v982, %v1046
        %v1104 = vunpack.c.l.s4 1983009808
        %v1105 = vunpack.c.0.s8 %v1104
        %v1106 = vlaneseq
        %v1107 = vshrl.u32 %v1106, 7
        %v1108 = vsub.s32 %v1105, %v1107
        %v1109 = vrot.slane %v1102, %v1108
        %v1110 = vcombine.low %v1014, %v1078
        %v1112 = vunpack.c.l.s4 1983009808
        %v1113 = vunpack.c.0.s8 %v1112
        %v1114 = vlaneseq
        %v1115 = vshrl.u32 %v1114, 7
        %v1116 = vsub.s32 %v1113, %v1115
        %v1117 = vrot.slane %v1110, %v1116
        %v1118 = vcombine.low %v1109, %v1117
        %v1119 = vcombine.high %v1109, %v1117
        %v1121 = vunpack.c.l.s4 1934713408
        %v1122 = vunpack.c.0.s8 %v1121
        %v1123 = vlaneseq
        %v1124 = vshrl.u32 %v1123, 7
        %v1125 = vsub.s32 %v1122, %v1124
        %v1126 = vrot.slane %v1118, %v1125
        %v1128 = vunpack.c.l.s4 1934713408
        %v1129 = vunpack.c.0.s8 %v1128
        %v1130 = vlaneseq
        %v1131 = vshrl.u32 %v1130, 7
        %v1132 = vsub.s32 %v1129, %v1131
        %v1133 = vrot.slane %v1119, %v1132
        %v1134 = vcombine.high %v1126, 0
        %v1135 = vcombine.high %v1133, 0
        %v1136 = vcombine.low %v998, %v1062
        %v1138 = vunpack.c.l.s4 1983009808
        %v1139 = vunpack.c.0.s8 %v1138
        %v1140 = vlaneseq
        %v1141 = vshrl.u32 %v1140, 7
        %v1142 = vsub.s32 %v1139, %v1141
        %v1143 = vrot.slane %v1136, %v1142
        %v1144 = vcombine.low %v1030, %v1094
        %v1146 = vunpack.c.l.s4 1983009808
        %v1147 = vunpack.c.0.s8 %v1146
        %v1148 = vlaneseq
        %v1149 = vshrl.u32 %v1148, 7
        %v1150 = vsub.s32 %v1147, %v1149
        %v1151 = vrot.slane %v1144, %v1150
        %v1152 = vcombine.low %v1143, %v1151
        %v1153 = vcombine.high %v1143, %v1151
        %v1155 = vunpack.c.l.s4 1934713408
        %v1156 = vunpack.c.0.s8 %v1155
        %v1157 = vlaneseq
        %v1158 = vshrl.u32 %v1157, 7
        %v1159 = vsub.s32 %v1156, %v1158
        %v1160 = vrot.slane %v1152, %v1159
        %v1162 = vunpack.c.l.s4 1934713408
        %v1163 = vunpack.c.0.s8 %v1162
        %v1164 = vlaneseq
        %v1165 = vshrl.u32 %v1164, 7
        %v1166 = vsub.s32 %v1163, %v1165
        %v1167 = vrot.slane %v1153, %v1166
        %v1168 = vcombine.high %v1160, 0
        %v1169 = vcombine.high %v1167, 0
        %v1172 = vpack.i.b16 %v1160, %v1126
        %v1174 = vshrl.u32 %v1126, 16
        %v1175 = vshrl.u32 %v1160, 16
        %v1176 = vpack.i.b16 %v1175, %v1174
        %v1180 = vpack.i.b16 %v1168, %v1134
        %v1182 = vshrl.u32 %v1134, 16
        %v1183 = vshrl.u32 %v1168, 16
        %v1184 = vpack.i.b16 %v1183, %v1182
        %v1188 = vpack.i.b16 %v1167, %v1133
        %v1190 = vshrl.u32 %v1133, 16
        %v1191 = vshrl.u32 %v1167, 16
        %v1192 = vpack.i.b16 %v1191, %v1190
        %v1196 = vpack.i.b16 %v1169, %v1135
        %v1198 = vshrl.u32 %v1135, 16
        %v1199 = vshrl.u32 %v1169, 16
        %v1200 = vpack.i.b16 %v1199, %v1198
        %1202 = vxpose.xlu0.c.b16.start [1/8] %v1172, 128
        %1203 = vxpose.xlu0.c.b16.cont [2/8] 0, 128
        %1204 = vxpose.xlu0.c.b16.cont [3/8] 0, 128
        %1205 = vxpose.xlu0.c.b16.cont [4/8] 0, 128
        %1206 = vxpose.xlu0.c.b16.cont [5/8] 0, 128
        %1207 = vxpose.xlu0.c.b16.cont [6/8] 0, 128
        %1208 = vxpose.xlu0.c.b16.cont [7/8] 0, 128
        %1209 = vxpose.xlu0.c.b16.end [8/8] 0, 128
        %v1210 = vpop.trf.xlu0
        %v1211 = vpop.trf.xlu0
        %v1212 = vpop.trf.xlu0
        %v1213 = vpop.trf.xlu0
        %v1214 = vpop.trf.xlu0
        %v1215 = vpop.trf.xlu0
        %v1216 = vpop.trf.xlu0
        %v1217 = vpop.trf.xlu0
        %1218 = vxpose.xlu0.c.b16.start [1/8] %v1176, 128
        %1219 = vxpose.xlu0.c.b16.cont [2/8] 0, 128
        %1220 = vxpose.xlu0.c.b16.cont [3/8] 0, 128
        %1221 = vxpose.xlu0.c.b16.cont [4/8] 0, 128
        %1222 = vxpose.xlu0.c.b16.cont [5/8] 0, 128
        %1223 = vxpose.xlu0.c.b16.cont [6/8] 0, 128
        %1224 = vxpose.xlu0.c.b16.cont [7/8] 0, 128
        %1225 = vxpose.xlu0.c.b16.end [8/8] 0, 128
        %v1226 = vpop.trf.xlu0
        %v1227 = vpop.trf.xlu0
        %v1228 = vpop.trf.xlu0
        %v1229 = vpop.trf.xlu0
        %v1230 = vpop.trf.xlu0
        %v1231 = vpop.trf.xlu0
        %v1232 = vpop.trf.xlu0
        %v1233 = vpop.trf.xlu0
        %1234 = vxpose.xlu0.c.b16.start [1/8] %v1180, 128
        %1235 = vxpose.xlu0.c.b16.cont [2/8] 0, 128
        %1236 = vxpose.xlu0.c.b16.cont [3/8] 0, 128
        %1237 = vxpose.xlu0.c.b16.cont [4/8] 0, 128
        %1238 = vxpose.xlu0.c.b16.cont [5/8] 0, 128
        %1239 = vxpose.xlu0.c.b16.cont [6/8] 0, 128
        %1240 = vxpose.xlu0.c.b16.cont [7/8] 0, 128
        %1241 = vxpose.xlu0.c.b16.end [8/8] 0, 128
        %v1242 = vpop.trf.xlu0
        %v1243 = vpop.trf.xlu0
        %v1244 = vpop.trf.xlu0
        %v1245 = vpop.trf.xlu0
        %v1246 = vpop.trf.xlu0
        %v1247 = vpop.trf.xlu0
        %v1248 = vpop.trf.xlu0
        %v1249 = vpop.trf.xlu0
        %1250 = vxpose.xlu0.c.b16.start [1/8] %v1184, 128
        %1251 = vxpose.xlu0.c.b16.cont [2/8] 0, 128
        %1252 = vxpose.xlu0.c.b16.cont [3/8] 0, 128
        %1253 = vxpose.xlu0.c.b16.cont [4/8] 0, 128
        %1254 = vxpose.xlu0.c.b16.cont [5/8] 0, 128
        %1255 = vxpose.xlu0.c.b16.cont [6/8] 0, 128
        %1256 = vxpose.xlu0.c.b16.cont [7/8] 0, 128
        %1257 = vxpose.xlu0.c.b16.end [8/8] 0, 128
        %v1258 = vpop.trf.xlu0
        %v1259 = vpop.trf.xlu0
        %v1260 = vpop.trf.xlu0
        %v1261 = vpop.trf.xlu0
        %v1262 = vpop.trf.xlu0
        %v1263 = vpop.trf.xlu0
        %v1264 = vpop.trf.xlu0
        %v1265 = vpop.trf.xlu0
        %1266 = vxpose.xlu0.c.b16.start [1/8] %v1188, 128
        %1267 = vxpose.xlu0.c.b16.cont [2/8] 0, 128
        %1268 = vxpose.xlu0.c.b16.cont [3/8] 0, 128
        %1269 = vxpose.xlu0.c.b16.cont [4/8] 0, 128
        %1270 = vxpose.xlu0.c.b16.cont [5/8] 0, 128
        %1271 = vxpose.xlu0.c.b16.cont [6/8] 0, 128
        %1272 = vxpose.xlu0.c.b16.cont [7/8] 0, 128
        %1273 = vxpose.xlu0.c.b16.end [8/8] 0, 128
        %v1274 = vpop.trf.xlu0
        %v1275 = vpop.trf.xlu0
        %v1276 = vpop.trf.xlu0
        %v1277 = vpop.trf.xlu0
        %v1278 = vpop.trf.xlu0
        %v1279 = vpop.trf.xlu0
        %v1280 = vpop.trf.xlu0
        %v1281 = vpop.trf.xlu0
        %1282 = vxpose.xlu0.c.b16.start [1/8] %v1192, 128
        %1283 = vxpose.xlu0.c.b16.cont [2/8] 0, 128
        %1284 = vxpose.xlu0.c.b16.cont [3/8] 0, 128
        %1285 = vxpose.xlu0.c.b16.cont [4/8] 0, 128
        %1286 = vxpose.xlu0.c.b16.cont [5/8] 0, 128
        %1287 = vxpose.xlu0.c.b16.cont [6/8] 0, 128
        %1288 = vxpose.xlu0.c.b16.cont [7/8] 0, 128
        %1289 = vxpose.xlu0.c.b16.end [8/8] 0, 128
        %v1290 = vpop.trf.xlu0
        %v1291 = vpop.trf.xlu0
        %v1292 = vpop.trf.xlu0
        %v1293 = vpop.trf.xlu0
        %v1294 = vpop.trf.xlu0
        %v1295 = vpop.trf.xlu0
        %v1296 = vpop.trf.xlu0
        %v1297 = vpop.trf.xlu0
        %1298 = vxpose.xlu0.c.b16.start [1/8] %v1196, 128
        %1299 = vxpose.xlu0.c.b16.cont [2/8] 0, 128
        %1300 = vxpose.xlu0.c.b16.cont [3/8] 0, 128
        %1301 = vxpose.xlu0.c.b16.cont [4/8] 0, 128
        %1302 = vxpose.xlu0.c.b16.cont [5/8] 0, 128
        %1303 = vxpose.xlu0.c.b16.cont [6/8] 0, 128
        %1304 = vxpose.xlu0.c.b16.cont [7/8] 0, 128
        %1305 = vxpose.xlu0.c.b16.end [8/8] 0, 128
        %v1306 = vpop.trf.xlu0
        %v1307 = vpop.trf.xlu0
        %v1308 = vpop.trf.xlu0
        %v1309 = vpop.trf.xlu0
        %v1310 = vpop.trf.xlu0
        %v1311 = vpop.trf.xlu0
        %v1312 = vpop.trf.xlu0
        %v1313 = vpop.trf.xlu0
        %1314 = vxpose.xlu0.c.b16.start [1/8] %v1200, 128
        %1315 = vxpose.xlu0.c.b16.cont [2/8] 0, 128
        %1316 = vxpose.xlu0.c.b16.cont [3/8] 0, 128
        %1317 = vxpose.xlu0.c.b16.cont [4/8] 0, 128
        %1318 = vxpose.xlu0.c.b16.cont [5/8] 0, 128
        %1319 = vxpose.xlu0.c.b16.cont [6/8] 0, 128
        %1320 = vxpose.xlu0.c.b16.cont [7/8] 0, 128
        %1321 = vxpose.xlu0.c.b16.end [8/8] 0, 128
        %v1322 = vpop.trf.xlu0
        %v1323 = vpop.trf.xlu0
        %v1324 = vpop.trf.xlu0
        %v1325 = vpop.trf.xlu0
        %v1326 = vpop.trf.xlu0
        %v1327 = vpop.trf.xlu0
        %v1328 = vpop.trf.xlu0
        %v1329 = vpop.trf.xlu0
        %v1330 = vcombine.low %v1210, %v1274
        %v1332 = vunpack.c.l.s4 1983009808
        %v1333 = vunpack.c.0.s8 %v1332
        %v1334 = vlaneseq
        %v1335 = vshrl.u32 %v1334, 7
        %v1336 = vsub.s32 %v1333, %v1335
        %v1337 = vrot.slane %v1330, %v1336
        %v1338 = vcombine.low %v1242, %v1306
        %v1340 = vunpack.c.l.s4 1983009808
        %v1341 = vunpack.c.0.s8 %v1340
        %v1342 = vlaneseq
        %v1343 = vshrl.u32 %v1342, 7
        %v1344 = vsub.s32 %v1341, %v1343
        %v1345 = vrot.slane %v1338, %v1344
        %v1346 = vcombine.low %v1337, %v1345
        %v1348 = vunpack.c.l.s4 1934713408
        %v1349 = vunpack.c.0.s8 %v1348
        %v1350 = vlaneseq
        %v1351 = vshrl.u32 %v1350, 7
        %v1352 = vsub.s32 %v1349, %v1351
        %v1353 = vrot.slane %v1346, %v1352
        %v1354 = vcombine.high %v1353, 0
        %v1355 = vcombine.low %v1226, %v1290
        %v1357 = vunpack.c.l.s4 1983009808
        %v1358 = vunpack.c.0.s8 %v1357
        %v1359 = vlaneseq
        %v1360 = vshrl.u32 %v1359, 7
        %v1361 = vsub.s32 %v1358, %v1360
        %v1362 = vrot.slane %v1355, %v1361
        %v1363 = vcombine.low %v1258, %v1322
        %v1365 = vunpack.c.l.s4 1983009808
        %v1366 = vunpack.c.0.s8 %v1365
        %v1367 = vlaneseq
        %v1368 = vshrl.u32 %v1367, 7
        %v1369 = vsub.s32 %v1366, %v1368
        %v1370 = vrot.slane %v1363, %v1369
        %v1371 = vcombine.low %v1362, %v1370
        %v1373 = vunpack.c.l.s4 1934713408
        %v1374 = vunpack.c.0.s8 %v1373
        %v1375 = vlaneseq
        %v1376 = vshrl.u32 %v1375, 7
        %v1377 = vsub.s32 %v1374, %v1376
        %v1378 = vrot.slane %v1371, %v1377
        %v1379 = vcombine.high %v1378, 0
        %v1382 = vpack.i.b16 %v1378, %v1353
        %v1383 = vshrl.u32 %v1353, 16
        %v1384 = vshrl.u32 %v1378, 16
        %v1385 = vpack.i.b16 %v1384, %v1383
        %v1388 = vpack.i.b16 %v1379, %v1354
        %v1389 = vshrl.u32 %v1354, 16
        %v1390 = vshrl.u32 %v1379, 16
        %v1391 = vpack.i.b16 %v1390, %v1389
        %v1392 = vcombine.low %v952, %v964
        %v1394 = vunpack.c.l.s4 1983009808
        %v1395 = vunpack.c.0.s8 %v1394
        %v1396 = vlaneseq
        %v1397 = vshrl.u32 %v1396, 7
        %v1398 = vsub.s32 %v1395, %v1397
        %v1399 = vrot.slane %v1392, %v1398
        %vm1400 = vcmask 64512
        %v1402 = vsel %vm1400, %v1399, 0
        %vm1404 = vcmask 1043456
        %v1406 = vsel %vm1404, %v1382, 0
        %1408 = vmatprep.subr.bf16.mxu0 0
        %1409 = vmatpush1.bf16.msra.mxu0 0
        %1410 = vmatprep.subr.bf16.mxu0 0
        %1411 = vmatpush1.bf16.msra.mxu0 0
        %1412 = vmatprep.subr.bf16.mxu0 0
        %1413 = vmatpush1.bf16.msra.mxu0 0
        %1414 = vmatprep.subr.bf16.mxu0 0
        %1415 = vmatpush1.bf16.msra.mxu0 0
        %1416 = vmatprep.subr.bf16.mxu0 0
        %1417 = vmatpush1.bf16.msra.mxu0 0
        %1418 = vmatprep.subr.bf16.mxu0 0
        %1419 = vmatpush1.bf16.msra.mxu0 0
        %1420 = vmatprep.subr.bf16.mxu0 0
        %1421 = vmatpush1.bf16.msra.mxu0 0
        %1422 = vmatprep.subr.bf16.mxu0 0
        %1423 = vmatpush1.bf16.msra.mxu0 %v1406
        %1424 = vmatprep.subr.bf16.mxu0 0
        %1425 = vmatpush2.bf16.msra.mxu0 0
        %1426 = vmatprep.subr.bf16.mxu0 0
        %1427 = vmatpush2.bf16.msra.mxu0 0
        %1428 = vmatprep.subr.bf16.mxu0 0
        %1429 = vmatpush2.bf16.msra.mxu0 0
        %1430 = vmatprep.subr.bf16.mxu0 0
        %1431 = vmatpush2.bf16.msra.mxu0 0
        %1432 = vmatprep.subr.bf16.mxu0 0
        %1433 = vmatpush2.bf16.msra.mxu0 0
        %1434 = vmatprep.subr.bf16.mxu0 0
        %1435 = vmatpush2.bf16.msra.mxu0 0
        %1436 = vmatprep.subr.bf16.mxu0 0
        %1437 = vmatpush2.bf16.msra.mxu0 0
        %1438 = vmatprep.subr.bf16.mxu0 0
        %1439 = vmatpush2.bf16.msra.mxu0 0
        %1440 = vmatprep.mubr.bf16.mxu0 0
        %1441 = vmatmul.mubr.bf16.gmra.mxu0 %v1402
        %v1442 = vpop.f32.mrf.mxu0
        %v1443 = vadd.f32 0.0, %v1442
        %v1444 = vpop.f32.mrf.mxu0
        %v1445 = vpop.f32.mrf.mxu0
        %v1446 = vpop.f32.mrf.mxu0
        %1447 = vdwg.mxu0
        %v1448 = vcombine.low %v955, %v967
        %v1450 = vunpack.c.l.s4 1983009808
        %v1451 = vunpack.c.0.s8 %v1450
        %v1452 = vlaneseq
        %v1453 = vshrl.u32 %v1452, 7
        %v1454 = vsub.s32 %v1451, %v1453
        %v1455 = vrot.slane %v1448, %v1454
        %v1457 = vsel %vm1400, %v1455, 0
        %v1460 = vsel %vm1404, %v1385, 0
        %1462 = vmatprep.subr.bf16.mxu0 0
        %1463 = vmatpush1.bf16.msra.mxu0 0
        %1464 = vmatprep.subr.bf16.mxu0 0
        %1465 = vmatpush1.bf16.msra.mxu0 0
        %1466 = vmatprep.subr.bf16.mxu0 0
        %1467 = vmatpush1.bf16.msra.mxu0 0
        %1468 = vmatprep.subr.bf16.mxu0 0
        %1469 = vmatpush1.bf16.msra.mxu0 0
        %1470 = vmatprep.subr.bf16.mxu0 0
        %1471 = vmatpush1.bf16.msra.mxu0 0
        %1472 = vmatprep.subr.bf16.mxu0 0
        %1473 = vmatpush1.bf16.msra.mxu0 0
        %1474 = vmatprep.subr.bf16.mxu0 0
        %1475 = vmatpush1.bf16.msra.mxu0 0
        %1476 = vmatprep.subr.bf16.mxu0 0
        %1477 = vmatpush1.bf16.msra.mxu0 %v1460
        %1478 = vmatprep.subr.bf16.mxu0 0
        %1479 = vmatpush2.bf16.msra.mxu0 0
        %1480 = vmatprep.subr.bf16.mxu0 0
        %1481 = vmatpush2.bf16.msra.mxu0 0
        %1482 = vmatprep.subr.bf16.mxu0 0
        %1483 = vmatpush2.bf16.msra.mxu0 0
        %1484 = vmatprep.subr.bf16.mxu0 0
        %1485 = vmatpush2.bf16.msra.mxu0 0
        %1486 = vmatprep.subr.bf16.mxu0 0
        %1487 = vmatpush2.bf16.msra.mxu0 0
        %1488 = vmatprep.subr.bf16.mxu0 0
        %1489 = vmatpush2.bf16.msra.mxu0 0
        %1490 = vmatprep.subr.bf16.mxu0 0
        %1491 = vmatpush2.bf16.msra.mxu0 0
        %1492 = vmatprep.subr.bf16.mxu0 0
        %1493 = vmatpush2.bf16.msra.mxu0 0
        %1494 = vmatprep.mubr.bf16.mxu0 0
        %1495 = vmatmul.mubr.bf16.gmra.mxu0 %v1457
        %v1496 = vpop.f32.mrf.mxu0
        %v1497 = vadd.f32 0.0, %v1496
        %v1498 = vpop.f32.mrf.mxu0
        %v1499 = vpop.f32.mrf.mxu0
        %v1500 = vpop.f32.mrf.mxu0
        %1501 = vdwg.mxu0
        %v1502 = vcombine.low %v958, %v970
        %v1504 = vunpack.c.l.s4 1983009808
        %v1505 = vunpack.c.0.s8 %v1504
        %v1506 = vlaneseq
        %v1507 = vshrl.u32 %v1506, 7
        %v1508 = vsub.s32 %v1505, %v1507
        %v1509 = vrot.slane %v1502, %v1508
        %v1511 = vsel %vm1400, %v1509, 0
        %v1514 = vsel %vm1404, %v1388, 0
        %1516 = vmatprep.subr.bf16.mxu0 0
        %1517 = vmatpush1.bf16.msra.mxu0 0
        %1518 = vmatprep.subr.bf16.mxu0 0
        %1519 = vmatpush1.bf16.msra.mxu0 0
        %1520 = vmatprep.subr.bf16.mxu0 0
        %1521 = vmatpush1.bf16.msra.mxu0 0
        %1522 = vmatprep.subr.bf16.mxu0 0
        %1523 = vmatpush1.bf16.msra.mxu0 0
        %1524 = vmatprep.subr.bf16.mxu0 0
        %1525 = vmatpush1.bf16.msra.mxu0 0
        %1526 = vmatprep.subr.bf16.mxu0 0
        %1527 = vmatpush1.bf16.msra.mxu0 0
        %1528 = vmatprep.subr.bf16.mxu0 0
        %1529 = vmatpush1.bf16.msra.mxu0 0
        %1530 = vmatprep.subr.bf16.mxu0 0
        %1531 = vmatpush1.bf16.msra.mxu0 %v1514
        %1532 = vmatprep.subr.bf16.mxu0 0
        %1533 = vmatpush2.bf16.msra.mxu0 0
        %1534 = vmatprep.subr.bf16.mxu0 0
        %1535 = vmatpush2.bf16.msra.mxu0 0
        %1536 = vmatprep.subr.bf16.mxu0 0
        %1537 = vmatpush2.bf16.msra.mxu0 0
        %1538 = vmatprep.subr.bf16.mxu0 0
        %1539 = vmatpush2.bf16.msra.mxu0 0
        %1540 = vmatprep.subr.bf16.mxu0 0
        %1541 = vmatpush2.bf16.msra.mxu0 0
        %1542 = vmatprep.subr.bf16.mxu0 0
        %1543 = vmatpush2.bf16.msra.mxu0 0
        %1544 = vmatprep.subr.bf16.mxu0 0
        %1545 = vmatpush2.bf16.msra.mxu0 0
        %1546 = vmatprep.subr.bf16.mxu0 0
        %1547 = vmatpush2.bf16.msra.mxu0 0
        %1548 = vmatprep.mubr.bf16.mxu0 0
        %1549 = vmatmul.mubr.bf16.gmra.mxu0 %v1511
        %v1550 = vpop.f32.mrf.mxu0
        %v1551 = vadd.f32 0.0, %v1550
        %v1552 = vpop.f32.mrf.mxu0
        %v1553 = vpop.f32.mrf.mxu0
        %v1554 = vpop.f32.mrf.mxu0
        %1555 = vdwg.mxu0
        %v1556 = vcombine.low %v961, %v973
        %v1558 = vunpack.c.l.s4 1983009808
        %v1559 = vunpack.c.0.s8 %v1558
        %v1560 = vlaneseq
        %v1561 = vshrl.u32 %v1560, 7
        %v1562 = vsub.s32 %v1559, %v1561
        %v1563 = vrot.slane %v1556, %v1562
        %v1565 = vsel %vm1400, %v1563, 0
        %v1568 = vsel %vm1404, %v1391, 0
        %1570 = vmatprep.subr.bf16.mxu0 0
        %1571 = vmatpush1.bf16.msra.mxu0 0
        %1572 = vmatprep.subr.bf16.mxu0 0
        %1573 = vmatpush1.bf16.msra.mxu0 0
        %1574 = vmatprep.subr.bf16.mxu0 0
        %1575 = vmatpush1.bf16.msra.mxu0 0
        %1576 = vmatprep.subr.bf16.mxu0 0
        %1577 = vmatpush1.bf16.msra.mxu0 0
        %1578 = vmatprep.subr.bf16.mxu0 0
        %1579 = vmatpush1.bf16.msra.mxu0 0
        %1580 = vmatprep.subr.bf16.mxu0 0
        %1581 = vmatpush1.bf16.msra.mxu0 0
        %1582 = vmatprep.subr.bf16.mxu0 0
        %1583 = vmatpush1.bf16.msra.mxu0 0
        %1584 = vmatprep.subr.bf16.mxu0 0
        %1585 = vmatpush1.bf16.msra.mxu0 %v1568
        %1586 = vmatprep.subr.bf16.mxu0 0
        %1587 = vmatpush2.bf16.msra.mxu0 0
        %1588 = vmatprep.subr.bf16.mxu0 0
        %1589 = vmatpush2.bf16.msra.mxu0 0
        %1590 = vmatprep.subr.bf16.mxu0 0
        %1591 = vmatpush2.bf16.msra.mxu0 0
        %1592 = vmatprep.subr.bf16.mxu0 0
        %1593 = vmatpush2.bf16.msra.mxu0 0
        %1594 = vmatprep.subr.bf16.mxu0 0
        %1595 = vmatpush2.bf16.msra.mxu0 0
        %1596 = vmatprep.subr.bf16.mxu0 0
        %1597 = vmatpush2.bf16.msra.mxu0 0
        %1598 = vmatprep.subr.bf16.mxu0 0
        %1599 = vmatpush2.bf16.msra.mxu0 0
        %1600 = vmatprep.subr.bf16.mxu0 0
        %1601 = vmatpush2.bf16.msra.mxu0 0
        %1602 = vmatprep.mubr.bf16.mxu0 0
        %1603 = vmatmul.mubr.bf16.gmra.mxu0 %v1565
        %v1604 = vpop.f32.mrf.mxu0
        %v1605 = vadd.f32 0.0, %v1604
        %v1606 = vpop.f32.mrf.mxu0
        %v1607 = vpop.f32.mrf.mxu0
        %v1608 = vpop.f32.mrf.mxu0
        %1609 = vdwg.mxu0
        %v1610 = vld [vmem:[%s425] sm:$0x3]
        %v1611 = vunpack.c.0.s8 %v1610
        %vm1612 = vcmp.ne.s32.totalorder %v1611, 0
        %v1613 = vsel %vm1612, 1, 0
        %v1614 = vcvt.s32.f32 %v1613
        %v1615 = vmul.f32 %v1443, %v1614
        %v1616 = vmul.f32 %v1497, %v1614
        %v1617 = vmul.f32 %v1551, %v1614
        %v1618 = vmul.f32 %v1605, %v1614
        %v1619 = vsub.f32 %v1614, 1.0
        %v1620 = vmul.f32 %v1619, 1e+09
        %v1621 = vadd.f32 %v1615, %v1620
        %v1622 = vadd.f32 %v1616, %v1620
        %v1623 = vadd.f32 %v1617, %v1620
        %v1624 = vadd.f32 %v1618, %v1620
        %v1625 = vld [vmem:[#allocation3] sm:$0xff]
        %v1626 = vld [vmem:[#allocation3 + $0x8] sm:$0xff]
        %v1627 = vld [vmem:[#allocation3 + $0x10] sm:$0xff]
        %v1628 = vld [vmem:[#allocation3 + $0x18] sm:$0xff]
        %v1629 = vsel %vm1400, %v1621, -inf
        %1630 = vmax.xlane.f32.xlu0 %v1629
        %v1631 = vpop.xlane.xlu0 %1630
        %v1632 = vsel %vm1400, %v1622, -inf
        %1633 = vmax.xlane.f32.xlu0 %v1632
        %v1634 = vpop.xlane.xlu0 %1633
        %v1635 = vsel %vm1400, %v1623, -inf
        %1636 = vmax.xlane.f32.xlu0 %v1635
        %v1637 = vpop.xlane.xlu0 %1636
        %v1638 = vsel %vm1400, %v1624, -inf
        %1639 = vmax.xlane.f32.xlu0 %v1638
        %v1640 = vpop.xlane.xlu0 %1639
        %v1641 = vmax.f32 %v1625, %v1631
        %v1642 = vmax.f32 %v1626, %v1634
        %v1643 = vmax.f32 %v1627, %v1637
        %v1644 = vmax.f32 %v1628, %v1640
        %v1645 = vsub.f32 %v1625, %v1641
        %v1646 = vsub.f32 %v1626, %v1642
        %v1647 = vsub.f32 %v1627, %v1643
        %v1648 = vsub.f32 %v1628, %v1644
        %v1649 = vmul.f32 %v1645, 1.442695
        %v1650 = vpow.pop %v1649
        %v1651 = vmul.f32 %v1646, 1.442695
        %v1652 = vpow.pop %v1651
        %v1653 = vmul.f32 %v1647, 1.442695
        %v1654 = vpow.pop %v1653
        %v1655 = vmul.f32 %v1648, 1.442695
        %v1656 = vpow.pop %v1655
        %1658 = vset.pattern.permute.xlu0 0
        %1659 = vperm.xlu0 %1658, %v1641
        %v1660 = vpop.permute.xlu0 %1659
        %1663 = vset.pattern.permute.xlu0 0
        %1664 = vperm.xlu0 %1663, %v1642
        %v1665 = vpop.permute.xlu0 %1664
        %1668 = vset.pattern.permute.xlu0 0
        %1669 = vperm.xlu0 %1668, %v1643
        %v1670 = vpop.permute.xlu0 %1669
        %1673 = vset.pattern.permute.xlu0 0
        %1674 = vperm.xlu0 %1673, %v1644
        %v1675 = vpop.permute.xlu0 %1674
        %v1677 = vsub.f32 %v1621, %v1660
        %v1678 = vsub.f32 %v1622, %v1665
        %v1679 = vsub.f32 %v1623, %v1670
        %v1680 = vsub.f32 %v1624, %v1675
        %v1681 = vmul.f32 %v1677, 1.442695
        %v1682 = vpow.pop %v1681
        %v1683 = vmul.f32 %v1678, 1.442695
        %v1684 = vpow.pop %v1683
        %v1685 = vmul.f32 %v1679, 1.442695
        %v1686 = vpow.pop %v1685
        %v1687 = vmul.f32 %v1680, 1.442695
        %v1688 = vpow.pop %v1687
        %v1689 = vld [vmem:[#allocation4] sm:$0xff]
        %v1690 = vld [vmem:[#allocation4 + $0x8] sm:$0xff]
        %v1691 = vld [vmem:[#allocation4 + $0x10] sm:$0xff]
        %v1692 = vld [vmem:[#allocation4 + $0x18] sm:$0xff]
        %v1693 = vmul.f32 %v1650, %v1689
        %v1694 = vmul.f32 %v1652, %v1690
        %v1695 = vmul.f32 %v1654, %v1691
        %v1696 = vmul.f32 %v1656, %v1692
        %v1697 = vsel %vm1400, %v1682, 0.0
        %1698 = vadd.xlane.f32.xlu0 %v1697
        %v1699 = vpop.xlane.xlu0 %1698
        %v1700 = vsel %vm1400, %v1684, 0.0
        %1701 = vadd.xlane.f32.xlu0 %v1700
        %v1702 = vpop.xlane.xlu0 %1701
        %v1703 = vsel %vm1400, %v1686, 0.0
        %1704 = vadd.xlane.f32.xlu0 %v1703
        %v1705 = vpop.xlane.xlu0 %1704
        %v1706 = vsel %vm1400, %v1688, 0.0
        %1707 = vadd.xlane.f32.xlu0 %v1706
        %v1708 = vpop.xlane.xlu0 %1707
        %v1709 = vadd.f32 %v1693, %v1699
        %v1710 = vadd.f32 %v1694, %v1702
        %v1711 = vadd.f32 %v1695, %v1705
        %v1712 = vadd.f32 %v1696, %v1708
        %vm1713 = vcmask 7168
        %1714 = vst.msk [vmem:[#allocation4] sm:$0xff] %vm1713, %v1709
        %1715 = vst.msk [vmem:[#allocation4 + $0x8] sm:$0xff] %vm1713, %v1710
        %1716 = vst.msk [vmem:[#allocation4 + $0x10] sm:$0xff] %vm1713, %v1711
        %1717 = vst.msk [vmem:[#allocation4 + $0x18] sm:$0xff] %vm1713, %v1712
        %v1718 = vpack.c.bf16 %v1682, %v1682
        %v1719 = vpack.c.bf16 %v1684, %v1684
        %v1720 = vpack.c.bf16 %v1686, %v1686
        %v1721 = vpack.c.bf16 %v1688, %v1688
        %v1722 = vcombine.low %v898, %v902
        %v1724 = vunpack.c.l.s4 1983009808
        %v1725 = vunpack.c.0.s8 %v1724
        %v1726 = vlaneseq
        %v1727 = vshrl.u32 %v1726, 7
        %v1728 = vsub.s32 %v1725, %v1727
        %v1729 = vrot.slane %v1722, %v1728
        %v1730 = vcombine.low %v900, %v904
        %v1732 = vunpack.c.l.s4 1983009808
        %v1733 = vunpack.c.0.s8 %v1732
        %v1734 = vlaneseq
        %v1735 = vshrl.u32 %v1734, 7
        %v1736 = vsub.s32 %v1733, %v1735
        %v1737 = vrot.slane %v1730, %v1736
        %v1738 = vcombine.low %v1729, %v1737
        %v1740 = vunpack.c.l.s4 1934713408
        %v1741 = vunpack.c.0.s8 %v1740
        %v1742 = vlaneseq
        %v1743 = vshrl.u32 %v1742, 7
        %v1744 = vsub.s32 %v1741, %v1743
        %v1745 = vrot.slane %v1738, %v1744
        %v1746 = vcombine.high %v1745, 0
        %v1747 = vcombine.low %v899, %v903
        %v1749 = vunpack.c.l.s4 1983009808
        %v1750 = vunpack.c.0.s8 %v1749
        %v1751 = vlaneseq
        %v1752 = vshrl.u32 %v1751, 7
        %v1753 = vsub.s32 %v1750, %v1752
        %v1754 = vrot.slane %v1747, %v1753
        %v1755 = vcombine.low %v901, %v905
        %v1757 = vunpack.c.l.s4 1983009808
        %v1758 = vunpack.c.0.s8 %v1757
        %v1759 = vlaneseq
        %v1760 = vshrl.u32 %v1759, 7
        %v1761 = vsub.s32 %v1758, %v1760
        %v1762 = vrot.slane %v1755, %v1761
        %v1763 = vcombine.low %v1754, %v1762
        %v1765 = vunpack.c.l.s4 1934713408
        %v1766 = vunpack.c.0.s8 %v1765
        %v1767 = vlaneseq
        %v1768 = vshrl.u32 %v1767, 7
        %v1769 = vsub.s32 %v1766, %v1768
        %v1770 = vrot.slane %v1763, %v1769
        %v1771 = vcombine.high %v1770, 0
        %v1774 = vpack.i.b16 %v1770, %v1745
        %v1775 = vshrl.u32 %v1745, 16
        %v1776 = vshrl.u32 %v1770, 16
        %v1777 = vpack.i.b16 %v1776, %v1775
        %v1780 = vpack.i.b16 %v1771, %v1746
        %v1781 = vshrl.u32 %v1746, 16
        %v1782 = vshrl.u32 %v1771, 16
        %v1783 = vpack.i.b16 %v1782, %v1781
        %v1785 = vsel %vm1400, %v1718, 0
        %v1788 = vsel %vm1404, %v1774, 0
        %1790 = vmatprep.subr.bf16.mxu0 0
        %1791 = vmatpush1.bf16.msra.mxu0 0
        %1792 = vmatprep.subr.bf16.mxu0 0
        %1793 = vmatpush1.bf16.msra.mxu0 0
        %1794 = vmatprep.subr.bf16.mxu0 0
        %1795 = vmatpush1.bf16.msra.mxu0 0
        %1796 = vmatprep.subr.bf16.mxu0 0
        %1797 = vmatpush1.bf16.msra.mxu0 0
        %1798 = vmatprep.subr.bf16.mxu0 0
        %1799 = vmatpush1.bf16.msra.mxu0 0
        %1800 = vmatprep.subr.bf16.mxu0 0
        %1801 = vmatpush1.bf16.msra.mxu0 0
        %1802 = vmatprep.subr.bf16.mxu0 0
        %1803 = vmatpush1.bf16.msra.mxu0 0
        %1804 = vmatprep.subr.bf16.mxu0 0
        %1805 = vmatpush1.bf16.msra.mxu0 %v1788
        %1806 = vmatprep.subr.bf16.mxu0 0
        %1807 = vmatpush2.bf16.msra.mxu0 0
        %1808 = vmatprep.subr.bf16.mxu0 0
        %1809 = vmatpush2.bf16.msra.mxu0 0
        %1810 = vmatprep.subr.bf16.mxu0 0
        %1811 = vmatpush2.bf16.msra.mxu0 0
        %1812 = vmatprep.subr.bf16.mxu0 0
        %1813 = vmatpush2.bf16.msra.mxu0 0
        %1814 = vmatprep.subr.bf16.mxu0 0
        %1815 = vmatpush2.bf16.msra.mxu0 0
        %1816 = vmatprep.subr.bf16.mxu0 0
        %1817 = vmatpush2.bf16.msra.mxu0 0
        %1818 = vmatprep.subr.bf16.mxu0 0
        %1819 = vmatpush2.bf16.msra.mxu0 0
        %1820 = vmatprep.subr.bf16.mxu0 0
        %1821 = vmatpush2.bf16.msra.mxu0 0
        %1822 = vmatprep.mubr.bf16.mxu0 0
        %1823 = vmatmul.mubr.bf16.gmra.mxu0 %v1785
        %v1824 = vpop.f32.mrf.mxu0
        %v1825 = vadd.f32 0.0, %v1824
        %v1826 = vpop.f32.mrf.mxu0
        %v1827 = vpop.f32.mrf.mxu0
        %v1828 = vpop.f32.mrf.mxu0
        %1829 = vdwg.mxu0
        %v1831 = vsel %vm1400, %v1719, 0
        %v1834 = vsel %vm1404, %v1777, 0
        %1836 = vmatprep.subr.bf16.mxu0 0
        %1837 = vmatpush1.bf16.msra.mxu0 0
        %1838 = vmatprep.subr.bf16.mxu0 0
        %1839 = vmatpush1.bf16.msra.mxu0 0
        %1840 = vmatprep.subr.bf16.mxu0 0
        %1841 = vmatpush1.bf16.msra.mxu0 0
        %1842 = vmatprep.subr.bf16.mxu0 0
        %1843 = vmatpush1.bf16.msra.mxu0 0
        %1844 = vmatprep.subr.bf16.mxu0 0
        %1845 = vmatpush1.bf16.msra.mxu0 0
        %1846 = vmatprep.subr.bf16.mxu0 0
        %1847 = vmatpush1.bf16.msra.mxu0 0
        %1848 = vmatprep.subr.bf16.mxu0 0
        %1849 = vmatpush1.bf16.msra.mxu0 0
        %1850 = vmatprep.subr.bf16.mxu0 0
        %1851 = vmatpush1.bf16.msra.mxu0 %v1834
        %1852 = vmatprep.subr.bf16.mxu0 0
        %1853 = vmatpush2.bf16.msra.mxu0 0
        %1854 = vmatprep.subr.bf16.mxu0 0
        %1855 = vmatpush2.bf16.msra.mxu0 0
        %1856 = vmatprep.subr.bf16.mxu0 0
        %1857 = vmatpush2.bf16.msra.mxu0 0
        %1858 = vmatprep.subr.bf16.mxu0 0
        %1859 = vmatpush2.bf16.msra.mxu0 0
        %1860 = vmatprep.subr.bf16.mxu0 0
        %1861 = vmatpush2.bf16.msra.mxu0 0
        %1862 = vmatprep.subr.bf16.mxu0 0
        %1863 = vmatpush2.bf16.msra.mxu0 0
        %1864 = vmatprep.subr.bf16.mxu0 0
        %1865 = vmatpush2.bf16.msra.mxu0 0
        %1866 = vmatprep.subr.bf16.mxu0 0
        %1867 = vmatpush2.bf16.msra.mxu0 0
        %1868 = vmatprep.mubr.bf16.mxu0 0
        %1869 = vmatmul.mubr.bf16.gmra.mxu0 %v1831
        %v1870 = vpop.f32.mrf.mxu0
        %v1871 = vadd.f32 0.0, %v1870
        %v1872 = vpop.f32.mrf.mxu0
        %v1873 = vpop.f32.mrf.mxu0
        %v1874 = vpop.f32.mrf.mxu0
        %1875 = vdwg.mxu0
        %v1877 = vsel %vm1400, %v1720, 0
        %v1880 = vsel %vm1404, %v1780, 0
        %1882 = vmatprep.subr.bf16.mxu0 0
        %1883 = vmatpush1.bf16.msra.mxu0 0
        %1884 = vmatprep.subr.bf16.mxu0 0
        %1885 = vmatpush1.bf16.msra.mxu0 0
        %1886 = vmatprep.subr.bf16.mxu0 0
        %1887 = vmatpush1.bf16.msra.mxu0 0
        %1888 = vmatprep.subr.bf16.mxu0 0
        %1889 = vmatpush1.bf16.msra.mxu0 0
        %1890 = vmatprep.subr.bf16.mxu0 0
        %1891 = vmatpush1.bf16.msra.mxu0 0
        %1892 = vmatprep.subr.bf16.mxu0 0
        %1893 = vmatpush1.bf16.msra.mxu0 0
        %1894 = vmatprep.subr.bf16.mxu0 0
        %1895 = vmatpush1.bf16.msra.mxu0 0
        %1896 = vmatprep.subr.bf16.mxu0 0
        %1897 = vmatpush1.bf16.msra.mxu0 %v1880
        %1898 = vmatprep.subr.bf16.mxu0 0
        %1899 = vmatpush2.bf16.msra.mxu0 0
        %1900 = vmatprep.subr.bf16.mxu0 0
        %1901 = vmatpush2.bf16.msra.mxu0 0
        %1902 = vmatprep.subr.bf16.mxu0 0
        %1903 = vmatpush2.bf16.msra.mxu0 0
        %1904 = vmatprep.subr.bf16.mxu0 0
        %1905 = vmatpush2.bf16.msra.mxu0 0
        %1906 = vmatprep.subr.bf16.mxu0 0
        %1907 = vmatpush2.bf16.msra.mxu0 0
        %1908 = vmatprep.subr.bf16.mxu0 0
        %1909 = vmatpush2.bf16.msra.mxu0 0
        %1910 = vmatprep.subr.bf16.mxu0 0
        %1911 = vmatpush2.bf16.msra.mxu0 0
        %1912 = vmatprep.subr.bf16.mxu0 0
        %1913 = vmatpush2.bf16.msra.mxu0 0
        %1914 = vmatprep.mubr.bf16.mxu0 0
        %1915 = vmatmul.mubr.bf16.gmra.mxu0 %v1877
        %v1916 = vpop.f32.mrf.mxu0
        %v1917 = vadd.f32 0.0, %v1916
        %v1918 = vpop.f32.mrf.mxu0
        %v1919 = vpop.f32.mrf.mxu0
        %v1920 = vpop.f32.mrf.mxu0
        %1921 = vdwg.mxu0
        %v1923 = vsel %vm1400, %v1721, 0
        %v1926 = vsel %vm1404, %v1783, 0
        %1928 = vmatprep.subr.bf16.mxu0 0
        %1929 = vmatpush1.bf16.msra.mxu0 0
        %1930 = vmatprep.subr.bf16.mxu0 0
        %1931 = vmatpush1.bf16.msra.mxu0 0
        %1932 = vmatprep.subr.bf16.mxu0 0
        %1933 = vmatpush1.bf16.msra.mxu0 0
        %1934 = vmatprep.subr.bf16.mxu0 0
        %1935 = vmatpush1.bf16.msra.mxu0 0
        %1936 = vmatprep.subr.bf16.mxu0 0
        %1937 = vmatpush1.bf16.msra.mxu0 0
        %1938 = vmatprep.subr.bf16.mxu0 0
        %1939 = vmatpush1.bf16.msra.mxu0 0
        %1940 = vmatprep.subr.bf16.mxu0 0
        %1941 = vmatpush1.bf16.msra.mxu0 0
        %1942 = vmatprep.subr.bf16.mxu0 0
        %1943 = vmatpush1.bf16.msra.mxu0 %v1926
        %1944 = vmatprep.subr.bf16.mxu0 0
        %1945 = vmatpush2.bf16.msra.mxu0 0
        %1946 = vmatprep.subr.bf16.mxu0 0
        %1947 = vmatpush2.bf16.msra.mxu0 0
        %1948 = vmatprep.subr.bf16.mxu0 0
        %1949 = vmatpush2.bf16.msra.mxu0 0
        %1950 = vmatprep.subr.bf16.mxu0 0
        %1951 = vmatpush2.bf16.msra.mxu0 0
        %1952 = vmatprep.subr.bf16.mxu0 0
        %1953 = vmatpush2.bf16.msra.mxu0 0
        %1954 = vmatprep.subr.bf16.mxu0 0
        %1955 = vmatpush2.bf16.msra.mxu0 0
        %1956 = vmatprep.subr.bf16.mxu0 0
        %1957 = vmatpush2.bf16.msra.mxu0 0
        %1958 = vmatprep.subr.bf16.mxu0 0
        %1959 = vmatpush2.bf16.msra.mxu0 0
        %1960 = vmatprep.mubr.bf16.mxu0 0
        %1961 = vmatmul.mubr.bf16.gmra.mxu0 %v1923
        %v1962 = vpop.f32.mrf.mxu0
        %v1963 = vadd.f32 0.0, %v1962
        %v1964 = vpop.f32.mrf.mxu0
        %v1965 = vpop.f32.mrf.mxu0
        %v1966 = vpop.f32.mrf.mxu0
        %1967 = vdwg.mxu0
        %v1968 = vld [vmem:[#allocation5] sm:$0xff]
        %v1969 = vld [vmem:[#allocation5 + $0x8] sm:$0xff]
        %v1970 = vld [vmem:[#allocation5 + $0x10] sm:$0xff]
        %v1971 = vld [vmem:[#allocation5 + $0x18] sm:$0xff]
        %1973 = vset.pattern.permute.xlu0 0
        %1974 = vperm.xlu0 %1973, %v1650
        %v1975 = vpop.permute.xlu0 %1974
        %1978 = vset.pattern.permute.xlu0 0
        %1979 = vperm.xlu0 %1978, %v1652
        %v1980 = vpop.permute.xlu0 %1979
        %1983 = vset.pattern.permute.xlu0 0
        %1984 = vperm.xlu0 %1983, %v1654
        %v1985 = vpop.permute.xlu0 %1984
        %1988 = vset.pattern.permute.xlu0 0
        %1989 = vperm.xlu0 %1988, %v1656
        %v1990 = vpop.permute.xlu0 %1989
        %v1992 = vmul.f32 %v1975, %v1968
        %v1993 = vmul.f32 %v1980, %v1969
        %v1994 = vmul.f32 %v1985, %v1970
        %v1995 = vmul.f32 %v1990, %v1971
        %v1996 = vadd.f32 %v1992, %v1825
        %v1997 = vadd.f32 %v1993, %v1871
        %v1998 = vadd.f32 %v1994, %v1917
        %v1999 = vadd.f32 %v1995, %v1963
        %2000 = vst.msk [vmem:[#allocation5] sm:$0xff] %vm1400, %v1996
        %2001 = vst.msk [vmem:[#allocation5 + $0x8] sm:$0xff] %vm1400, %v1997
        %2002 = vst.msk [vmem:[#allocation5 + $0x10] sm:$0xff] %vm1400, %v1998
        %2003 = vst.msk [vmem:[#allocation5 + $0x18] sm:$0xff] %vm1400, %v1999
        %2004 = vst.msk [vmem:[#allocation3] sm:$0xff] %vm1713, %v1641
        %2005 = vst.msk [vmem:[#allocation3 + $0x8] sm:$0xff] %vm1713, %v1642
        %2006 = vst.msk [vmem:[#allocation3 + $0x10] sm:$0xff] %vm1713, %v1643
        %2007 = vst.msk [vmem:[#allocation3 + $0x18] sm:$0xff] %vm1713, %v1644
        // Predicated region
        $region65: #{decoder_forward_prepared.3} parent=59 // pred_check
          %p2008 = pneg %p429
        $region66: #{decoder_forward_prepared.3} parent=59 // pred_check_branch
          %2010 = sbr.rel (%p2008) target = $region68
        $region67: #{decoder_forward_prepared.3} parent=59 // pred_region
          %v2011 = vld [vmem:[#allocation4] sm:$0xff]
          %v2012 = vld [vmem:[#allocation4 + $0x8] sm:$0xff]
          %v2013 = vld [vmem:[#allocation4 + $0x10] sm:$0xff]
          %v2014 = vld [vmem:[#allocation4 + $0x18] sm:$0xff]
          %v2015 = vrcp.pop %v2011
          %v2016 = vmul.f32 1.0, %v2015
          %v2017 = vrcp.pop %v2012
          %v2018 = vmul.f32 1.0, %v2017
          %v2019 = vrcp.pop %v2013
          %v2020 = vmul.f32 1.0, %v2019
          %v2021 = vrcp.pop %v2014
          %v2022 = vmul.f32 1.0, %v2021
          %v2023 = vld [vmem:[#allocation5] sm:$0xff]
          %v2024 = vld [vmem:[#allocation5 + $0x8] sm:$0xff]
          %v2025 = vld [vmem:[#allocation5 + $0x10] sm:$0xff]
          %v2026 = vld [vmem:[#allocation5 + $0x18] sm:$0xff]
          %2028 = vset.pattern.permute.xlu0 0
          %2029 = vperm.xlu0 %2028, %v2016
          %v2030 = vpop.permute.xlu0 %2029
          %2033 = vset.pattern.permute.xlu0 0
          %2034 = vperm.xlu0 %2033, %v2018
          %v2035 = vpop.permute.xlu0 %2034
          %2038 = vset.pattern.permute.xlu0 0
          %2039 = vperm.xlu0 %2038, %v2020
          %v2040 = vpop.permute.xlu0 %2039
          %2043 = vset.pattern.permute.xlu0 0
          %2044 = vperm.xlu0 %2043, %v2022
          %v2045 = vpop.permute.xlu0 %2044
          %v2047 = vmul.f32 %v2023, %v2030
          %v2048 = vmul.f32 %v2024, %v2035
          %v2049 = vmul.f32 %v2025, %v2040
          %v2050 = vmul.f32 %v2026, %v2045
          %v2051 = vcombine.low %v2047, %v2049
          %v2052 = vcombine.high %v2047, %v2049
          %v2054 = vunpack.c.l.s4 1983009808
          %v2055 = vunpack.c.0.s8 %v2054
          %v2056 = vlaneseq
          %v2057 = vshrl.u32 %v2056, 7
          %v2058 = vsub.s32 %v2055, %v2057
          %v2059 = vrot.slane %v2051, %v2058
          %v2061 = vunpack.c.l.s4 1983009808
          %v2062 = vunpack.c.0.s8 %v2061
          %v2063 = vlaneseq
          %v2064 = vshrl.u32 %v2063, 7
          %v2065 = vsub.s32 %v2062, %v2064
          %v2066 = vrot.slane %v2052, %v2065
          %v2067 = vcombine.low %v2048, %v2050
          %v2068 = vcombine.high %v2048, %v2050
          %v2070 = vunpack.c.l.s4 1983009808
          %v2071 = vunpack.c.0.s8 %v2070
          %v2072 = vlaneseq
          %v2073 = vshrl.u32 %v2072, 7
          %v2074 = vsub.s32 %v2071, %v2073
          %v2075 = vrot.slane %v2067, %v2074
          %v2077 = vunpack.c.l.s4 1983009808
          %v2078 = vunpack.c.0.s8 %v2077
          %v2079 = vlaneseq
          %v2080 = vshrl.u32 %v2079, 7
          %v2081 = vsub.s32 %v2078, %v2080
          %v2082 = vrot.slane %v2068, %v2081
          %v2083 = vcombine.low %v2059, %v2075
          %v2084 = vcombine.high %v2059, %v2075
          %v2086 = vunpack.c.l.s4 1934713408
          %v2087 = vunpack.c.0.s8 %v2086
          %v2088 = vlaneseq
          %v2089 = vshrl.u32 %v2088, 7
          %v2090 = vsub.s32 %v2087, %v2089
          %v2091 = vrot.slane %v2083, %v2090
          %v2093 = vunpack.c.l.s4 1934713408
          %v2094 = vunpack.c.0.s8 %v2093
          %v2095 = vlaneseq
          %v2096 = vshrl.u32 %v2095, 7
          %v2097 = vsub.s32 %v2094, %v2096
          %v2098 = vrot.slane %v2084, %v2097
          %v2099 = vcombine.low %v2066, %v2082
          %v2100 = vcombine.high %v2066, %v2082
          %v2102 = vunpack.c.l.s4 1934713408
          %v2103 = vunpack.c.0.s8 %v2102
          %v2104 = vlaneseq
          %v2105 = vshrl.u32 %v2104, 7
          %v2106 = vsub.s32 %v2103, %v2105
          %v2107 = vrot.slane %v2099, %v2106
          %v2109 = vunpack.c.l.s4 1934713408
          %v2110 = vunpack.c.0.s8 %v2109
          %v2111 = vlaneseq
          %v2112 = vshrl.u32 %v2111, 7
          %v2113 = vsub.s32 %v2110, %v2112
          %v2114 = vrot.slane %v2100, %v2113
          %v2115 = vcombine.high %v2091, 0.0
          %v2116 = vcombine.high %v2098, 0.0
          %v2117 = vcombine.high %v2107, 0.0
          %v2118 = vcombine.high %v2114, 0.0
          %v2119 = vcombine.low %v2091, %v2098
          %v2121 = vunpack.c.l.s4 1983009808
          %v2122 = vunpack.c.0.s8 %v2121
          %v2123 = vlaneseq
          %v2124 = vshrl.u32 %v2123, 7
          %v2125 = vsub.s32 %v2122, %v2124
          %v2126 = vrot.slane %v2119, %v2125
          %v2127 = vcombine.low %v2115, %v2116
          %v2129 = vunpack.c.l.s4 1983009808
          %v2130 = vunpack.c.0.s8 %v2129
          %v2131 = vlaneseq
          %v2132 = vshrl.u32 %v2131, 7
          %v2133 = vsub.s32 %v2130, %v2132
          %v2134 = vrot.slane %v2127, %v2133
          %v2135 = vcombine.low %v2107, %v2114
          %v2137 = vunpack.c.l.s4 1983009808
          %v2138 = vunpack.c.0.s8 %v2137
          %v2139 = vlaneseq
          %v2140 = vshrl.u32 %v2139, 7
          %v2141 = vsub.s32 %v2138, %v2140
          %v2142 = vrot.slane %v2135, %v2141
          %v2143 = vcombine.low %v2117, %v2118
          %v2145 = vunpack.c.l.s4 1983009808
          %v2146 = vunpack.c.0.s8 %v2145
          %v2147 = vlaneseq
          %v2148 = vshrl.u32 %v2147, 7
          %v2149 = vsub.s32 %v2146, %v2148
          %v2150 = vrot.slane %v2143, %v2149
          %v2151 = vcombine.low %v2126, %v2134
          %v2152 = vcombine.high %v2126, %v2134
          %v2154 = vunpack.c.l.s4 1934713408
          %v2155 = vunpack.c.0.s8 %v2154
          %v2156 = vlaneseq
          %v2157 = vshrl.u32 %v2156, 7
          %v2158 = vsub.s32 %v2155, %v2157
          %v2159 = vrot.slane %v2151, %v2158
          %v2161 = vunpack.c.l.s4 1934713408
          %v2162 = vunpack.c.0.s8 %v2161
          %v2163 = vlaneseq
          %v2164 = vshrl.u32 %v2163, 7
          %v2165 = vsub.s32 %v2162, %v2164
          %v2166 = vrot.slane %v2152, %v2165
          %v2167 = vcombine.low %v2142, %v2150
          %v2168 = vcombine.high %v2142, %v2150
          %v2170 = vunpack.c.l.s4 1934713408
          %v2171 = vunpack.c.0.s8 %v2170
          %v2172 = vlaneseq
          %v2173 = vshrl.u32 %v2172, 7
          %v2174 = vsub.s32 %v2171, %v2173
          %v2175 = vrot.slane %v2167, %v2174
          %v2177 = vunpack.c.l.s4 1934713408
          %v2178 = vunpack.c.0.s8 %v2177
          %v2179 = vlaneseq
          %v2180 = vshrl.u32 %v2179, 7
          %v2181 = vsub.s32 %v2178, %v2180
          %v2182 = vrot.slane %v2168, %v2181
          %v2183 = vcombine.low %v2159, %v2175
          %v2184 = vcombine.high %v2159, %v2175
          %v2185 = vcombine.low %v2166, %v2182
          %v2186 = vcombine.high %v2166, %v2182
          %2188 = vrot.lane.b32.xlu0 %v2184, 8
          %v2189 = vpop.permute.xlu0 %2188
          %2192 = vrot.lane.b32.xlu0 %v2185, 16
          %v2193 = vpop.permute.xlu0 %2192
          %2196 = vrot.lane.b32.xlu0 %v2186, 24
          %v2197 = vpop.permute.xlu0 %2196
          %v2199 = vsel %vm1400, %v2183, %v2189
          %vm2200 = vcmask 130048
          %v2201 = vsel %vm2200, %v2199, %v2193
          %vm2202 = vcmask 195584
          %v2203 = vsel %vm2202, %v2201, %v2197
          %v2204 = vpack.c.bf16 %v2203, %v2203
          %v2205 = vld [vmem:[%s5] sm:$0xf]
          %v2206 = vld [vmem:[%s5 + $0x4] sm:$0xf]
          %v2207 = vld [vmem:[%s5 + $0x8] sm:$0xf]
          %v2208 = vld [vmem:[%s5 + $0xc] sm:$0xf]
          %v2209 = vlaneseq
          %v2210 = vshrl.u32 %v2209, 7
          %v2211 = vsub.s32 3, %v2210
          %v2212 = vrot.slane %v427, %v2211
          %v2217 = vunpack.c.l.b16 %v2205
          %v2218 = vunpack.c.l.b16 %v2206
          %v2219 = vunpack.c.l.b16 %v2207
          %v2220 = vunpack.c.l.b16 %v2208
          %v2221 = vpack.c.b16 %v2218, %v2217
          %v2222 = vpack.c.b16 %v2220, %v2219
          %v2226 = vsel %vm630, %v2204, 0
          %2228 = vmatprep.subr.bf16.mxu0 0
          %2229 = vmatpush1.bf16.msra.mxu0 0
          %2230 = vmatprep.subr.bf16.mxu0 0
          %2231 = vmatpush1.bf16.msra.mxu0 0
          %2232 = vmatprep.subr.bf16.mxu0 0
          %2233 = vmatpush1.bf16.msra.mxu0 0
          %2234 = vmatprep.subr.bf16.mxu0 0
          %2235 = vmatpush1.bf16.msra.mxu0 0
          %2236 = vmatprep.subr.bf16.mxu0 0
          %2237 = vmatpush1.bf16.msra.mxu0 0
          %2238 = vmatprep.subr.bf16.mxu0 0
          %2239 = vmatpush1.bf16.msra.mxu0 0
          %2240 = vmatprep.subr.bf16.mxu0 0
          %2241 = vmatpush1.bf16.msra.mxu0 %v2222
          %2242 = vmatprep.subr.bf16.mxu0 0
          %2243 = vmatpush1.bf16.msra.mxu0 %v2221
          %2244 = vmatprep.subr.bf16.mxu0 0
          %2245 = vmatpush2.bf16.msra.mxu0 0
          %2246 = vmatprep.subr.bf16.mxu0 0
          %2247 = vmatpush2.bf16.msra.mxu0 0
          %2248 = vmatprep.subr.bf16.mxu0 0
          %2249 = vmatpush2.bf16.msra.mxu0 0
          %2250 = vmatprep.subr.bf16.mxu0 0
          %2251 = vmatpush2.bf16.msra.mxu0 0
          %2252 = vmatprep.subr.bf16.mxu0 0
          %2253 = vmatpush2.bf16.msra.mxu0 0
          %2254 = vmatprep.subr.bf16.mxu0 0
          %2255 = vmatpush2.bf16.msra.mxu0 0
          %2256 = vmatprep.subr.bf16.mxu0 0
          %2257 = vmatpush2.bf16.msra.mxu0 0
          %2258 = vmatprep.subr.bf16.mxu0 0
          %2259 = vmatpush2.bf16.msra.mxu0 0
          %2260 = vmatprep.mubr.bf16.mxu0 0
          %2261 = vmatmul.mubr.bf16.gmra.mxu0 %v2226
          %v2262 = vpop.f32.mrf.mxu0
          %v2263 = vadd.f32 %v2212, %v2262
          %v2264 = vpop.f32.mrf.mxu0
          %v2265 = vpop.f32.mrf.mxu0
          %v2266 = vpop.f32.mrf.mxu0
          %2267 = vdwg.mxu0
          %v2268 = vld [vmem:[%s415] sm:$0xff]
          %v2269 = vadd.f32 %v2263, %v2268
          %v2270 = vsel %vm630, %v2269, 0.0
          %2271 = vadd.xlane.f32.xlu0 %v2270
          %v2272 = vpop.xlane.xlu0 %2271
          %v2273 = vrcp.pop 32.0
          %v2274 = vmul.f32 %v2272, %v2273
          %v2275 = vsub.f32 %v2269, %v2274
          %v2276 = vmul.f32 %v2275, %v2275
          %v2277 = vsel %vm630, %v2276, 0.0
          %2278 = vadd.xlane.f32.xlu0 %v2277
          %v2279 = vpop.xlane.xlu0 %2278
          %v2280 = vmul.f32 %v2279, %v2273
          %v2281 = vadd.f32 %v2280, 1e-05
          %v2282 = vrsqrt.pop %v2281
          %v2283 = vmul.f32 %v2275, %v2282
          %v2284 = vlaneseq
          %v2285 = vshrl.u32 %v2284, 7
          %v2286 = vsub.s32 5, %v2285
          %v2287 = vrot.slane %v427, %v2286
          %v2288 = vmul.f32 %v2283, %v2287
          %v2289 = vlaneseq
          %v2290 = vshrl.u32 %v2289, 7
          %v2291 = vsub.s32 6, %v2290
          %v2292 = vrot.slane %v427, %v2291
          %v2293 = vadd.f32 %v2288, %v2292
          %v2294 = vpack.c.bf16 %v2293, %v2293
          %v2295 = vld [vmem:[%s6] sm:$0xf]
          %v2296 = vld [vmem:[%s6 + $0x4] sm:$0xf]
          %v2297 = vld [vmem:[%s6 + $0x8] sm:$0xf]
          %v2298 = vld [vmem:[%s6 + $0xc] sm:$0xf]
          %v2299 = vld [vmem:[%s9] sm:$0x1]
          %v2301 = vlaneseq
          %v2302 = vshrl.u32 %v2301, 7
          %v2303 = vsub.s32 0, %v2302
          %v2304 = vrot.slane %v2299, %v2303
          %v2310 = vunpack.c.l.b16 %v2295
          %v2311 = vunpack.c.l.b16 %v2296
          %v2312 = vunpack.c.l.b16 %v2297
          %v2313 = vunpack.c.l.b16 %v2298
          %v2314 = vpack.c.b16 %v2311, %v2310
          %v2315 = vpack.c.b16 %v2313, %v2312
          %v2319 = vsel %vm630, %v2294, 0
          %2321 = vmatprep.subr.bf16.mxu0 0
          %2322 = vmatpush1.bf16.msra.mxu0 0
          %2323 = vmatprep.subr.bf16.mxu0 0
          %2324 = vmatpush1.bf16.msra.mxu0 0
          %2325 = vmatprep.subr.bf16.mxu0 0
          %2326 = vmatpush1.bf16.msra.mxu0 0
          %2327 = vmatprep.subr.bf16.mxu0 0
          %2328 = vmatpush1.bf16.msra.mxu0 0
          %2329 = vmatprep.subr.bf16.mxu0 0
          %2330 = vmatpush1.bf16.msra.mxu0 0
          %2331 = vmatprep.subr.bf16.mxu0 0
          %2332 = vmatpush1.bf16.msra.mxu0 0
          %2333 = vmatprep.subr.bf16.mxu0 0
          %2334 = vmatpush1.bf16.msra.mxu0 %v2315
          %2335 = vmatprep.subr.bf16.mxu0 0
          %2336 = vmatpush1.bf16.msra.mxu0 %v2314
          %2337 = vmatprep.subr.bf16.mxu0 0
          %2338 = vmatpush2.bf16.msra.mxu0 0
          %2339 = vmatprep.subr.bf16.mxu0 0
          %2340 = vmatpush2.bf16.msra.mxu0 0
          %2341 = vmatprep.subr.bf16.mxu0 0
          %2342 = vmatpush2.bf16.msra.mxu0 0
          %2343 = vmatprep.subr.bf16.mxu0 0
          %2344 = vmatpush2.bf16.msra.mxu0 0
          %2345 = vmatprep.subr.bf16.mxu0 0
          %2346 = vmatpush2.bf16.msra.mxu0 0
          %2347 = vmatprep.subr.bf16.mxu0 0
          %2348 = vmatpush2.bf16.msra.mxu0 0
          %2349 = vmatprep.subr.bf16.mxu0 0
          %2350 = vmatpush2.bf16.msra.mxu0 0
          %2351 = vmatprep.subr.bf16.mxu0 0
          %2352 = vmatpush2.bf16.msra.mxu0 0
          %2353 = vmatprep.mubr.bf16.mxu0 0
          %2354 = vmatmul.mubr.bf16.gmra.mxu0 %v2319
          %v2355 = vpop.f32.mrf.mxu0
          %v2356 = vadd.f32 %v2304, %v2355
          %v2357 = vpop.f32.mrf.mxu0
          %v2358 = vpop.f32.mrf.mxu0
          %v2359 = vpop.f32.mrf.mxu0
          %2360 = vdwg.mxu0
          %v2361 = vmul.f32 %v2356, 0.5
          %v2362 = vmul.f32 %v2356, 0.70710677
          %v2363 = verf.f32.pop %v2362
          %v2364 = vadd.f32 %v2363, 1.0
          %v2365 = vmul.f32 %v2361, %v2364
          %v2366 = vpack.c.bf16 %v2365, %v2365
          %v2367 = vld [vmem:[%s7] sm:$0xf]
          %v2368 = vld [vmem:[%s7 + $0x4] sm:$0xf]
          %v2369 = vld [vmem:[%s7 + $0x8] sm:$0xf]
          %v2370 = vld [vmem:[%s7 + $0xc] sm:$0xf]
          %v2371 = vld [vmem:[%s7 + $0x10] sm:$0xf]
          %v2372 = vld [vmem:[%s7 + $0x14] sm:$0xf]
          %v2373 = vld [vmem:[%s7 + $0x18] sm:$0xf]
          %v2374 = vld [vmem:[%s7 + $0x1c] sm:$0xf]
          %v2375 = vlaneseq
          %v2376 = vshrl.u32 %v2375, 7
          %v2377 = vsub.s32 4, %v2376
          %v2378 = vrot.slane %v427, %v2377
          %v2387 = vunpack.c.l.b16 %v2367
          %v2388 = vunpack.c.l.b16 %v2368
          %v2389 = vunpack.c.l.b16 %v2369
          %v2390 = vunpack.c.l.b16 %v2370
          %v2391 = vunpack.c.l.b16 %v2371
          %v2392 = vunpack.c.l.b16 %v2372
          %v2393 = vunpack.c.l.b16 %v2373
          %v2394 = vunpack.c.l.b16 %v2374
          %v2395 = vpack.c.b16 %v2388, %v2387
          %v2396 = vpack.c.b16 %v2390, %v2389
          %v2397 = vpack.c.b16 %v2392, %v2391
          %v2398 = vpack.c.b16 %v2394, %v2393
          %vm2403 = vcmask 523264
          %v2405 = vsel %vm2403, %v2366, 0
          %2407 = vmatprep.subr.bf16.mxu0 0
          %2408 = vmatpush1.bf16.msra.mxu0 0
          %2409 = vmatprep.subr.bf16.mxu0 0
          %2410 = vmatpush1.bf16.msra.mxu0 0
          %2411 = vmatprep.subr.bf16.mxu0 0
          %2412 = vmatpush1.bf16.msra.mxu0 0
          %2413 = vmatprep.subr.bf16.mxu0 0
          %2414 = vmatpush1.bf16.msra.mxu0 0
          %2415 = vmatprep.subr.bf16.mxu0 0
          %2416 = vmatpush1.bf16.msra.mxu0 %v2398
          %2417 = vmatprep.subr.bf16.mxu0 0
          %2418 = vmatpush1.bf16.msra.mxu0 %v2397
          %2419 = vmatprep.subr.bf16.mxu0 0
          %2420 = vmatpush1.bf16.msra.mxu0 %v2396
          %2421 = vmatprep.subr.bf16.mxu0 0
          %2422 = vmatpush1.bf16.msra.mxu0 %v2395
          %2423 = vmatprep.subr.bf16.mxu0 0
          %2424 = vmatpush2.bf16.msra.mxu0 0
          %2425 = vmatprep.subr.bf16.mxu0 0
          %2426 = vmatpush2.bf16.msra.mxu0 0
          %2427 = vmatprep.subr.bf16.mxu0 0
          %2428 = vmatpush2.bf16.msra.mxu0 0
          %2429 = vmatprep.subr.bf16.mxu0 0
          %2430 = vmatpush2.bf16.msra.mxu0 0
          %2431 = vmatprep.subr.bf16.mxu0 0
          %2432 = vmatpush2.bf16.msra.mxu0 0
          %2433 = vmatprep.subr.bf16.mxu0 0
          %2434 = vmatpush2.bf16.msra.mxu0 0
          %2435 = vmatprep.subr.bf16.mxu0 0
          %2436 = vmatpush2.bf16.msra.mxu0 0
          %2437 = vmatprep.subr.bf16.mxu0 0
          %2438 = vmatpush2.bf16.msra.mxu0 0
          %2439 = vmatprep.mubr.bf16.mxu0 0
          %2440 = vmatmul.mubr.bf16.gmra.mxu0 %v2405
          %v2441 = vpop.f32.mrf.mxu0
          %v2442 = vadd.f32 %v2378, %v2441
          %v2443 = vpop.f32.mrf.mxu0
          %v2444 = vpop.f32.mrf.mxu0
          %v2445 = vpop.f32.mrf.mxu0
          %2446 = vdwg.mxu0
          %v2447 = vadd.f32 %v2442, %v2293
          %v2448 = vsel %vm630, %v2447, 0.0
          %2449 = vadd.xlane.f32.xlu0 %v2448
          %v2450 = vpop.xlane.xlu0 %2449
          %v2451 = vmul.f32 %v2450, %v2273
          %v2452 = vsub.f32 %v2447, %v2451
          %v2453 = vmul.f32 %v2452, %v2452
          %v2454 = vsel %vm630, %v2453, 0.0
          %2455 = vadd.xlane.f32.xlu0 %v2454
          %v2456 = vpop.xlane.xlu0 %2455
          %v2457 = vmul.f32 %v2456, %v2273
          %v2458 = vadd.f32 %v2457, 1e-05
          %v2459 = vrsqrt.pop %v2458
          %v2460 = vmul.f32 %v2452, %v2459
          %v2461 = vlaneseq
          %v2462 = vshrl.u32 %v2461, 7
          %v2463 = vsub.s32 7, %v2462
          %v2464 = vrot.slane %v427, %v2463
          %v2465 = vmul.f32 %v2460, %v2464
          %v2466 = vlaneseq
          %v2467 = vshrl.u32 %v2466, 7
          %v2468 = vsub.s32 0, %v2467
          %v2469 = vrot.slane %v428, %v2468
          %v2470 = vadd.f32 %v2465, %v2469
          %2471 = vst.msk [vmem:[%s408] sm:$0xff] %vm630, %v2470
        $region68: #{decoder_forward_prepared.3} parent=59 // pred_fallthru
          _
        %s2472 = sand.u32 %s279, 1
        %s2473 = scalar_lea.sflag [#allocation7], %s2472
        %s2474 = sand.u32 %s279, 1
        %s2475 = smul.addr %s2474, 8
        %s2476 = scalar_lea.vmem [#allocation6], %s2475
        // Predicated region
        $region69: #{decoder_forward_prepared.3} parent=59 // pred_check
          %p2477 = pneg %p289
        $region70: #{decoder_forward_prepared.3} parent=59 // pred_check_branch
          %2479 = sbr.rel (%p2477) target = $region72
        $region71: #{decoder_forward_prepared.3} parent=59 // pred_region
          %s2481 = ssub.s32 128, 128
          %2482 = vsyncadd %s2473, %s2481
          %s2483 = sadd.s32 %s30, %s29
          %s2484 = smul.addr %s2483, 128
          %s2485 = scalar_lea.hbm %s10, %s2484
          %s2487 = sshll.u32 %s2476, 4
          %s2488 = int_to_ptr.vmem [resolvable:$true] %s2487
          %2490 = dma.vmem_to_hbm [thread:$0]  %s2488, 128, %s2485, %s2473
        $region72: #{decoder_forward_prepared.3} parent=59 // pred_fallthru
          _
      $region60: #{decoder_forward_prepared.3} parent=5 // pred_fallthru
        _
      %p2491 = scmp.le.s32.totalorder 2, %s19
      // Predicated region
      $region73: #{decoder_forward_prepared.3} parent=5 // pred_check
        %p2492 = pneg %p2491
      $region74: #{decoder_forward_prepared.3} parent=5 // pred_check_branch
        %2494 = sbr.rel (%p2492) target = $region76
      $region75: #{decoder_forward_prepared.3} parent=5 // pred_region
        %s2495 = ssub.s32 %s19, 2
        // Predicated region
        $region77: #{decoder_forward_prepared.3} parent=75 // pred_check
          %p2496 = pneg %p295
        $region78: #{decoder_forward_prepared.3} parent=75 // pred_check_branch
          %2498 = sbr.rel (%p2496) target = $region80
        $region79: #{decoder_forward_prepared.3} parent=75 // pred_region
          %s2499 = sand.u32 %s280, 1
          %s2500 = scalar_lea.sflag [#allocation7], %s2499
          %s2501 = sand.u32 %s280, 1
          %s2502 = smul.addr %s2501, 8
          %s2503 = scalar_lea.vmem [#allocation6], %s2502
          %2504 = dma.done %s2500, 128
        $region80: #{decoder_forward_prepared.3} parent=75 // pred_fallthru
          _
      $region76: #{decoder_forward_prepared.3} parent=5 // pred_fallthru
        _
    $region6: #{decoder_forward_prepared.3} parent=1 // loop_footer
      %s23 = sadd.s32 1, %s19
    $region7: #{decoder_forward_prepared.3} parent=1 // loop_footer_branch
      %18 = sbr.rel target = $region3
    $region8: #{decoder_forward_prepared.3} parent=1 // loop_exit
      _
    %2505 = vsyncpa [#allocation7], 1
    %s2506 = scalar_lea.sflag [#allocation7], 1
    %2507 = vsyncpa %s2506, 1

// kernel: decoder_forward_prepared.2
$region0: #{decoder_forward_prepared.2}
  #allocation0 [shape = 'u32[]', space=smem, size = 0x4, offset = 0x4, fixed_abs, tag = 'smem constant byte address 0x4 - core index']
  #allocation1 [shape = 'u32[144,128]{1,0:T(1,128)}', space=vmem, size = 0x12000, scoped, tag = 'internal scratch']
  #allocation2 [shape = 'bf16[8,4,8]{2,1,0:T(4,128)(2,1)}', space=vmem, size = 0x2000, scoped, tag = 'scratch operand']
  #allocation3 [shape = 'f32[4,8,1]{2,1,0:T(8,128)}', space=vmem, size = 0x4000, scoped, tag = 'scratch operand']
  #allocation4 [shape = 'f32[4,8,1]{2,1,0:T(8,128)}', space=vmem, size = 0x4000, scoped, tag = 'scratch operand']
  #allocation5 [shape = 'f32[4,8,8]{2,1,0:T(8,128)}', space=vmem, size = 0x4000, scoped, tag = 'scratch operand']
  %s0 = inlined_call_operand.vmem [shape: f32[2,8,32], index: 0, kind: input, shape index: {}]
  %s1 = inlined_call_operand.vmem [shape: s8[2,8,8], index: 1, kind: input, shape index: {}]
  %s2 = inlined_call_operand.vmem [shape: bf16[32,32], index: 2, kind: input, shape index: {}]
  %s3 = inlined_call_operand.vmem [shape: bf16[32,32], index: 3, kind: input, shape index: {}]
  %s4 = inlined_call_operand.hbm [shape: bf16[32,32], index: 4, kind: input, shape index: {}]
  %s5 = inlined_call_operand.hbm [shape: bf16[32,32], index: 5, kind: input, shape index: {}]
  %s6 = inlined_call_operand.hbm [shape: bf16[32,64], index: 6, kind: input, shape index: {}]
  %s7 = inlined_call_operand.vmem [shape: bf16[64,32], index: 7, kind: input, shape index: {}]
  %s8 = inlined_call_operand.hbm [shape: f32[9,32], index: 8, kind: input, shape index: {}]
  %s9 = inlined_call_operand.vmem [shape: f32[1,64], index: 9, kind: input, shape index: {}]
  %s10 = inlined_call_operand.vmem [shape: f32[2,8,32], index: 10, kind: output, shape index: {}]
  %s11 = sld [smem:[#allocation0]]
  $region97: #{decoder_forward_prepared.2} parent=0
    _
  %s13 = ssub.s32 1, %s11
  %s14 = scalar_select 0, %s13, %s11
  $region1: #{decoder_forward_prepared.2} parent=0
    #allocation6 [shape = 'u8[8192]{0}', space=vmem, size = 0x2000, scoped, tag = 'input window, operand 4, single buffered']
    #allocation7 [shape = 's32[2]{0}', space=sflag, size = 0x8, scoped, tag = 'scoped memory for decoder_forward_prepared.2']
    #allocation8 [shape = 'u8[8192]{0}', space=vmem, size = 0x2000, scoped, tag = 'input window, operand 5, single buffered']
    #allocation9 [shape = 's32[1]{0}', space=sflag, size = 0x4, scoped, tag = 'scoped memory for decoder_forward_prepared.2']
    #allocation10 [shape = 'u8[8192]{0}', space=vmem, size = 0x2000, scoped, tag = 'input window, operand 6, single buffered']
    #allocation11 [shape = 'u8[8192]{0}', space=vmem, size = 0x2000, scoped, tag = 'input window, operand 8, single buffered']
    #allocation12 [shape = 's32[1]{0}', space=sflag, size = 0x4, scoped, tag = 'scoped memory for decoder_forward_prepared.2']
    %15 = vsyncpa [#allocation7], 0
    %16 = vsyncpa [#allocation9], 0
    %17 = vsyncpa [#allocation12], 0
    loop: start=0, step=1, limit=4
    $region2: #{decoder_forward_prepared.2} parent=1 // loop_pre_header
      _
    $region3: #{decoder_forward_prepared.2} parent=1 // loop_header
      %s19 = sphi 0, %s23
      %p20 = scmp.ge.s32.totalorder %s19, 4
      %s26 = sphi 0, %s45
      %s27 = sphi 0, %s41
      %s28 = sphi 0, %s37
      %s29 = sphi 0, %s26
      %s30 = sphi 0, %s27
      %s31 = sphi 0, %s28
      %s32 = sphi 0, %s29
      %s33 = sphi 0, %s30
      %s34 = sphi 0, %s31
      %s50 = sphi 0, %s52
      %s53 = sphi 0, %s50
      %s54 = sphi 0, %s53
      %s70 = sphi 0, %s54
      %s80 = sphi 0, %s82
      %s83 = sphi 0, %s80
      %s84 = sphi 0, %s83
      %s100 = sphi 0, %s84
      %s104 = sphi 0, %s104
      %s106 = sphi 0, %s104
      %s107 = sphi 0, %s106
      %s121 = sphi 0, %s107
      %s125 = sphi 0, %s125
      %s127 = sphi 0, %s125
      %s128 = sphi 0, %s127
      %s142 = sphi 0, %s128
      %s146 = sphi 0, %s146
      %s148 = sphi 0, %s146
      %s149 = sphi 0, %s148
      %s163 = sphi 0, %s149
      %s167 = sphi 0, %s167
      %s169 = sphi 0, %s167
      %s170 = sphi 0, %s169
      %s184 = sphi 0, %s170
      %s188 = sphi 0, %s188
      %s190 = sphi 0, %s188
      %s191 = sphi 0, %s190
      %s205 = sphi 0, %s191
      %s209 = sphi 0, %s209
      %s211 = sphi 0, %s209
      %s212 = sphi 0, %s211
      %s226 = sphi 0, %s212
      %s230 = sphi 0, %s230
      %s232 = sphi 0, %s230
      %s233 = sphi 0, %s232
      %s247 = sphi 0, %s233
      %s251 = sphi 0, %s251
      %s253 = sphi 0, %s251
      %s254 = sphi 0, %s253
      %s268 = sphi 0, %s254
      %s276 = sphi 0, %s278
      %s279 = sphi 0, %s276
      %s280 = sphi 0, %s279
      %s296 = sphi 0, %s280
    $region4: #{decoder_forward_prepared.2} parent=1 // loop_header_branch
      %22 = sbr.rel (%p20) target = $region8
    $region5: #{decoder_forward_prepared.2} parent=1 // loop_body
      %s24 = ssub.s32 %s19, 1
      %s25 = ssub.s32 %s19, 2
      %s35 = sadd.s32 1, %s28
      %p36 = scmp.ge.s32.totalorder %s35, 1
      %s37 = scalar_select %p36, 0, %s35
      %s38 = sadd.s32 1, %s27
      %s39 = scalar_select %p36, %s38, %s27
      %p40 = scmp.ge.s32.totalorder %s39, 1
      %s41 = scalar_select %p40, 0, %s39
      %s42 = sadd.s32 1, %s26
      %s43 = scalar_select %p40, %s42, %s26
      %p44 = scmp.ge.s32.totalorder %s43, 2
      %s45 = scalar_select %p44, 0, %s43
      %s46 = ssub.s32 %s26, %s45
      %s47 = ssub.s32 %s27, %s41
      %s48 = sor.u32 %s46, %s47
      %p49 = scmp.eq.s32.totalorder %s48, 0
      %s51 = sadd.s32 %s50, 1
      %s52 = scalar_select %p49, %s50, %s51
      %p55 = pneg %p49
      %p56 = scmp.eq.s32.totalorder %s19, 1
      %p57 = por %p55, %p56
      %p58 = scmp.ne.s32.totalorder %s50, %s53
      %p59 = scmp.eq.s32.totalorder %s19, 0
      %p60 = por %p58, %p59
      %p61 = scmp.ne.s32.totalorder %s50, %s53
      %p62 = scmp.eq.s32.totalorder %s24, 1
      %p63 = por %p61, %p62
      %p64 = scmp.ne.s32.totalorder %s53, %s54
      %p65 = scmp.eq.s32.totalorder %s24, 0
      %p66 = por %p64, %p65
      %p67 = scmp.ne.s32.totalorder %s53, %s54
      %p68 = scmp.eq.s32.totalorder %s25, 1
      %p69 = por %p67, %p68
      %p71 = scmp.ne.s32.totalorder %s54, %s70
      %p72 = scmp.eq.s32.totalorder %s25, 0
      %p73 = por %p71, %p72
      %s74 = ssub.s32 %s26, %s45
      %s75 = ssub.s32 %s27, %s41
      %s76 = sor.u32 %s74, %s75
      %s77 = ssub.s32 %s28, %s37
      %s78 = sor.u32 %s76, %s77
      %p79 = scmp.eq.s32.totalorder %s78, 0
      %s81 = sadd.s32 %s80, 1
      %s82 = scalar_select %p79, %s80, %s81
      %p85 = pneg %p79
      %p86 = scmp.eq.s32.totalorder %s19, 1
      %p87 = por %p85, %p86
      %p88 = scmp.ne.s32.totalorder %s80, %s83
      %p89 = scmp.eq.s32.totalorder %s19, 0
      %p90 = por %p88, %p89
      %p91 = scmp.ne.s32.totalorder %s80, %s83
      %p92 = scmp.eq.s32.totalorder %s24, 1
      %p93 = por %p91, %p92
      %p94 = scmp.ne.s32.totalorder %s83, %s84
      %p95 = scmp.eq.s32.totalorder %s24, 0
      %p96 = por %p94, %p95
      %p97 = scmp.ne.s32.totalorder %s83, %s84
      %p98 = scmp.eq.s32.totalorder %s25, 1
      %p99 = por %p97, %p98
      %p101 = scmp.ne.s32.totalorder %s84, %s100
      %p102 = scmp.eq.s32.totalorder %s25, 0
      %p103 = por %p101, %p102
      %s105 = sadd.s32 %s104, 1
      %p108 = scmp.eq.s32.totalorder %s19, 1
      %p109 = scmp.ne.s32.totalorder %s104, %s106
      %p110 = scmp.eq.s32.totalorder %s19, 0
      %p111 = por %p109, %p110
      %p112 = scmp.ne.s32.totalorder %s104, %s106
      %p113 = scmp.eq.s32.totalorder %s24, 1
      %p114 = por %p112, %p113
      %p115 = scmp.ne.s32.totalorder %s106, %s107
      %p116 = scmp.eq.s32.totalorder %s24, 0
      %p117 = por %p115, %p116
      %p118 = scmp.ne.s32.totalorder %s106, %s107
      %p119 = scmp.eq.s32.totalorder %s25, 1
      %p120 = por %p118, %p119
      %p122 = scmp.ne.s32.totalorder %s107, %s121
      %p123 = scmp.eq.s32.totalorder %s25, 0
      %p124 = por %p122, %p123
      %s126 = sadd.s32 %s125, 1
      %p129 = scmp.eq.s32.totalorder %s19, 1
      %p130 = scmp.ne.s32.totalorder %s125, %s127
      %p131 = scmp.eq.s32.totalorder %s19, 0
      %p132 = por %p130, %p131
      %p133 = scmp.ne.s32.totalorder %s125, %s127
      %p134 = scmp.eq.s32.totalorder %s24, 1
      %p135 = por %p133, %p134
      %p136 = scmp.ne.s32.totalorder %s127, %s128
      %p137 = scmp.eq.s32.totalorder %s24, 0
      %p138 = por %p136, %p137
      %p139 = scmp.ne.s32.totalorder %s127, %s128
      %p140 = scmp.eq.s32.totalorder %s25, 1
      %p141 = por %p139, %p140
      %p143 = scmp.ne.s32.totalorder %s128, %s142
      %p144 = scmp.eq.s32.totalorder %s25, 0
      %p145 = por %p143, %p144
      %s147 = sadd.s32 %s146, 1
      %p150 = scmp.eq.s32.totalorder %s19, 1
      %p151 = scmp.ne.s32.totalorder %s146, %s148
      %p152 = scmp.eq.s32.totalorder %s19, 0
      %p153 = por %p151, %p152
      %p154 = scmp.ne.s32.totalorder %s146, %s148
      %p155 = scmp.eq.s32.totalorder %s24, 1
      %p156 = por %p154, %p155
      %p157 = scmp.ne.s32.totalorder %s148, %s149
      %p158 = scmp.eq.s32.totalorder %s24, 0
      %p159 = por %p157, %p158
      %p160 = scmp.ne.s32.totalorder %s148, %s149
      %p161 = scmp.eq.s32.totalorder %s25, 1
      %p162 = por %p160, %p161
      %p164 = scmp.ne.s32.totalorder %s149, %s163
      %p165 = scmp.eq.s32.totalorder %s25, 0
      %p166 = por %p164, %p165
      %s168 = sadd.s32 %s167, 1
      %p171 = scmp.eq.s32.totalorder %s19, 1
      %p172 = scmp.ne.s32.totalorder %s167, %s169
      %p173 = scmp.eq.s32.totalorder %s19, 0
      %p174 = por %p172, %p173
      %p175 = scmp.ne.s32.totalorder %s167, %s169
      %p176 = scmp.eq.s32.totalorder %s24, 1
      %p177 = por %p175, %p176
      %p178 = scmp.ne.s32.totalorder %s169, %s170
      %p179 = scmp.eq.s32.totalorder %s24, 0
      %p180 = por %p178, %p179
      %p181 = scmp.ne.s32.totalorder %s169, %s170
      %p182 = scmp.eq.s32.totalorder %s25, 1
      %p183 = por %p181, %p182
      %p185 = scmp.ne.s32.totalorder %s170, %s184
      %p186 = scmp.eq.s32.totalorder %s25, 0
      %p187 = por %p185, %p186
      %s189 = sadd.s32 %s188, 1
      %p192 = scmp.eq.s32.totalorder %s19, 1
      %p193 = scmp.ne.s32.totalorder %s188, %s190
      %p194 = scmp.eq.s32.totalorder %s19, 0
      %p195 = por %p193, %p194
      %p196 = scmp.ne.s32.totalorder %s188, %s190
      %p197 = scmp.eq.s32.totalorder %s24, 1
      %p198 = por %p196, %p197
      %p199 = scmp.ne.s32.totalorder %s190, %s191
      %p200 = scmp.eq.s32.totalorder %s24, 0
      %p201 = por %p199, %p200
      %p202 = scmp.ne.s32.totalorder %s190, %s191
      %p203 = scmp.eq.s32.totalorder %s25, 1
      %p204 = por %p202, %p203
      %p206 = scmp.ne.s32.totalorder %s191, %s205
      %p207 = scmp.eq.s32.totalorder %s25, 0
      %p208 = por %p206, %p207
      %s210 = sadd.s32 %s209, 1
      %p213 = scmp.eq.s32.totalorder %s19, 1
      %p214 = scmp.ne.s32.totalorder %s209, %s211
      %p215 = scmp.eq.s32.totalorder %s19, 0
      %p216 = por %p214, %p215
      %p217 = scmp.ne.s32.totalorder %s209, %s211
      %p218 = scmp.eq.s32.totalorder %s24, 1
      %p219 = por %p217, %p218
      %p220 = scmp.ne.s32.totalorder %s211, %s212
      %p221 = scmp.eq.s32.totalorder %s24, 0
      %p222 = por %p220, %p221
      %p223 = scmp.ne.s32.totalorder %s211, %s212
      %p224 = scmp.eq.s32.totalorder %s25, 1
      %p225 = por %p223, %p224
      %p227 = scmp.ne.s32.totalorder %s212, %s226
      %p228 = scmp.eq.s32.totalorder %s25, 0
      %p229 = por %p227, %p228
      %s231 = sadd.s32 %s230, 1
      %p234 = scmp.eq.s32.totalorder %s19, 1
      %p235 = scmp.ne.s32.totalorder %s230, %s232
      %p236 = scmp.eq.s32.totalorder %s19, 0
      %p237 = por %p235, %p236
      %p238 = scmp.ne.s32.totalorder %s230, %s232
      %p239 = scmp.eq.s32.totalorder %s24, 1
      %p240 = por %p238, %p239
      %p241 = scmp.ne.s32.totalorder %s232, %s233
      %p242 = scmp.eq.s32.totalorder %s24, 0
      %p243 = por %p241, %p242
      %p244 = scmp.ne.s32.totalorder %s232, %s233
      %p245 = scmp.eq.s32.totalorder %s25, 1
      %p246 = por %p244, %p245
      %p248 = scmp.ne.s32.totalorder %s233, %s247
      %p249 = scmp.eq.s32.totalorder %s25, 0
      %p250 = por %p248, %p249
      %s252 = sadd.s32 %s251, 1
      %p255 = scmp.eq.s32.totalorder %s19, 1
      %p256 = scmp.ne.s32.totalorder %s251, %s253
      %p257 = scmp.eq.s32.totalorder %s19, 0
      %p258 = por %p256, %p257
      %p259 = scmp.ne.s32.totalorder %s251, %s253
      %p260 = scmp.eq.s32.totalorder %s24, 1
      %p261 = por %p259, %p260
      %p262 = scmp.ne.s32.totalorder %s253, %s254
      %p263 = scmp.eq.s32.totalorder %s24, 0
      %p264 = por %p262, %p263
      %p265 = scmp.ne.s32.totalorder %s253, %s254
      %p266 = scmp.eq.s32.totalorder %s25, 1
      %p267 = por %p265, %p266
      %p269 = scmp.ne.s32.totalorder %s254, %s268
      %p270 = scmp.eq.s32.totalorder %s25, 0
      %p271 = por %p269, %p270
      %s272 = ssub.s32 %s26, %s45
      %s273 = ssub.s32 %s27, %s41
      %s274 = sor.u32 %s272, %s273
      %p275 = scmp.eq.s32.totalorder %s274, 0
      %s277 = sadd.s32 %s276, 1
      %s278 = scalar_select %p275, %s276, %s277
      %p281 = pneg %p275
      %p282 = scmp.eq.s32.totalorder %s19, 1
      %p283 = por %p281, %p282
      %p284 = scmp.ne.s32.totalorder %s276, %s279
      %p285 = scmp.eq.s32.totalorder %s19, 0
      %p286 = por %p284, %p285
      %p287 = scmp.ne.s32.totalorder %s276, %s279
      %p288 = scmp.eq.s32.totalorder %s24, 1
      %p289 = por %p287, %p288
      %p290 = scmp.ne.s32.totalorder %s279, %s280
      %p291 = scmp.eq.s32.totalorder %s24, 0
      %p292 = por %p290, %p291
      %p293 = scmp.ne.s32.totalorder %s279, %s280
      %p294 = scmp.eq.s32.totalorder %s25, 1
      %p295 = por %p293, %p294
      %p297 = scmp.ne.s32.totalorder %s280, %s296
      %p298 = scmp.eq.s32.totalorder %s25, 0
      %p299 = por %p297, %p298
      %p300 = scmp.le.s32.totalorder 1, %s19
      %p301 = scmp.lt.s32.totalorder %s19, 3
      %p302 = pnand %p300, %p301
      %p303 = pneg %p302
      // Predicated region
      $region9: #{decoder_forward_prepared.2} parent=5 // pred_check
        _
      $region10: #{decoder_forward_prepared.2} parent=5 // pred_check_branch
        %305 = sbr.rel (%p302) target = $region12
      $region11: #{decoder_forward_prepared.2} parent=5 // pred_region
        %s306 = ssub.s32 %s19, 1
        // Predicated region
        $region13: #{decoder_forward_prepared.2} parent=11 // pred_check
          %p307 = pneg %p117
        $region14: #{decoder_forward_prepared.2} parent=11 // pred_check_branch
          %309 = sbr.rel (%p307) target = $region16
        $region15: #{decoder_forward_prepared.2} parent=11 // pred_region
          _
        $region16: #{decoder_forward_prepared.2} parent=11 // pred_fallthru
          _
        // Predicated region
        $region17: #{decoder_forward_prepared.2} parent=11 // pred_check
          %p310 = pneg %p138
        $region18: #{decoder_forward_prepared.2} parent=11 // pred_check_branch
          %312 = sbr.rel (%p310) target = $region20
        $region19: #{decoder_forward_prepared.2} parent=11 // pred_region
          _
        $region20: #{decoder_forward_prepared.2} parent=11 // pred_fallthru
          _
        // Predicated region
        $region21: #{decoder_forward_prepared.2} parent=11 // pred_check
          %p313 = pneg %p159
        $region22: #{decoder_forward_prepared.2} parent=11 // pred_check_branch
          %315 = sbr.rel (%p313) target = $region24
        $region23: #{decoder_forward_prepared.2} parent=11 // pred_region
          %s317 = ssub.s32 256, 256
          %318 = vsyncadd [#allocation7], %s317
          %s319 = sshll.u32 [#allocation6], 4
          %s320 = int_to_ptr.vmem [resolvable:$true] %s319
          %325 = dma.hbm_to_vmem [thread:$0]  %s4, 256, %s320, [#allocation7], 64, 64, 4
        $region24: #{decoder_forward_prepared.2} parent=11 // pred_fallthru
          _
        // Predicated region
        $region25: #{decoder_forward_prepared.2} parent=11 // pred_check
          %p326 = pneg %p180
        $region26: #{decoder_forward_prepared.2} parent=11 // pred_check_branch
          %328 = sbr.rel (%p326) target = $region28
        $region27: #{decoder_forward_prepared.2} parent=11 // pred_region
          %s330 = ssub.s32 256, 256
          %331 = vsyncadd [#allocation9], %s330
          %s332 = sshll.u32 [#allocation8], 4
          %s333 = int_to_ptr.vmem [resolvable:$true] %s332
          %338 = dma.hbm_to_vmem [thread:$0]  %s5, 256, %s333, [#allocation9], 64, 64, 4
        $region28: #{decoder_forward_prepared.2} parent=11 // pred_fallthru
          _
        // Predicated region
        $region29: #{decoder_forward_prepared.2} parent=11 // pred_check
          %p339 = pneg %p201
        $region30: #{decoder_forward_prepared.2} parent=11 // pred_check_branch
          %341 = sbr.rel (%p339) target = $region32
        $region31: #{decoder_forward_prepared.2} parent=11 // pred_region
          %s343 = ssub.s32 256, 256
          %344 = vsyncadd [#allocation9], %s343
          %s345 = sshll.u32 [#allocation10], 4
          %s346 = int_to_ptr.vmem [resolvable:$true] %s345
          %351 = dma.hbm_to_vmem [thread:$0]  %s6, 256, %s346, [#allocation9], 64, 64, 4
        $region32: #{decoder_forward_prepared.2} parent=11 // pred_fallthru
          _
        // Predicated region
        $region33: #{decoder_forward_prepared.2} parent=11 // pred_check
          %p352 = pneg %p222
        $region34: #{decoder_forward_prepared.2} parent=11 // pred_check_branch
          %354 = sbr.rel (%p352) target = $region36
        $region35: #{decoder_forward_prepared.2} parent=11 // pred_region
          _
        $region36: #{decoder_forward_prepared.2} parent=11 // pred_fallthru
          _
        // Predicated region
        $region37: #{decoder_forward_prepared.2} parent=11 // pred_check
          %p355 = pneg %p243
        $region38: #{decoder_forward_prepared.2} parent=11 // pred_check_branch
          %357 = sbr.rel (%p355) target = $region40
        $region39: #{decoder_forward_prepared.2} parent=11 // pred_region
          %s359 = ssub.s32 256, 256
          %360 = vsyncadd [#allocation12], %s359
          %s361 = sshll.u32 [#allocation11], 4
          %s362 = int_to_ptr.vmem [resolvable:$true] %s361
          %367 = dma.hbm_to_vmem [thread:$0]  %s8, 256, %s362, [#allocation12], 128, 128, 8
        $region40: #{decoder_forward_prepared.2} parent=11 // pred_fallthru
          _
        // Predicated region
        $region41: #{decoder_forward_prepared.2} parent=11 // pred_check
          %p368 = pneg %p264
        $region42: #{decoder_forward_prepared.2} parent=11 // pred_check_branch
          %370 = sbr.rel (%p368) target = $region44
        $region43: #{decoder_forward_prepared.2} parent=11 // pred_region
          _
        $region44: #{decoder_forward_prepared.2} parent=11 // pred_fallthru
          _
      $region12: #{decoder_forward_prepared.2} parent=5 // pred_fallthru
        _
      %p371 = scmp.lt.s32.totalorder %s19, 2
      // Predicated region
      $region45: #{decoder_forward_prepared.2} parent=5 // pred_check
        %p372 = pneg %p371
      $region46: #{decoder_forward_prepared.2} parent=5 // pred_check_branch
        %374 = sbr.rel (%p372) target = $region48
      $region47: #{decoder_forward_prepared.2} parent=5 // pred_region
        // Predicated region
        $region49: #{decoder_forward_prepared.2} parent=47 // pred_check
          %p375 = pneg %p60
        $region50: #{decoder_forward_prepared.2} parent=47 // pred_check_branch
          %377 = sbr.rel (%p375) target = $region52
        $region51: #{decoder_forward_prepared.2} parent=47 // pred_region
          %p378 = scmp.lt.s32.totalorder %s26, 1
          %s379 = scalar_select %p378, %s26, 1
          %p380 = scmp.lt.s32.totalorder %s27, 0
          %s381 = scalar_select %p380, %s27, 0
          %s382 = sadd.s32 %s381, %s379
          %s383 = smul.addr %s382, 8
          %s384 = scalar_lea.vmem %s0, %s383
        $region52: #{decoder_forward_prepared.2} parent=47 // pred_fallthru
          _
        // Predicated region
        $region53: #{decoder_forward_prepared.2} parent=47 // pred_check
          %p385 = pneg %p90
        $region54: #{decoder_forward_prepared.2} parent=47 // pred_check_branch
          %387 = sbr.rel (%p385) target = $region56
        $region55: #{decoder_forward_prepared.2} parent=47 // pred_region
          %p388 = scmp.lt.s32.totalorder %s26, 1
          %s389 = scalar_select %p388, %s26, 1
          %p390 = scmp.lt.s32.totalorder %s27, 0
          %s391 = scalar_select %p390, %s27, 0
          %p392 = scmp.lt.s32.totalorder %s28, 0
          %s393 = scalar_select %p392, %s28, 0
          %s394 = sadd.s32 %s393, %s391
          %s395 = sadd.s32 %s394, %s389
          %s396 = smul.addr %s395, 2
          %s397 = scalar_lea.vmem %s1, %s396
        $region56: #{decoder_forward_prepared.2} parent=47 // pred_fallthru
          _
      $region48: #{decoder_forward_prepared.2} parent=5 // pred_fallthru
        _
      %p398 = scmp.le.s32.totalorder 1, %s19
      %p399 = scmp.lt.s32.totalorder %s19, 3
      %p400 = pnand %p398, %p399
      %p401 = pneg %p400
      // Predicated region
      $region57: #{decoder_forward_prepared.2} parent=5 // pred_check
        _
      $region58: #{decoder_forward_prepared.2} parent=5 // pred_check_branch
        %403 = sbr.rel (%p400) target = $region60
      $region59: #{decoder_forward_prepared.2} parent=5 // pred_region
        %s404 = ssub.s32 %s19, 1
        // Predicated region
        $region61: #{decoder_forward_prepared.2} parent=59 // pred_check
          %p405 = pneg %p159
        $region62: #{decoder_forward_prepared.2} parent=59 // pred_check_branch
          %407 = sbr.rel (%p405) target = $region64
        $region63: #{decoder_forward_prepared.2} parent=59 // pred_region
          %408 = dma.done [#allocation7], 256
        $region64: #{decoder_forward_prepared.2} parent=59 // pred_fallthru
          _
        // Predicated region
        $region65: #{decoder_forward_prepared.2} parent=59 // pred_check
          %p409 = pneg %p180
        $region66: #{decoder_forward_prepared.2} parent=59 // pred_check_branch
          %411 = sbr.rel (%p409) target = $region68
        $region67: #{decoder_forward_prepared.2} parent=59 // pred_region
          %412 = dma.done [#allocation9], 256
        $region68: #{decoder_forward_prepared.2} parent=59 // pred_fallthru
          _
        // Predicated region
        $region69: #{decoder_forward_prepared.2} parent=59 // pred_check
          %p413 = pneg %p201
        $region70: #{decoder_forward_prepared.2} parent=59 // pred_check_branch
          %415 = sbr.rel (%p413) target = $region72
        $region71: #{decoder_forward_prepared.2} parent=59 // pred_region
          %416 = dma.done [#allocation9], 256
        $region72: #{decoder_forward_prepared.2} parent=59 // pred_fallthru
          _
        // Predicated region
        $region73: #{decoder_forward_prepared.2} parent=59 // pred_check
          %p417 = pneg %p243
        $region74: #{decoder_forward_prepared.2} parent=59 // pred_check_branch
          %419 = sbr.rel (%p417) target = $region76
        $region75: #{decoder_forward_prepared.2} parent=59 // pred_region
          %420 = dma.done [#allocation12], 256
        $region76: #{decoder_forward_prepared.2} parent=59 // pred_fallthru
          _
        %p421 = scmp.lt.s32.totalorder %s29, 1
        %s422 = scalar_select %p421, %s29, 1
        %p423 = scmp.lt.s32.totalorder %s30, 0
        %s424 = scalar_select %p423, %s30, 0
        %s425 = sadd.s32 %s424, %s422
        %s426 = smul.addr %s425, 8
        %s427 = scalar_lea.vmem %s0, %s426
        %p428 = pneg %p66
        %p429 = pneg %p63
        %p430 = scmp.lt.s32.totalorder %s29, 1
        %s431 = scalar_select %p430, %s29, 1
        %p432 = scmp.lt.s32.totalorder %s30, 0
        %s433 = scalar_select %p432, %s30, 0
        %p434 = scmp.lt.s32.totalorder %s31, 0
        %s435 = scalar_select %p434, %s31, 0
        %s436 = sadd.s32 %s435, %s433
        %s437 = sadd.s32 %s436, %s431
        %s438 = smul.addr %s437, 2
        %s439 = scalar_lea.vmem %s1, %s438
        %p440 = pneg %p96
        %p441 = pneg %p93
        %p442 = pneg %p117
        %p443 = pneg %p114
        %p444 = pneg %p138
        %p445 = pneg %p135
        %p446 = pneg %p159
        %p447 = pneg %p156
        %p448 = pneg %p180
        %p449 = pneg %p177
        %p450 = pneg %p201
        %p451 = pneg %p198
        %p452 = pneg %p222
        %p453 = pneg %p219
        %p454 = pneg %p243
        %p455 = pneg %p240
        %p456 = pneg %p264
        %p457 = pneg %p261
        %p458 = pneg %p292
        %p459 = pneg %p289
        %p460 = scmp.lt.s32.totalorder %s29, 1
        %s461 = scalar_select %p460, %s29, 1
        %p462 = scmp.lt.s32.totalorder %s30, 0
        %s463 = scalar_select %p462, %s30, 0
        %s464 = sadd.s32 %s463, %s461
        %s465 = smul.addr %s464, 8
        %s466 = scalar_lea.vmem %s10, %s465
        %p467 = scmp.lt.s32.totalorder %s29, 1
        %s468 = scalar_select %p467, %s29, 1
        %p469 = scmp.lt.s32.totalorder %s30, 0
        %s470 = scalar_select %p469, %s30, 0
        %s471 = sadd.s32 %s470, %s468
        %s472 = smul.addr %s471, 8
        %s473 = scalar_lea.vmem %s0, %s472
        %p474 = scmp.lt.s32.totalorder %s29, 1
        %s475 = scalar_select %p474, %s29, 1
        %p476 = scmp.lt.s32.totalorder %s30, 0
        %s477 = scalar_select %p476, %s30, 0
        %p478 = scmp.lt.s32.totalorder %s31, 0
        %s479 = scalar_select %p478, %s31, 0
        %s480 = sadd.s32 %s479, %s477
        %s481 = sadd.s32 %s480, %s475
        %s482 = smul.addr %s481, 2
        %s483 = scalar_lea.vmem %s1, %s482
        %p484 = scmp.lt.s32.totalorder %s29, 1
        %s485 = scalar_select %p484, %s29, 1
        %p486 = scmp.lt.s32.totalorder %s30, 0
        %s487 = scalar_select %p486, %s30, 0
        %s488 = sadd.s32 %s487, %s485
        %s489 = smul.addr %s488, 8
        %s490 = scalar_lea.vmem %s10, %s489
        %v492 = vld [vmem:[#allocation11] sm:$0xff]
        %v493 = vld [vmem:[#allocation11 + $0x8] sm:$0x1]
        %p494 = scmp.eq.s32.totalorder %s31, 0
        // Predicated region
        $region77: #{decoder_forward_prepared.2} parent=59 // pred_check
          %p495 = pneg %p494
        $region78: #{decoder_forward_prepared.2} parent=59 // pred_check_branch
          %497 = sbr.rel (%p495) target = $region80
        $region79: #{decoder_forward_prepared.2} parent=59 // pred_region
          %vm498 = vcmask 7168
          %499 = vst.msk [vmem:[#allocation3] sm:$0xff] %vm498, -1e+30
          %500 = vst.msk [vmem:[#allocation3 + $0x8] sm:$0xff] %vm498, -1e+30
          %501 = vst.msk [vmem:[#allocation3 + $0x10] sm:$0xff] %vm498, -1e+30
          %502 = vst.msk [vmem:[#allocation3 + $0x18] sm:$0xff] %vm498, -1e+30
          %503 = vst.msk [vmem:[#allocation4] sm:$0xff] %vm498, 0.0
          %504 = vst.msk [vmem:[#allocation4 + $0x8] sm:$0xff] %vm498, 0.0
          %505 = vst.msk [vmem:[#allocation4 + $0x10] sm:$0xff] %vm498, 0.0
          %506 = vst.msk [vmem:[#allocation4 + $0x18] sm:$0xff] %vm498, 0.0
          %vm507 = vcmask 64512
          %508 = vst.msk [vmem:[#allocation5] sm:$0xff] %vm507, 0.0
          %509 = vst.msk [vmem:[#allocation5 + $0x8] sm:$0xff] %vm507, 0.0
          %510 = vst.msk [vmem:[#allocation5 + $0x10] sm:$0xff] %vm507, 0.0
          %511 = vst.msk [vmem:[#allocation5 + $0x18] sm:$0xff] %vm507, 0.0
          %v512 = vld [vmem:[%s473] sm:$0xff]
          %v513 = vpack.c.bf16 %v512, %v512
          %v514 = vld [vmem:[%s2] sm:$0xf]
          %v515 = vld [vmem:[%s2 + $0x4] sm:$0xf]
          %v516 = vld [vmem:[%s2 + $0x8] sm:$0xf]
          %v517 = vld [vmem:[%s2 + $0xc] sm:$0xf]
          %v518 = vlaneseq
          %v519 = vshrl.u32 %v518, 7
          %v520 = vsub.s32 0, %v519
          %v521 = vrot.slane %v492, %v520
          %v526 = vunpack.c.l.b16 %v514
          %v527 = vunpack.c.l.b16 %v515
          %v528 = vunpack.c.l.b16 %v516
          %v529 = vunpack.c.l.b16 %v517
          %v530 = vpack.c.b16 %v527, %v526
          %v531 = vpack.c.b16 %v529, %v528
          %vm534 = vcmask 261120
          %v536 = vsel %vm534, %v513, 0
          %538 = vmatprep.subr.bf16.mxu0 0
          %539 = vmatpush1.bf16.msra.mxu0 0
          %540 = vmatprep.subr.bf16.mxu0 0
          %541 = vmatpush1.bf16.msra.mxu0 0
          %542 = vmatprep.subr.bf16.mxu0 0
          %543 = vmatpush1.bf16.msra.mxu0 0
          %544 = vmatprep.subr.bf16.mxu0 0
          %545 = vmatpush1.bf16.msra.mxu0 0
          %546 = vmatprep.subr.bf16.mxu0 0
          %547 = vmatpush1.bf16.msra.mxu0 0
          %548 = vmatprep.subr.bf16.mxu0 0
          %549 = vmatpush1.bf16.msra.mxu0 0
          %550 = vmatprep.subr.bf16.mxu0 0
          %551 = vmatpush1.bf16.msra.mxu0 %v531
          %552 = vmatprep.subr.bf16.mxu0 0
          %553 = vmatpush1.bf16.msra.mxu0 %v530
          %554 = vmatprep.subr.bf16.mxu0 0
          %555 = vmatpush2.bf16.msra.mxu0 0
          %556 = vmatprep.subr.bf16.mxu0 0
          %557 = vmatpush2.bf16.msra.mxu0 0
          %558 = vmatprep.subr.bf16.mxu0 0
          %559 = vmatpush2.bf16.msra.mxu0 0
          %560 = vmatprep.subr.bf16.mxu0 0
          %561 = vmatpush2.bf16.msra.mxu0 0
          %562 = vmatprep.subr.bf16.mxu0 0
          %563 = vmatpush2.bf16.msra.mxu0 0
          %564 = vmatprep.subr.bf16.mxu0 0
          %565 = vmatpush2.bf16.msra.mxu0 0
          %566 = vmatprep.subr.bf16.mxu0 0
          %567 = vmatpush2.bf16.msra.mxu0 0
          %568 = vmatprep.subr.bf16.mxu0 0
          %569 = vmatpush2.bf16.msra.mxu0 0
          %570 = vmatprep.mubr.bf16.mxu0 0
          %571 = vmatmul.mubr.bf16.gmra.mxu0 %v536
          %v572 = vpop.f32.mrf.mxu0
          %v573 = vadd.f32 %v521, %v572
          %v574 = vpop.f32.mrf.mxu0
          %v575 = vpop.f32.mrf.mxu0
          %v576 = vpop.f32.mrf.mxu0
          %577 = vdwg.mxu0
          %579 = vrot.lane.b32.xlu0 %v573, 120
          %v580 = vpop.permute.xlu0 %579
          %582 = vrot.lane.b32.xlu0 %v573, 112
          %v583 = vpop.permute.xlu0 %582
          %585 = vrot.lane.b32.xlu0 %v573, 104
          %v586 = vpop.permute.xlu0 %585
          %v588 = vcombine.low %v573, %v583
          %v589 = vcombine.high %v573, %v583
          %v591 = vunpack.c.l.s4 1983009808
          %v592 = vunpack.c.0.s8 %v591
          %v593 = vlaneseq
          %v594 = vshrl.u32 %v593, 7
          %v595 = vsub.s32 %v592, %v594
          %v596 = vrot.slane %v588, %v595
          %v598 = vunpack.c.l.s4 1983009808
          %v599 = vunpack.c.0.s8 %v598
          %v600 = vlaneseq
          %v601 = vshrl.u32 %v600, 7
          %v602 = vsub.s32 %v599, %v601
          %v603 = vrot.slane %v589, %v602
          %v604 = vcombine.low %v580, %v586
          %v605 = vcombine.high %v580, %v586
          %v607 = vunpack.c.l.s4 1983009808
          %v608 = vunpack.c.0.s8 %v607
          %v609 = vlaneseq
          %v610 = vshrl.u32 %v609, 7
          %v611 = vsub.s32 %v608, %v610
          %v612 = vrot.slane %v604, %v611
          %v614 = vunpack.c.l.s4 1983009808
          %v615 = vunpack.c.0.s8 %v614
          %v616 = vlaneseq
          %v617 = vshrl.u32 %v616, 7
          %v618 = vsub.s32 %v615, %v617
          %v619 = vrot.slane %v605, %v618
          %v620 = vcombine.low %v596, %v612
          %v621 = vcombine.high %v596, %v612
          %v623 = vunpack.c.l.s4 1934713408
          %v624 = vunpack.c.0.s8 %v623
          %v625 = vlaneseq
          %v626 = vshrl.u32 %v625, 7
          %v627 = vsub.s32 %v624, %v626
          %v628 = vrot.slane %v620, %v627
          %v630 = vunpack.c.l.s4 1934713408
          %v631 = vunpack.c.0.s8 %v630
          %v632 = vlaneseq
          %v633 = vshrl.u32 %v632, 7
          %v634 = vsub.s32 %v631, %v633
          %v635 = vrot.slane %v621, %v634
          %v636 = vcombine.low %v603, %v619
          %v637 = vcombine.high %v603, %v619
          %v639 = vunpack.c.l.s4 1934713408
          %v640 = vunpack.c.0.s8 %v639
          %v641 = vlaneseq
          %v642 = vshrl.u32 %v641, 7
          %v643 = vsub.s32 %v640, %v642
          %v644 = vrot.slane %v636, %v643
          %v646 = vunpack.c.l.s4 1934713408
          %v647 = vunpack.c.0.s8 %v646
          %v648 = vlaneseq
          %v649 = vshrl.u32 %v648, 7
          %v650 = vsub.s32 %v647, %v649
          %v651 = vrot.slane %v637, %v650
          %v652 = vcombine.high %v628, 0.0
          %v653 = vcombine.high %v635, 0.0
          %v654 = vcombine.high %v644, 0.0
          %v655 = vcombine.high %v651, 0.0
          %v656 = vpack.c.bf16 %v628, %v628
          %v657 = vpack.c.bf16 %v652, %v652
          %v658 = vpack.c.bf16 %v635, %v635
          %v659 = vpack.c.bf16 %v653, %v653
          %v660 = vpack.c.bf16 %v644, %v644
          %v661 = vpack.c.bf16 %v654, %v654
          %v662 = vpack.c.bf16 %v651, %v651
          %v663 = vpack.c.bf16 %v655, %v655
          %vm664 = vcmask 58368
          %665 = vst.msk [vmem:[#allocation2] sm:$0x3] %vm664, %v656
          %666 = vst.msk [vmem:[#allocation2 + $0x2] sm:$0x3] %vm664, %v657
          %667 = vst.msk [vmem:[#allocation2 + $0x4] sm:$0x3] %vm664, %v658
          %668 = vst.msk [vmem:[#allocation2 + $0x6] sm:$0x3] %vm664, %v659
          %669 = vst.msk [vmem:[#allocation2 + $0x8] sm:$0x3] %vm664, %v660
          %670 = vst.msk [vmem:[#allocation2 + $0xa] sm:$0x3] %vm664, %v661
          %671 = vst.msk [vmem:[#allocation2 + $0xc] sm:$0x3] %vm664, %v662
          %672 = vst.msk [vmem:[#allocation2 + $0xe] sm:$0x3] %vm664, %v663
        $region80: #{decoder_forward_prepared.2} parent=59 // pred_fallthru
          _
        %v673 = vld [vmem:[%s473] sm:$0xff]
        %v674 = vpack.c.bf16 %v673, %v673
        %v675 = vld [vmem:[%s3] sm:$0xf]
        %v676 = vld [vmem:[%s3 + $0x4] sm:$0xf]
        %v677 = vld [vmem:[%s3 + $0x8] sm:$0xf]
        %v678 = vld [vmem:[%s3 + $0xc] sm:$0xf]
        %v679 = vlaneseq
        %v680 = vshrl.u32 %v679, 7
        %v681 = vsub.s32 1, %v680
        %v682 = vrot.slane %v492, %v681
        %v687 = vunpack.c.l.b16 %v675
        %v688 = vunpack.c.l.b16 %v676
        %v689 = vunpack.c.l.b16 %v677
        %v690 = vunpack.c.l.b16 %v678
        %v691 = vpack.c.b16 %v688, %v687
        %v692 = vpack.c.b16 %v690, %v689
        %vm695 = vcmask 261120
        %v697 = vsel %vm695, %v674, 0
        %699 = vmatprep.subr.bf16.mxu0 0
        %700 = vmatpush1.bf16.msra.mxu0 0
        %701 = vmatprep.subr.bf16.mxu0 0
        %702 = vmatpush1.bf16.msra.mxu0 0
        %703 = vmatprep.subr.bf16.mxu0 0
        %704 = vmatpush1.bf16.msra.mxu0 0
        %705 = vmatprep.subr.bf16.mxu0 0
        %706 = vmatpush1.bf16.msra.mxu0 0
        %707 = vmatprep.subr.bf16.mxu0 0
        %708 = vmatpush1.bf16.msra.mxu0 0
        %709 = vmatprep.subr.bf16.mxu0 0
        %710 = vmatpush1.bf16.msra.mxu0 0
        %711 = vmatprep.subr.bf16.mxu0 0
        %712 = vmatpush1.bf16.msra.mxu0 %v692
        %713 = vmatprep.subr.bf16.mxu0 0
        %714 = vmatpush1.bf16.msra.mxu0 %v691
        %715 = vmatprep.subr.bf16.mxu0 0
        %716 = vmatpush2.bf16.msra.mxu0 0
        %717 = vmatprep.subr.bf16.mxu0 0
        %718 = vmatpush2.bf16.msra.mxu0 0
        %719 = vmatprep.subr.bf16.mxu0 0
        %720 = vmatpush2.bf16.msra.mxu0 0
        %721 = vmatprep.subr.bf16.mxu0 0
        %722 = vmatpush2.bf16.msra.mxu0 0
        %723 = vmatprep.subr.bf16.mxu0 0
        %724 = vmatpush2.bf16.msra.mxu0 0
        %725 = vmatprep.subr.bf16.mxu0 0
        %726 = vmatpush2.bf16.msra.mxu0 0
        %727 = vmatprep.subr.bf16.mxu0 0
        %728 = vmatpush2.bf16.msra.mxu0 0
        %729 = vmatprep.subr.bf16.mxu0 0
        %730 = vmatpush2.bf16.msra.mxu0 0
        %731 = vmatprep.mubr.bf16.mxu0 0
        %732 = vmatmul.mubr.bf16.gmra.mxu0 %v697
        %v733 = vpop.f32.mrf.mxu0
        %v734 = vadd.f32 %v682, %v733
        %v735 = vpop.f32.mrf.mxu0
        %v736 = vpop.f32.mrf.mxu0
        %v737 = vpop.f32.mrf.mxu0
        %738 = vdwg.mxu0
        %v739 = vld [vmem:[#allocation6] sm:$0xf]
        %v740 = vld [vmem:[#allocation6 + $0x4] sm:$0xf]
        %v741 = vld [vmem:[#allocation6 + $0x8] sm:$0xf]
        %v742 = vld [vmem:[#allocation6 + $0xc] sm:$0xf]
        %v743 = vlaneseq
        %v744 = vshrl.u32 %v743, 7
        %v745 = vsub.s32 2, %v744
        %v746 = vrot.slane %v492, %v745
        %v751 = vunpack.c.l.b16 %v739
        %v752 = vunpack.c.l.b16 %v740
        %v753 = vunpack.c.l.b16 %v741
        %v754 = vunpack.c.l.b16 %v742
        %v755 = vpack.c.b16 %v752, %v751
        %v756 = vpack.c.b16 %v754, %v753
        %759 = vmatprep.subr.bf16.mxu0 0
        %760 = vmatpush1.bf16.msra.mxu0 0
        %761 = vmatprep.subr.bf16.mxu0 0
        %762 = vmatpush1.bf16.msra.mxu0 0
        %763 = vmatprep.subr.bf16.mxu0 0
        %764 = vmatpush1.bf16.msra.mxu0 0
        %765 = vmatprep.subr.bf16.mxu0 0
        %766 = vmatpush1.bf16.msra.mxu0 0
        %767 = vmatprep.subr.bf16.mxu0 0
        %768 = vmatpush1.bf16.msra.mxu0 0
        %769 = vmatprep.subr.bf16.mxu0 0
        %770 = vmatpush1.bf16.msra.mxu0 0
        %771 = vmatprep.subr.bf16.mxu0 0
        %772 = vmatpush1.bf16.msra.mxu0 %v756
        %773 = vmatprep.subr.bf16.mxu0 0
        %774 = vmatpush1.bf16.msra.mxu0 %v755
        %775 = vmatprep.subr.bf16.mxu0 0
        %776 = vmatpush2.bf16.msra.mxu0 0
        %777 = vmatprep.subr.bf16.mxu0 0
        %778 = vmatpush2.bf16.msra.mxu0 0
        %779 = vmatprep.subr.bf16.mxu0 0
        %780 = vmatpush2.bf16.msra.mxu0 0
        %781 = vmatprep.subr.bf16.mxu0 0
        %782 = vmatpush2.bf16.msra.mxu0 0
        %783 = vmatprep.subr.bf16.mxu0 0
        %784 = vmatpush2.bf16.msra.mxu0 0
        %785 = vmatprep.subr.bf16.mxu0 0
        %786 = vmatpush2.bf16.msra.mxu0 0
        %787 = vmatprep.subr.bf16.mxu0 0
        %788 = vmatpush2.bf16.msra.mxu0 0
        %789 = vmatprep.subr.bf16.mxu0 0
        %790 = vmatpush2.bf16.msra.mxu0 0
        %791 = vmatprep.mubr.bf16.mxu0 0
        %792 = vmatmul.mubr.bf16.gmra.mxu0 %v697
        %v793 = vpop.f32.mrf.mxu0
        %v794 = vadd.f32 %v746, %v793
        %v795 = vpop.f32.mrf.mxu0
        %v796 = vpop.f32.mrf.mxu0
        %v797 = vpop.f32.mrf.mxu0
        %798 = vdwg.mxu0
        %800 = vrot.lane.b32.xlu0 %v734, 120
        %v801 = vpop.permute.xlu0 %800
        %803 = vrot.lane.b32.xlu0 %v734, 112
        %v804 = vpop.permute.xlu0 %803
        %806 = vrot.lane.b32.xlu0 %v734, 104
        %v807 = vpop.permute.xlu0 %806
        %v809 = vcombine.low %v734, %v804
        %v810 = vcombine.high %v734, %v804
        %v812 = vunpack.c.l.s4 1983009808
        %v813 = vunpack.c.0.s8 %v812
        %v814 = vlaneseq
        %v815 = vshrl.u32 %v814, 7
        %v816 = vsub.s32 %v813, %v815
        %v817 = vrot.slane %v809, %v816
        %v819 = vunpack.c.l.s4 1983009808
        %v820 = vunpack.c.0.s8 %v819
        %v821 = vlaneseq
        %v822 = vshrl.u32 %v821, 7
        %v823 = vsub.s32 %v820, %v822
        %v824 = vrot.slane %v810, %v823
        %v825 = vcombine.low %v801, %v807
        %v826 = vcombine.high %v801, %v807
        %v828 = vunpack.c.l.s4 1983009808
        %v829 = vunpack.c.0.s8 %v828
        %v830 = vlaneseq
        %v831 = vshrl.u32 %v830, 7
        %v832 = vsub.s32 %v829, %v831
        %v833 = vrot.slane %v825, %v832
        %v835 = vunpack.c.l.s4 1983009808
        %v836 = vunpack.c.0.s8 %v835
        %v837 = vlaneseq
        %v838 = vshrl.u32 %v837, 7
        %v839 = vsub.s32 %v836, %v838
        %v840 = vrot.slane %v826, %v839
        %v841 = vcombine.low %v817, %v833
        %v842 = vcombine.high %v817, %v833
        %v844 = vunpack.c.l.s4 1934713408
        %v845 = vunpack.c.0.s8 %v844
        %v846 = vlaneseq
        %v847 = vshrl.u32 %v846, 7
        %v848 = vsub.s32 %v845, %v847
        %v849 = vrot.slane %v841, %v848
        %v851 = vunpack.c.l.s4 1934713408
        %v852 = vunpack.c.0.s8 %v851
        %v853 = vlaneseq
        %v854 = vshrl.u32 %v853, 7
        %v855 = vsub.s32 %v852, %v854
        %v856 = vrot.slane %v842, %v855
        %v857 = vcombine.low %v824, %v840
        %v858 = vcombine.high %v824, %v840
        %v860 = vunpack.c.l.s4 1934713408
        %v861 = vunpack.c.0.s8 %v860
        %v862 = vlaneseq
        %v863 = vshrl.u32 %v862, 7
        %v864 = vsub.s32 %v861, %v863
        %v865 = vrot.slane %v857, %v864
        %v867 = vunpack.c.l.s4 1934713408
        %v868 = vunpack.c.0.s8 %v867
        %v869 = vlaneseq
        %v870 = vshrl.u32 %v869, 7
        %v871 = vsub.s32 %v868, %v870
        %v872 = vrot.slane %v858, %v871
        %v873 = vcombine.high %v849, 0.0
        %v874 = vcombine.high %v856, 0.0
        %v875 = vcombine.high %v865, 0.0
        %v876 = vcombine.high %v872, 0.0
        %v877 = vpack.c.bf16 %v849, %v849
        %v878 = vpack.c.bf16 %v873, %v873
        %v879 = vpack.c.bf16 %v856, %v856
        %v880 = vpack.c.bf16 %v874, %v874
        %v881 = vpack.c.bf16 %v865, %v865
        %v882 = vpack.c.bf16 %v875, %v875
        %v883 = vpack.c.bf16 %v872, %v872
        %v884 = vpack.c.bf16 %v876, %v876
        %886 = vrot.lane.b32.xlu0 %v794, 120
        %v887 = vpop.permute.xlu0 %886
        %889 = vrot.lane.b32.xlu0 %v794, 112
        %v890 = vpop.permute.xlu0 %889
        %892 = vrot.lane.b32.xlu0 %v794, 104
        %v893 = vpop.permute.xlu0 %892
        %v895 = vcombine.low %v794, %v890
        %v896 = vcombine.high %v794, %v890
        %v898 = vunpack.c.l.s4 1983009808
        %v899 = vunpack.c.0.s8 %v898
        %v900 = vlaneseq
        %v901 = vshrl.u32 %v900, 7
        %v902 = vsub.s32 %v899, %v901
        %v903 = vrot.slane %v895, %v902
        %v905 = vunpack.c.l.s4 1983009808
        %v906 = vunpack.c.0.s8 %v905
        %v907 = vlaneseq
        %v908 = vshrl.u32 %v907, 7
        %v909 = vsub.s32 %v906, %v908
        %v910 = vrot.slane %v896, %v909
        %v911 = vcombine.low %v887, %v893
        %v912 = vcombine.high %v887, %v893
        %v914 = vunpack.c.l.s4 1983009808
        %v915 = vunpack.c.0.s8 %v914
        %v916 = vlaneseq
        %v917 = vshrl.u32 %v916, 7
        %v918 = vsub.s32 %v915, %v917
        %v919 = vrot.slane %v911, %v918
        %v921 = vunpack.c.l.s4 1983009808
        %v922 = vunpack.c.0.s8 %v921
        %v923 = vlaneseq
        %v924 = vshrl.u32 %v923, 7
        %v925 = vsub.s32 %v922, %v924
        %v926 = vrot.slane %v912, %v925
        %v927 = vcombine.low %v903, %v919
        %v928 = vcombine.high %v903, %v919
        %v930 = vunpack.c.l.s4 1934713408
        %v931 = vunpack.c.0.s8 %v930
        %v932 = vlaneseq
        %v933 = vshrl.u32 %v932, 7
        %v934 = vsub.s32 %v931, %v933
        %v935 = vrot.slane %v927, %v934
        %v937 = vunpack.c.l.s4 1934713408
        %v938 = vunpack.c.0.s8 %v937
        %v939 = vlaneseq
        %v940 = vshrl.u32 %v939, 7
        %v941 = vsub.s32 %v938, %v940
        %v942 = vrot.slane %v928, %v941
        %v943 = vcombine.low %v910, %v926
        %v944 = vcombine.high %v910, %v926
        %v946 = vunpack.c.l.s4 1934713408
        %v947 = vunpack.c.0.s8 %v946
        %v948 = vlaneseq
        %v949 = vshrl.u32 %v948, 7
        %v950 = vsub.s32 %v947, %v949
        %v951 = vrot.slane %v943, %v950
        %v953 = vunpack.c.l.s4 1934713408
        %v954 = vunpack.c.0.s8 %v953
        %v955 = vlaneseq
        %v956 = vshrl.u32 %v955, 7
        %v957 = vsub.s32 %v954, %v956
        %v958 = vrot.slane %v944, %v957
        %v959 = vcombine.high %v935, 0.0
        %v960 = vcombine.high %v942, 0.0
        %v961 = vcombine.high %v951, 0.0
        %v962 = vcombine.high %v958, 0.0
        %v963 = vpack.c.bf16 %v935, %v935
        %v964 = vpack.c.bf16 %v959, %v959
        %v965 = vpack.c.bf16 %v942, %v942
        %v966 = vpack.c.bf16 %v960, %v960
        %v967 = vpack.c.bf16 %v951, %v951
        %v968 = vpack.c.bf16 %v961, %v961
        %v969 = vpack.c.bf16 %v958, %v958
        %v970 = vpack.c.bf16 %v962, %v962
        %v971 = vld [vmem:[#allocation2] sm:$0x3]
        %v972 = vld [vmem:[#allocation2 + $0x2] sm:$0x3]
        %v973 = vld [vmem:[#allocation2 + $0x4] sm:$0x3]
        %v974 = vld [vmem:[#allocation2 + $0x6] sm:$0x3]
        %v975 = vld [vmem:[#allocation2 + $0x8] sm:$0x3]
        %v976 = vld [vmem:[#allocation2 + $0xa] sm:$0x3]
        %v977 = vld [vmem:[#allocation2 + $0xc] sm:$0x3]
        %v978 = vld [vmem:[#allocation2 + $0xe] sm:$0x3]
        %v979 = vcombine.low %v971, %v973
        %v981 = vunpack.c.l.s4 1934713408
        %v982 = vunpack.c.0.s8 %v981
        %v983 = vlaneseq
        %v984 = vshrl.u32 %v983, 7
        %v985 = vsub.s32 %v982, %v984
        %v986 = vrot.slane %v979, %v985
        %v987 = vcombine.high %v986, 0
        %v988 = vcombine.low %v972, %v974
        %v990 = vunpack.c.l.s4 1934713408
        %v991 = vunpack.c.0.s8 %v990
        %v992 = vlaneseq
        %v993 = vshrl.u32 %v992, 7
        %v994 = vsub.s32 %v991, %v993
        %v995 = vrot.slane %v988, %v994
        %v996 = vcombine.high %v995, 0
        %v997 = vcombine.low %v975, %v977
        %v999 = vunpack.c.l.s4 1934713408
        %v1000 = vunpack.c.0.s8 %v999
        %v1001 = vlaneseq
        %v1002 = vshrl.u32 %v1001, 7
        %v1003 = vsub.s32 %v1000, %v1002
        %v1004 = vrot.slane %v997, %v1003
        %v1005 = vcombine.high %v1004, 0
        %v1006 = vcombine.low %v976, %v978
        %v1008 = vunpack.c.l.s4 1934713408
        %v1009 = vunpack.c.0.s8 %v1008
        %v1010 = vlaneseq
        %v1011 = vshrl.u32 %v1010, 7
        %v1012 = vsub.s32 %v1009, %v1011
        %v1013 = vrot.slane %v1006, %v1012
        %v1014 = vcombine.high %v1013, 0
        %v1017 = vpack.i.b16 %v995, %v986
        %v1018 = vshrl.u32 %v986, 16
        %v1019 = vshrl.u32 %v995, 16
        %v1020 = vpack.i.b16 %v1019, %v1018
        %v1023 = vpack.i.b16 %v996, %v987
        %v1024 = vshrl.u32 %v987, 16
        %v1025 = vshrl.u32 %v996, 16
        %v1026 = vpack.i.b16 %v1025, %v1024
        %v1029 = vpack.i.b16 %v1013, %v1004
        %v1030 = vshrl.u32 %v1004, 16
        %v1031 = vshrl.u32 %v1013, 16
        %v1032 = vpack.i.b16 %v1031, %v1030
        %v1035 = vpack.i.b16 %v1014, %v1005
        %v1036 = vshrl.u32 %v1005, 16
        %v1037 = vshrl.u32 %v1014, 16
        %v1038 = vpack.i.b16 %v1037, %v1036
        %1039 = vxpose.xlu0.c.b16.start [1/8] %v877, 128
        %1040 = vxpose.xlu0.c.b16.cont [2/8] 0, 128
        %1041 = vxpose.xlu0.c.b16.cont [3/8] 0, 128
        %1042 = vxpose.xlu0.c.b16.cont [4/8] 0, 128
        %1043 = vxpose.xlu0.c.b16.cont [5/8] 0, 128
        %1044 = vxpose.xlu0.c.b16.cont [6/8] 0, 128
        %1045 = vxpose.xlu0.c.b16.cont [7/8] 0, 128
        %1046 = vxpose.xlu0.c.b16.end [8/8] 0, 128
        %v1047 = vpop.trf.xlu0
        %v1048 = vpop.trf.xlu0
        %v1049 = vpop.trf.xlu0
        %v1050 = vpop.trf.xlu0
        %v1051 = vpop.trf.xlu0
        %v1052 = vpop.trf.xlu0
        %v1053 = vpop.trf.xlu0
        %v1054 = vpop.trf.xlu0
        %1055 = vxpose.xlu0.c.b16.start [1/8] %v878, 128
        %1056 = vxpose.xlu0.c.b16.cont [2/8] 0, 128
        %1057 = vxpose.xlu0.c.b16.cont [3/8] 0, 128
        %1058 = vxpose.xlu0.c.b16.cont [4/8] 0, 128
        %1059 = vxpose.xlu0.c.b16.cont [5/8] 0, 128
        %1060 = vxpose.xlu0.c.b16.cont [6/8] 0, 128
        %1061 = vxpose.xlu0.c.b16.cont [7/8] 0, 128
        %1062 = vxpose.xlu0.c.b16.end [8/8] 0, 128
        %v1063 = vpop.trf.xlu0
        %v1064 = vpop.trf.xlu0
        %v1065 = vpop.trf.xlu0
        %v1066 = vpop.trf.xlu0
        %v1067 = vpop.trf.xlu0
        %v1068 = vpop.trf.xlu0
        %v1069 = vpop.trf.xlu0
        %v1070 = vpop.trf.xlu0
        %1071 = vxpose.xlu0.c.b16.start [1/8] %v879, 128
        %1072 = vxpose.xlu0.c.b16.cont [2/8] 0, 128
        %1073 = vxpose.xlu0.c.b16.cont [3/8] 0, 128
        %1074 = vxpose.xlu0.c.b16.cont [4/8] 0, 128
        %1075 = vxpose.xlu0.c.b16.cont [5/8] 0, 128
        %1076 = vxpose.xlu0.c.b16.cont [6/8] 0, 128
        %1077 = vxpose.xlu0.c.b16.cont [7/8] 0, 128
        %1078 = vxpose.xlu0.c.b16.end [8/8] 0, 128
        %v1079 = vpop.trf.xlu0
        %v1080 = vpop.trf.xlu0
        %v1081 = vpop.trf.xlu0
        %v1082 = vpop.trf.xlu0
        %v1083 = vpop.trf.xlu0
        %v1084 = vpop.trf.xlu0
        %v1085 = vpop.trf.xlu0
        %v1086 = vpop.trf.xlu0
        %1087 = vxpose.xlu0.c.b16.start [1/8] %v880, 128
        %1088 = vxpose.xlu0.c.b16.cont [2/8] 0, 128
        %1089 = vxpose.xlu0.c.b16.cont [3/8] 0, 128
        %1090 = vxpose.xlu0.c.b16.cont [4/8] 0, 128
        %1091 = vxpose.xlu0.c.b16.cont [5/8] 0, 128
        %1092 = vxpose.xlu0.c.b16.cont [6/8] 0, 128
        %1093 = vxpose.xlu0.c.b16.cont [7/8] 0, 128
        %1094 = vxpose.xlu0.c.b16.end [8/8] 0, 128
        %v1095 = vpop.trf.xlu0
        %v1096 = vpop.trf.xlu0
        %v1097 = vpop.trf.xlu0
        %v1098 = vpop.trf.xlu0
        %v1099 = vpop.trf.xlu0
        %v1100 = vpop.trf.xlu0
        %v1101 = vpop.trf.xlu0
        %v1102 = vpop.trf.xlu0
        %1103 = vxpose.xlu0.c.b16.start [1/8] %v881, 128
        %1104 = vxpose.xlu0.c.b16.cont [2/8] 0, 128
        %1105 = vxpose.xlu0.c.b16.cont [3/8] 0, 128
        %1106 = vxpose.xlu0.c.b16.cont [4/8] 0, 128
        %1107 = vxpose.xlu0.c.b16.cont [5/8] 0, 128
        %1108 = vxpose.xlu0.c.b16.cont [6/8] 0, 128
        %1109 = vxpose.xlu0.c.b16.cont [7/8] 0, 128
        %1110 = vxpose.xlu0.c.b16.end [8/8] 0, 128
        %v1111 = vpop.trf.xlu0
        %v1112 = vpop.trf.xlu0
        %v1113 = vpop.trf.xlu0
        %v1114 = vpop.trf.xlu0
        %v1115 = vpop.trf.xlu0
        %v1116 = vpop.trf.xlu0
        %v1117 = vpop.trf.xlu0
        %v1118 = vpop.trf.xlu0
        %1119 = vxpose.xlu0.c.b16.start [1/8] %v882, 128
        %1120 = vxpose.xlu0.c.b16.cont [2/8] 0, 128
        %1121 = vxpose.xlu0.c.b16.cont [3/8] 0, 128
        %1122 = vxpose.xlu0.c.b16.cont [4/8] 0, 128
        %1123 = vxpose.xlu0.c.b16.cont [5/8] 0, 128
        %1124 = vxpose.xlu0.c.b16.cont [6/8] 0, 128
        %1125 = vxpose.xlu0.c.b16.cont [7/8] 0, 128
        %1126 = vxpose.xlu0.c.b16.end [8/8] 0, 128
        %v1127 = vpop.trf.xlu0
        %v1128 = vpop.trf.xlu0
        %v1129 = vpop.trf.xlu0
        %v1130 = vpop.trf.xlu0
        %v1131 = vpop.trf.xlu0
        %v1132 = vpop.trf.xlu0
        %v1133 = vpop.trf.xlu0
        %v1134 = vpop.trf.xlu0
        %1135 = vxpose.xlu0.c.b16.start [1/8] %v883, 128
        %1136 = vxpose.xlu0.c.b16.cont [2/8] 0, 128
        %1137 = vxpose.xlu0.c.b16.cont [3/8] 0, 128
        %1138 = vxpose.xlu0.c.b16.cont [4/8] 0, 128
        %1139 = vxpose.xlu0.c.b16.cont [5/8] 0, 128
        %1140 = vxpose.xlu0.c.b16.cont [6/8] 0, 128
        %1141 = vxpose.xlu0.c.b16.cont [7/8] 0, 128
        %1142 = vxpose.xlu0.c.b16.end [8/8] 0, 128
        %v1143 = vpop.trf.xlu0
        %v1144 = vpop.trf.xlu0
        %v1145 = vpop.trf.xlu0
        %v1146 = vpop.trf.xlu0
        %v1147 = vpop.trf.xlu0
        %v1148 = vpop.trf.xlu0
        %v1149 = vpop.trf.xlu0
        %v1150 = vpop.trf.xlu0
        %1151 = vxpose.xlu0.c.b16.start [1/8] %v884, 128
        %1152 = vxpose.xlu0.c.b16.cont [2/8] 0, 128
        %1153 = vxpose.xlu0.c.b16.cont [3/8] 0, 128
        %1154 = vxpose.xlu0.c.b16.cont [4/8] 0, 128
        %1155 = vxpose.xlu0.c.b16.cont [5/8] 0, 128
        %1156 = vxpose.xlu0.c.b16.cont [6/8] 0, 128
        %1157 = vxpose.xlu0.c.b16.cont [7/8] 0, 128
        %1158 = vxpose.xlu0.c.b16.end [8/8] 0, 128
        %v1159 = vpop.trf.xlu0
        %v1160 = vpop.trf.xlu0
        %v1161 = vpop.trf.xlu0
        %v1162 = vpop.trf.xlu0
        %v1163 = vpop.trf.xlu0
        %v1164 = vpop.trf.xlu0
        %v1165 = vpop.trf.xlu0
        %v1166 = vpop.trf.xlu0
        %v1167 = vcombine.low %v1047, %v1111
        %v1169 = vunpack.c.l.s4 1983009808
        %v1170 = vunpack.c.0.s8 %v1169
        %v1171 = vlaneseq
        %v1172 = vshrl.u32 %v1171, 7
        %v1173 = vsub.s32 %v1170, %v1172
        %v1174 = vrot.slane %v1167, %v1173
        %v1175 = vcombine.low %v1079, %v1143
        %v1177 = vunpack.c.l.s4 1983009808
        %v1178 = vunpack.c.0.s8 %v1177
        %v1179 = vlaneseq
        %v1180 = vshrl.u32 %v1179, 7
        %v1181 = vsub.s32 %v1178, %v1180
        %v1182 = vrot.slane %v1175, %v1181
        %v1183 = vcombine.low %v1174, %v1182
        %v1184 = vcombine.high %v1174, %v1182
        %v1186 = vunpack.c.l.s4 1934713408
        %v1187 = vunpack.c.0.s8 %v1186
        %v1188 = vlaneseq
        %v1189 = vshrl.u32 %v1188, 7
        %v1190 = vsub.s32 %v1187, %v1189
        %v1191 = vrot.slane %v1183, %v1190
        %v1193 = vunpack.c.l.s4 1934713408
        %v1194 = vunpack.c.0.s8 %v1193
        %v1195 = vlaneseq
        %v1196 = vshrl.u32 %v1195, 7
        %v1197 = vsub.s32 %v1194, %v1196
        %v1198 = vrot.slane %v1184, %v1197
        %v1199 = vcombine.high %v1191, 0
        %v1200 = vcombine.high %v1198, 0
        %v1201 = vcombine.low %v1063, %v1127
        %v1203 = vunpack.c.l.s4 1983009808
        %v1204 = vunpack.c.0.s8 %v1203
        %v1205 = vlaneseq
        %v1206 = vshrl.u32 %v1205, 7
        %v1207 = vsub.s32 %v1204, %v1206
        %v1208 = vrot.slane %v1201, %v1207
        %v1209 = vcombine.low %v1095, %v1159
        %v1211 = vunpack.c.l.s4 1983009808
        %v1212 = vunpack.c.0.s8 %v1211
        %v1213 = vlaneseq
        %v1214 = vshrl.u32 %v1213, 7
        %v1215 = vsub.s32 %v1212, %v1214
        %v1216 = vrot.slane %v1209, %v1215
        %v1217 = vcombine.low %v1208, %v1216
        %v1218 = vcombine.high %v1208, %v1216
        %v1220 = vunpack.c.l.s4 1934713408
        %v1221 = vunpack.c.0.s8 %v1220
        %v1222 = vlaneseq
        %v1223 = vshrl.u32 %v1222, 7
        %v1224 = vsub.s32 %v1221, %v1223
        %v1225 = vrot.slane %v1217, %v1224
        %v1227 = vunpack.c.l.s4 1934713408
        %v1228 = vunpack.c.0.s8 %v1227
        %v1229 = vlaneseq
        %v1230 = vshrl.u32 %v1229, 7
        %v1231 = vsub.s32 %v1228, %v1230
        %v1232 = vrot.slane %v1218, %v1231
        %v1233 = vcombine.high %v1225, 0
        %v1234 = vcombine.high %v1232, 0
        %v1237 = vpack.i.b16 %v1225, %v1191
        %v1239 = vshrl.u32 %v1191, 16
        %v1240 = vshrl.u32 %v1225, 16
        %v1241 = vpack.i.b16 %v1240, %v1239
        %v1245 = vpack.i.b16 %v1233, %v1199
        %v1247 = vshrl.u32 %v1199, 16
        %v1248 = vshrl.u32 %v1233, 16
        %v1249 = vpack.i.b16 %v1248, %v1247
        %v1253 = vpack.i.b16 %v1232, %v1198
        %v1255 = vshrl.u32 %v1198, 16
        %v1256 = vshrl.u32 %v1232, 16
        %v1257 = vpack.i.b16 %v1256, %v1255
        %v1261 = vpack.i.b16 %v1234, %v1200
        %v1263 = vshrl.u32 %v1200, 16
        %v1264 = vshrl.u32 %v1234, 16
        %v1265 = vpack.i.b16 %v1264, %v1263
        %1267 = vxpose.xlu0.c.b16.start [1/8] %v1237, 128
        %1268 = vxpose.xlu0.c.b16.cont [2/8] 0, 128
        %1269 = vxpose.xlu0.c.b16.cont [3/8] 0, 128
        %1270 = vxpose.xlu0.c.b16.cont [4/8] 0, 128
        %1271 = vxpose.xlu0.c.b16.cont [5/8] 0, 128
        %1272 = vxpose.xlu0.c.b16.cont [6/8] 0, 128
        %1273 = vxpose.xlu0.c.b16.cont [7/8] 0, 128
        %1274 = vxpose.xlu0.c.b16.end [8/8] 0, 128
        %v1275 = vpop.trf.xlu0
        %v1276 = vpop.trf.xlu0
        %v1277 = vpop.trf.xlu0
        %v1278 = vpop.trf.xlu0
        %v1279 = vpop.trf.xlu0
        %v1280 = vpop.trf.xlu0
        %v1281 = vpop.trf.xlu0
        %v1282 = vpop.trf.xlu0
        %1283 = vxpose.xlu0.c.b16.start [1/8] %v1241, 128
        %1284 = vxpose.xlu0.c.b16.cont [2/8] 0, 128
        %1285 = vxpose.xlu0.c.b16.cont [3/8] 0, 128
        %1286 = vxpose.xlu0.c.b16.cont [4/8] 0, 128
        %1287 = vxpose.xlu0.c.b16.cont [5/8] 0, 128
        %1288 = vxpose.xlu0.c.b16.cont [6/8] 0, 128
        %1289 = vxpose.xlu0.c.b16.cont [7/8] 0, 128
        %1290 = vxpose.xlu0.c.b16.end [8/8] 0, 128
        %v1291 = vpop.trf.xlu0
        %v1292 = vpop.trf.xlu0
        %v1293 = vpop.trf.xlu0
        %v1294 = vpop.trf.xlu0
        %v1295 = vpop.trf.xlu0
        %v1296 = vpop.trf.xlu0
        %v1297 = vpop.trf.xlu0
        %v1298 = vpop.trf.xlu0
        %1299 = vxpose.xlu0.c.b16.start [1/8] %v1245, 128
        %1300 = vxpose.xlu0.c.b16.cont [2/8] 0, 128
        %1301 = vxpose.xlu0.c.b16.cont [3/8] 0, 128
        %1302 = vxpose.xlu0.c.b16.cont [4/8] 0, 128
        %1303 = vxpose.xlu0.c.b16.cont [5/8] 0, 128
        %1304 = vxpose.xlu0.c.b16.cont [6/8] 0, 128
        %1305 = vxpose.xlu0.c.b16.cont [7/8] 0, 128
        %1306 = vxpose.xlu0.c.b16.end [8/8] 0, 128
        %v1307 = vpop.trf.xlu0
        %v1308 = vpop.trf.xlu0
        %v1309 = vpop.trf.xlu0
        %v1310 = vpop.trf.xlu0
        %v1311 = vpop.trf.xlu0
        %v1312 = vpop.trf.xlu0
        %v1313 = vpop.trf.xlu0
        %v1314 = vpop.trf.xlu0
        %1315 = vxpose.xlu0.c.b16.start [1/8] %v1249, 128
        %1316 = vxpose.xlu0.c.b16.cont [2/8] 0, 128
        %1317 = vxpose.xlu0.c.b16.cont [3/8] 0, 128
        %1318 = vxpose.xlu0.c.b16.cont [4/8] 0, 128
        %1319 = vxpose.xlu0.c.b16.cont [5/8] 0, 128
        %1320 = vxpose.xlu0.c.b16.cont [6/8] 0, 128
        %1321 = vxpose.xlu0.c.b16.cont [7/8] 0, 128
        %1322 = vxpose.xlu0.c.b16.end [8/8] 0, 128
        %v1323 = vpop.trf.xlu0
        %v1324 = vpop.trf.xlu0
        %v1325 = vpop.trf.xlu0
        %v1326 = vpop.trf.xlu0
        %v1327 = vpop.trf.xlu0
        %v1328 = vpop.trf.xlu0
        %v1329 = vpop.trf.xlu0
        %v1330 = vpop.trf.xlu0
        %1331 = vxpose.xlu0.c.b16.start [1/8] %v1253, 128
        %1332 = vxpose.xlu0.c.b16.cont [2/8] 0, 128
        %1333 = vxpose.xlu0.c.b16.cont [3/8] 0, 128
        %1334 = vxpose.xlu0.c.b16.cont [4/8] 0, 128
        %1335 = vxpose.xlu0.c.b16.cont [5/8] 0, 128
        %1336 = vxpose.xlu0.c.b16.cont [6/8] 0, 128
        %1337 = vxpose.xlu0.c.b16.cont [7/8] 0, 128
        %1338 = vxpose.xlu0.c.b16.end [8/8] 0, 128
        %v1339 = vpop.trf.xlu0
        %v1340 = vpop.trf.xlu0
        %v1341 = vpop.trf.xlu0
        %v1342 = vpop.trf.xlu0
        %v1343 = vpop.trf.xlu0
        %v1344 = vpop.trf.xlu0
        %v1345 = vpop.trf.xlu0
        %v1346 = vpop.trf.xlu0
        %1347 = vxpose.xlu0.c.b16.start [1/8] %v1257, 128
        %1348 = vxpose.xlu0.c.b16.cont [2/8] 0, 128
        %1349 = vxpose.xlu0.c.b16.cont [3/8] 0, 128
        %1350 = vxpose.xlu0.c.b16.cont [4/8] 0, 128
        %1351 = vxpose.xlu0.c.b16.cont [5/8] 0, 128
        %1352 = vxpose.xlu0.c.b16.cont [6/8] 0, 128
        %1353 = vxpose.xlu0.c.b16.cont [7/8] 0, 128
        %1354 = vxpose.xlu0.c.b16.end [8/8] 0, 128
        %v1355 = vpop.trf.xlu0
        %v1356 = vpop.trf.xlu0
        %v1357 = vpop.trf.xlu0
        %v1358 = vpop.trf.xlu0
        %v1359 = vpop.trf.xlu0
        %v1360 = vpop.trf.xlu0
        %v1361 = vpop.trf.xlu0
        %v1362 = vpop.trf.xlu0
        %1363 = vxpose.xlu0.c.b16.start [1/8] %v1261, 128
        %1364 = vxpose.xlu0.c.b16.cont [2/8] 0, 128
        %1365 = vxpose.xlu0.c.b16.cont [3/8] 0, 128
        %1366 = vxpose.xlu0.c.b16.cont [4/8] 0, 128
        %1367 = vxpose.xlu0.c.b16.cont [5/8] 0, 128
        %1368 = vxpose.xlu0.c.b16.cont [6/8] 0, 128
        %1369 = vxpose.xlu0.c.b16.cont [7/8] 0, 128
        %1370 = vxpose.xlu0.c.b16.end [8/8] 0, 128
        %v1371 = vpop.trf.xlu0
        %v1372 = vpop.trf.xlu0
        %v1373 = vpop.trf.xlu0
        %v1374 = vpop.trf.xlu0
        %v1375 = vpop.trf.xlu0
        %v1376 = vpop.trf.xlu0
        %v1377 = vpop.trf.xlu0
        %v1378 = vpop.trf.xlu0
        %1379 = vxpose.xlu0.c.b16.start [1/8] %v1265, 128
        %1380 = vxpose.xlu0.c.b16.cont [2/8] 0, 128
        %1381 = vxpose.xlu0.c.b16.cont [3/8] 0, 128
        %1382 = vxpose.xlu0.c.b16.cont [4/8] 0, 128
        %1383 = vxpose.xlu0.c.b16.cont [5/8] 0, 128
        %1384 = vxpose.xlu0.c.b16.cont [6/8] 0, 128
        %1385 = vxpose.xlu0.c.b16.cont [7/8] 0, 128
        %1386 = vxpose.xlu0.c.b16.end [8/8] 0, 128
        %v1387 = vpop.trf.xlu0
        %v1388 = vpop.trf.xlu0
        %v1389 = vpop.trf.xlu0
        %v1390 = vpop.trf.xlu0
        %v1391 = vpop.trf.xlu0
        %v1392 = vpop.trf.xlu0
        %v1393 = vpop.trf.xlu0
        %v1394 = vpop.trf.xlu0
        %v1395 = vcombine.low %v1275, %v1339
        %v1397 = vunpack.c.l.s4 1983009808
        %v1398 = vunpack.c.0.s8 %v1397
        %v1399 = vlaneseq
        %v1400 = vshrl.u32 %v1399, 7
        %v1401 = vsub.s32 %v1398, %v1400
        %v1402 = vrot.slane %v1395, %v1401
        %v1403 = vcombine.low %v1307, %v1371
        %v1405 = vunpack.c.l.s4 1983009808
        %v1406 = vunpack.c.0.s8 %v1405
        %v1407 = vlaneseq
        %v1408 = vshrl.u32 %v1407, 7
        %v1409 = vsub.s32 %v1406, %v1408
        %v1410 = vrot.slane %v1403, %v1409
        %v1411 = vcombine.low %v1402, %v1410
        %v1413 = vunpack.c.l.s4 1934713408
        %v1414 = vunpack.c.0.s8 %v1413
        %v1415 = vlaneseq
        %v1416 = vshrl.u32 %v1415, 7
        %v1417 = vsub.s32 %v1414, %v1416
        %v1418 = vrot.slane %v1411, %v1417
        %v1419 = vcombine.high %v1418, 0
        %v1420 = vcombine.low %v1291, %v1355
        %v1422 = vunpack.c.l.s4 1983009808
        %v1423 = vunpack.c.0.s8 %v1422
        %v1424 = vlaneseq
        %v1425 = vshrl.u32 %v1424, 7
        %v1426 = vsub.s32 %v1423, %v1425
        %v1427 = vrot.slane %v1420, %v1426
        %v1428 = vcombine.low %v1323, %v1387
        %v1430 = vunpack.c.l.s4 1983009808
        %v1431 = vunpack.c.0.s8 %v1430
        %v1432 = vlaneseq
        %v1433 = vshrl.u32 %v1432, 7
        %v1434 = vsub.s32 %v1431, %v1433
        %v1435 = vrot.slane %v1428, %v1434
        %v1436 = vcombine.low %v1427, %v1435
        %v1438 = vunpack.c.l.s4 1934713408
        %v1439 = vunpack.c.0.s8 %v1438
        %v1440 = vlaneseq
        %v1441 = vshrl.u32 %v1440, 7
        %v1442 = vsub.s32 %v1439, %v1441
        %v1443 = vrot.slane %v1436, %v1442
        %v1444 = vcombine.high %v1443, 0
        %v1447 = vpack.i.b16 %v1443, %v1418
        %v1448 = vshrl.u32 %v1418, 16
        %v1449 = vshrl.u32 %v1443, 16
        %v1450 = vpack.i.b16 %v1449, %v1448
        %v1453 = vpack.i.b16 %v1444, %v1419
        %v1454 = vshrl.u32 %v1419, 16
        %v1455 = vshrl.u32 %v1444, 16
        %v1456 = vpack.i.b16 %v1455, %v1454
        %v1457 = vcombine.low %v1017, %v1029
        %v1459 = vunpack.c.l.s4 1983009808
        %v1460 = vunpack.c.0.s8 %v1459
        %v1461 = vlaneseq
        %v1462 = vshrl.u32 %v1461, 7
        %v1463 = vsub.s32 %v1460, %v1462
        %v1464 = vrot.slane %v1457, %v1463
        %vm1465 = vcmask 64512
        %v1467 = vsel %vm1465, %v1464, 0
        %vm1469 = vcmask 1043456
        %v1471 = vsel %vm1469, %v1447, 0
        %1473 = vmatprep.subr.bf16.mxu0 0
        %1474 = vmatpush1.bf16.msra.mxu0 0
        %1475 = vmatprep.subr.bf16.mxu0 0
        %1476 = vmatpush1.bf16.msra.mxu0 0
        %1477 = vmatprep.subr.bf16.mxu0 0
        %1478 = vmatpush1.bf16.msra.mxu0 0
        %1479 = vmatprep.subr.bf16.mxu0 0
        %1480 = vmatpush1.bf16.msra.mxu0 0
        %1481 = vmatprep.subr.bf16.mxu0 0
        %1482 = vmatpush1.bf16.msra.mxu0 0
        %1483 = vmatprep.subr.bf16.mxu0 0
        %1484 = vmatpush1.bf16.msra.mxu0 0
        %1485 = vmatprep.subr.bf16.mxu0 0
        %1486 = vmatpush1.bf16.msra.mxu0 0
        %1487 = vmatprep.subr.bf16.mxu0 0
        %1488 = vmatpush1.bf16.msra.mxu0 %v1471
        %1489 = vmatprep.subr.bf16.mxu0 0
        %1490 = vmatpush2.bf16.msra.mxu0 0
        %1491 = vmatprep.subr.bf16.mxu0 0
        %1492 = vmatpush2.bf16.msra.mxu0 0
        %1493 = vmatprep.subr.bf16.mxu0 0
        %1494 = vmatpush2.bf16.msra.mxu0 0
        %1495 = vmatprep.subr.bf16.mxu0 0
        %1496 = vmatpush2.bf16.msra.mxu0 0
        %1497 = vmatprep.subr.bf16.mxu0 0
        %1498 = vmatpush2.bf16.msra.mxu0 0
        %1499 = vmatprep.subr.bf16.mxu0 0
        %1500 = vmatpush2.bf16.msra.mxu0 0
        %1501 = vmatprep.subr.bf16.mxu0 0
        %1502 = vmatpush2.bf16.msra.mxu0 0
        %1503 = vmatprep.subr.bf16.mxu0 0
        %1504 = vmatpush2.bf16.msra.mxu0 0
        %1505 = vmatprep.mubr.bf16.mxu0 0
        %1506 = vmatmul.mubr.bf16.gmra.mxu0 %v1467
        %v1507 = vpop.f32.mrf.mxu0
        %v1508 = vadd.f32 0.0, %v1507
        %v1509 = vpop.f32.mrf.mxu0
        %v1510 = vpop.f32.mrf.mxu0
        %v1511 = vpop.f32.mrf.mxu0
        %1512 = vdwg.mxu0
        %v1513 = vcombine.low %v1020, %v1032
        %v1515 = vunpack.c.l.s4 1983009808
        %v1516 = vunpack.c.0.s8 %v1515
        %v1517 = vlaneseq
        %v1518 = vshrl.u32 %v1517, 7
        %v1519 = vsub.s32 %v1516, %v1518
        %v1520 = vrot.slane %v1513, %v1519
        %v1522 = vsel %vm1465, %v1520, 0
        %v1525 = vsel %vm1469, %v1450, 0
        %1527 = vmatprep.subr.bf16.mxu0 0
        %1528 = vmatpush1.bf16.msra.mxu0 0
        %1529 = vmatprep.subr.bf16.mxu0 0
        %1530 = vmatpush1.bf16.msra.mxu0 0
        %1531 = vmatprep.subr.bf16.mxu0 0
        %1532 = vmatpush1.bf16.msra.mxu0 0
        %1533 = vmatprep.subr.bf16.mxu0 0
        %1534 = vmatpush1.bf16.msra.mxu0 0
        %1535 = vmatprep.subr.bf16.mxu0 0
        %1536 = vmatpush1.bf16.msra.mxu0 0
        %1537 = vmatprep.subr.bf16.mxu0 0
        %1538 = vmatpush1.bf16.msra.mxu0 0
        %1539 = vmatprep.subr.bf16.mxu0 0
        %1540 = vmatpush1.bf16.msra.mxu0 0
        %1541 = vmatprep.subr.bf16.mxu0 0
        %1542 = vmatpush1.bf16.msra.mxu0 %v1525
        %1543 = vmatprep.subr.bf16.mxu0 0
        %1544 = vmatpush2.bf16.msra.mxu0 0
        %1545 = vmatprep.subr.bf16.mxu0 0
        %1546 = vmatpush2.bf16.msra.mxu0 0
        %1547 = vmatprep.subr.bf16.mxu0 0
        %1548 = vmatpush2.bf16.msra.mxu0 0
        %1549 = vmatprep.subr.bf16.mxu0 0
        %1550 = vmatpush2.bf16.msra.mxu0 0
        %1551 = vmatprep.subr.bf16.mxu0 0
        %1552 = vmatpush2.bf16.msra.mxu0 0
        %1553 = vmatprep.subr.bf16.mxu0 0
        %1554 = vmatpush2.bf16.msra.mxu0 0
        %1555 = vmatprep.subr.bf16.mxu0 0
        %1556 = vmatpush2.bf16.msra.mxu0 0
        %1557 = vmatprep.subr.bf16.mxu0 0
        %1558 = vmatpush2.bf16.msra.mxu0 0
        %1559 = vmatprep.mubr.bf16.mxu0 0
        %1560 = vmatmul.mubr.bf16.gmra.mxu0 %v1522
        %v1561 = vpop.f32.mrf.mxu0
        %v1562 = vadd.f32 0.0, %v1561
        %v1563 = vpop.f32.mrf.mxu0
        %v1564 = vpop.f32.mrf.mxu0
        %v1565 = vpop.f32.mrf.mxu0
        %1566 = vdwg.mxu0
        %v1567 = vcombine.low %v1023, %v1035
        %v1569 = vunpack.c.l.s4 1983009808
        %v1570 = vunpack.c.0.s8 %v1569
        %v1571 = vlaneseq
        %v1572 = vshrl.u32 %v1571, 7
        %v1573 = vsub.s32 %v1570, %v1572
        %v1574 = vrot.slane %v1567, %v1573
        %v1576 = vsel %vm1465, %v1574, 0
        %v1579 = vsel %vm1469, %v1453, 0
        %1581 = vmatprep.subr.bf16.mxu0 0
        %1582 = vmatpush1.bf16.msra.mxu0 0
        %1583 = vmatprep.subr.bf16.mxu0 0
        %1584 = vmatpush1.bf16.msra.mxu0 0
        %1585 = vmatprep.subr.bf16.mxu0 0
        %1586 = vmatpush1.bf16.msra.mxu0 0
        %1587 = vmatprep.subr.bf16.mxu0 0
        %1588 = vmatpush1.bf16.msra.mxu0 0
        %1589 = vmatprep.subr.bf16.mxu0 0
        %1590 = vmatpush1.bf16.msra.mxu0 0
        %1591 = vmatprep.subr.bf16.mxu0 0
        %1592 = vmatpush1.bf16.msra.mxu0 0
        %1593 = vmatprep.subr.bf16.mxu0 0
        %1594 = vmatpush1.bf16.msra.mxu0 0
        %1595 = vmatprep.subr.bf16.mxu0 0
        %1596 = vmatpush1.bf16.msra.mxu0 %v1579
        %1597 = vmatprep.subr.bf16.mxu0 0
        %1598 = vmatpush2.bf16.msra.mxu0 0
        %1599 = vmatprep.subr.bf16.mxu0 0
        %1600 = vmatpush2.bf16.msra.mxu0 0
        %1601 = vmatprep.subr.bf16.mxu0 0
        %1602 = vmatpush2.bf16.msra.mxu0 0
        %1603 = vmatprep.subr.bf16.mxu0 0
        %1604 = vmatpush2.bf16.msra.mxu0 0
        %1605 = vmatprep.subr.bf16.mxu0 0
        %1606 = vmatpush2.bf16.msra.mxu0 0
        %1607 = vmatprep.subr.bf16.mxu0 0
        %1608 = vmatpush2.bf16.msra.mxu0 0
        %1609 = vmatprep.subr.bf16.mxu0 0
        %1610 = vmatpush2.bf16.msra.mxu0 0
        %1611 = vmatprep.subr.bf16.mxu0 0
        %1612 = vmatpush2.bf16.msra.mxu0 0
        %1613 = vmatprep.mubr.bf16.mxu0 0
        %1614 = vmatmul.mubr.bf16.gmra.mxu0 %v1576
        %v1615 = vpop.f32.mrf.mxu0
        %v1616 = vadd.f32 0.0, %v1615
        %v1617 = vpop.f32.mrf.mxu0
        %v1618 = vpop.f32.mrf.mxu0
        %v1619 = vpop.f32.mrf.mxu0
        %1620 = vdwg.mxu0
        %v1621 = vcombine.low %v1026, %v1038
        %v1623 = vunpack.c.l.s4 1983009808
        %v1624 = vunpack.c.0.s8 %v1623
        %v1625 = vlaneseq
        %v1626 = vshrl.u32 %v1625, 7
        %v1627 = vsub.s32 %v1624, %v1626
        %v1628 = vrot.slane %v1621, %v1627
        %v1630 = vsel %vm1465, %v1628, 0
        %v1633 = vsel %vm1469, %v1456, 0
        %1635 = vmatprep.subr.bf16.mxu0 0
        %1636 = vmatpush1.bf16.msra.mxu0 0
        %1637 = vmatprep.subr.bf16.mxu0 0
        %1638 = vmatpush1.bf16.msra.mxu0 0
        %1639 = vmatprep.subr.bf16.mxu0 0
        %1640 = vmatpush1.bf16.msra.mxu0 0
        %1641 = vmatprep.subr.bf16.mxu0 0
        %1642 = vmatpush1.bf16.msra.mxu0 0
        %1643 = vmatprep.subr.bf16.mxu0 0
        %1644 = vmatpush1.bf16.msra.mxu0 0
        %1645 = vmatprep.subr.bf16.mxu0 0
        %1646 = vmatpush1.bf16.msra.mxu0 0
        %1647 = vmatprep.subr.bf16.mxu0 0
        %1648 = vmatpush1.bf16.msra.mxu0 0
        %1649 = vmatprep.subr.bf16.mxu0 0
        %1650 = vmatpush1.bf16.msra.mxu0 %v1633
        %1651 = vmatprep.subr.bf16.mxu0 0
        %1652 = vmatpush2.bf16.msra.mxu0 0
        %1653 = vmatprep.subr.bf16.mxu0 0
        %1654 = vmatpush2.bf16.msra.mxu0 0
        %1655 = vmatprep.subr.bf16.mxu0 0
        %1656 = vmatpush2.bf16.msra.mxu0 0
        %1657 = vmatprep.subr.bf16.mxu0 0
        %1658 = vmatpush2.bf16.msra.mxu0 0
        %1659 = vmatprep.subr.bf16.mxu0 0
        %1660 = vmatpush2.bf16.msra.mxu0 0
        %1661 = vmatprep.subr.bf16.mxu0 0
        %1662 = vmatpush2.bf16.msra.mxu0 0
        %1663 = vmatprep.subr.bf16.mxu0 0
        %1664 = vmatpush2.bf16.msra.mxu0 0
        %1665 = vmatprep.subr.bf16.mxu0 0
        %1666 = vmatpush2.bf16.msra.mxu0 0
        %1667 = vmatprep.mubr.bf16.mxu0 0
        %1668 = vmatmul.mubr.bf16.gmra.mxu0 %v1630
        %v1669 = vpop.f32.mrf.mxu0
        %v1670 = vadd.f32 0.0, %v1669
        %v1671 = vpop.f32.mrf.mxu0
        %v1672 = vpop.f32.mrf.mxu0
        %v1673 = vpop.f32.mrf.mxu0
        %1674 = vdwg.mxu0
        %v1675 = vld [vmem:[%s483] sm:$0x3]
        %v1676 = vunpack.c.0.s8 %v1675
        %vm1677 = vcmp.ne.s32.totalorder %v1676, 0
        %v1678 = vsel %vm1677, 1, 0
        %v1679 = vcvt.s32.f32 %v1678
        %v1680 = vmul.f32 %v1508, %v1679
        %v1681 = vmul.f32 %v1562, %v1679
        %v1682 = vmul.f32 %v1616, %v1679
        %v1683 = vmul.f32 %v1670, %v1679
        %v1684 = vsub.f32 %v1679, 1.0
        %v1685 = vmul.f32 %v1684, 1e+09
        %v1686 = vadd.f32 %v1680, %v1685
        %v1687 = vadd.f32 %v1681, %v1685
        %v1688 = vadd.f32 %v1682, %v1685
        %v1689 = vadd.f32 %v1683, %v1685
        %v1690 = vld [vmem:[#allocation3] sm:$0xff]
        %v1691 = vld [vmem:[#allocation3 + $0x8] sm:$0xff]
        %v1692 = vld [vmem:[#allocation3 + $0x10] sm:$0xff]
        %v1693 = vld [vmem:[#allocation3 + $0x18] sm:$0xff]
        %v1694 = vsel %vm1465, %v1686, -inf
        %1695 = vmax.xlane.f32.xlu0 %v1694
        %v1696 = vpop.xlane.xlu0 %1695
        %v1697 = vsel %vm1465, %v1687, -inf
        %1698 = vmax.xlane.f32.xlu0 %v1697
        %v1699 = vpop.xlane.xlu0 %1698
        %v1700 = vsel %vm1465, %v1688, -inf
        %1701 = vmax.xlane.f32.xlu0 %v1700
        %v1702 = vpop.xlane.xlu0 %1701
        %v1703 = vsel %vm1465, %v1689, -inf
        %1704 = vmax.xlane.f32.xlu0 %v1703
        %v1705 = vpop.xlane.xlu0 %1704
        %v1706 = vmax.f32 %v1690, %v1696
        %v1707 = vmax.f32 %v1691, %v1699
        %v1708 = vmax.f32 %v1692, %v1702
        %v1709 = vmax.f32 %v1693, %v1705
        %v1710 = vsub.f32 %v1690, %v1706
        %v1711 = vsub.f32 %v1691, %v1707
        %v1712 = vsub.f32 %v1692, %v1708
        %v1713 = vsub.f32 %v1693, %v1709
        %v1714 = vmul.f32 %v1710, 1.442695
        %v1715 = vpow.pop %v1714
        %v1716 = vmul.f32 %v1711, 1.442695
        %v1717 = vpow.pop %v1716
        %v1718 = vmul.f32 %v1712, 1.442695
        %v1719 = vpow.pop %v1718
        %v1720 = vmul.f32 %v1713, 1.442695
        %v1721 = vpow.pop %v1720
        %1723 = vset.pattern.permute.xlu0 0
        %1724 = vperm.xlu0 %1723, %v1706
        %v1725 = vpop.permute.xlu0 %1724
        %1728 = vset.pattern.permute.xlu0 0
        %1729 = vperm.xlu0 %1728, %v1707
        %v1730 = vpop.permute.xlu0 %1729
        %1733 = vset.pattern.permute.xlu0 0
        %1734 = vperm.xlu0 %1733, %v1708
        %v1735 = vpop.permute.xlu0 %1734
        %1738 = vset.pattern.permute.xlu0 0
        %1739 = vperm.xlu0 %1738, %v1709
        %v1740 = vpop.permute.xlu0 %1739
        %v1742 = vsub.f32 %v1686, %v1725
        %v1743 = vsub.f32 %v1687, %v1730
        %v1744 = vsub.f32 %v1688, %v1735
        %v1745 = vsub.f32 %v1689, %v1740
        %v1746 = vmul.f32 %v1742, 1.442695
        %v1747 = vpow.pop %v1746
        %v1748 = vmul.f32 %v1743, 1.442695
        %v1749 = vpow.pop %v1748
        %v1750 = vmul.f32 %v1744, 1.442695
        %v1751 = vpow.pop %v1750
        %v1752 = vmul.f32 %v1745, 1.442695
        %v1753 = vpow.pop %v1752
        %v1754 = vld [vmem:[#allocation4] sm:$0xff]
        %v1755 = vld [vmem:[#allocation4 + $0x8] sm:$0xff]
        %v1756 = vld [vmem:[#allocation4 + $0x10] sm:$0xff]
        %v1757 = vld [vmem:[#allocation4 + $0x18] sm:$0xff]
        %v1758 = vmul.f32 %v1715, %v1754
        %v1759 = vmul.f32 %v1717, %v1755
        %v1760 = vmul.f32 %v1719, %v1756
        %v1761 = vmul.f32 %v1721, %v1757
        %v1762 = vsel %vm1465, %v1747, 0.0
        %1763 = vadd.xlane.f32.xlu0 %v1762
        %v1764 = vpop.xlane.xlu0 %1763
        %v1765 = vsel %vm1465, %v1749, 0.0
        %1766 = vadd.xlane.f32.xlu0 %v1765
        %v1767 = vpop.xlane.xlu0 %1766
        %v1768 = vsel %vm1465, %v1751, 0.0
        %1769 = vadd.xlane.f32.xlu0 %v1768
        %v1770 = vpop.xlane.xlu0 %1769
        %v1771 = vsel %vm1465, %v1753, 0.0
        %1772 = vadd.xlane.f32.xlu0 %v1771
        %v1773 = vpop.xlane.xlu0 %1772
        %v1774 = vadd.f32 %v1758, %v1764
        %v1775 = vadd.f32 %v1759, %v1767
        %v1776 = vadd.f32 %v1760, %v1770
        %v1777 = vadd.f32 %v1761, %v1773
        %vm1778 = vcmask 7168
        %1779 = vst.msk [vmem:[#allocation4] sm:$0xff] %vm1778, %v1774
        %1780 = vst.msk [vmem:[#allocation4 + $0x8] sm:$0xff] %vm1778, %v1775
        %1781 = vst.msk [vmem:[#allocation4 + $0x10] sm:$0xff] %vm1778, %v1776
        %1782 = vst.msk [vmem:[#allocation4 + $0x18] sm:$0xff] %vm1778, %v1777
        %v1783 = vpack.c.bf16 %v1747, %v1747
        %v1784 = vpack.c.bf16 %v1749, %v1749
        %v1785 = vpack.c.bf16 %v1751, %v1751
        %v1786 = vpack.c.bf16 %v1753, %v1753
        %v1787 = vcombine.low %v963, %v967
        %v1789 = vunpack.c.l.s4 1983009808
        %v1790 = vunpack.c.0.s8 %v1789
        %v1791 = vlaneseq
        %v1792 = vshrl.u32 %v1791, 7
        %v1793 = vsub.s32 %v1790, %v1792
        %v1794 = vrot.slane %v1787, %v1793
        %v1795 = vcombine.low %v965, %v969
        %v1797 = vunpack.c.l.s4 1983009808
        %v1798 = vunpack.c.0.s8 %v1797
        %v1799 = vlaneseq
        %v1800 = vshrl.u32 %v1799, 7
        %v1801 = vsub.s32 %v1798, %v1800
        %v1802 = vrot.slane %v1795, %v1801
        %v1803 = vcombine.low %v1794, %v1802
        %v1805 = vunpack.c.l.s4 1934713408
        %v1806 = vunpack.c.0.s8 %v1805
        %v1807 = vlaneseq
        %v1808 = vshrl.u32 %v1807, 7
        %v1809 = vsub.s32 %v1806, %v1808
        %v1810 = vrot.slane %v1803, %v1809
        %v1811 = vcombine.high %v1810, 0
        %v1812 = vcombine.low %v964, %v968
        %v1814 = vunpack.c.l.s4 1983009808
        %v1815 = vunpack.c.0.s8 %v1814
        %v1816 = vlaneseq
        %v1817 = vshrl.u32 %v1816, 7
        %v1818 = vsub.s32 %v1815, %v1817
        %v1819 = vrot.slane %v1812, %v1818
        %v1820 = vcombine.low %v966, %v970
        %v1822 = vunpack.c.l.s4 1983009808
        %v1823 = vunpack.c.0.s8 %v1822
        %v1824 = vlaneseq
        %v1825 = vshrl.u32 %v1824, 7
        %v1826 = vsub.s32 %v1823, %v1825
        %v1827 = vrot.slane %v1820, %v1826
        %v1828 = vcombine.low %v1819, %v1827
        %v1830 = vunpack.c.l.s4 1934713408
        %v1831 = vunpack.c.0.s8 %v1830
        %v1832 = vlaneseq
        %v1833 = vshrl.u32 %v1832, 7
        %v1834 = vsub.s32 %v1831, %v1833
        %v1835 = vrot.slane %v1828, %v1834
        %v1836 = vcombine.high %v1835, 0
        %v1839 = vpack.i.b16 %v1835, %v1810
        %v1840 = vshrl.u32 %v1810, 16
        %v1841 = vshrl.u32 %v1835, 16
        %v1842 = vpack.i.b16 %v1841, %v1840
        %v1845 = vpack.i.b16 %v1836, %v1811
        %v1846 = vshrl.u32 %v1811, 16
        %v1847 = vshrl.u32 %v1836, 16
        %v1848 = vpack.i.b16 %v1847, %v1846
        %v1850 = vsel %vm1465, %v1783, 0
        %v1853 = vsel %vm1469, %v1839, 0
        %1855 = vmatprep.subr.bf16.mxu0 0
        %1856 = vmatpush1.bf16.msra.mxu0 0
        %1857 = vmatprep.subr.bf16.mxu0 0
        %1858 = vmatpush1.bf16.msra.mxu0 0
        %1859 = vmatprep.subr.bf16.mxu0 0
        %1860 = vmatpush1.bf16.msra.mxu0 0
        %1861 = vmatprep.subr.bf16.mxu0 0
        %1862 = vmatpush1.bf16.msra.mxu0 0
        %1863 = vmatprep.subr.bf16.mxu0 0
        %1864 = vmatpush1.bf16.msra.mxu0 0
        %1865 = vmatprep.subr.bf16.mxu0 0
        %1866 = vmatpush1.bf16.msra.mxu0 0
        %1867 = vmatprep.subr.bf16.mxu0 0
        %1868 = vmatpush1.bf16.msra.mxu0 0
        %1869 = vmatprep.subr.bf16.mxu0 0
        %1870 = vmatpush1.bf16.msra.mxu0 %v1853
        %1871 = vmatprep.subr.bf16.mxu0 0
        %1872 = vmatpush2.bf16.msra.mxu0 0
        %1873 = vmatprep.subr.bf16.mxu0 0
        %1874 = vmatpush2.bf16.msra.mxu0 0
        %1875 = vmatprep.subr.bf16.mxu0 0
        %1876 = vmatpush2.bf16.msra.mxu0 0
        %1877 = vmatprep.subr.bf16.mxu0 0
        %1878 = vmatpush2.bf16.msra.mxu0 0
        %1879 = vmatprep.subr.bf16.mxu0 0
        %1880 = vmatpush2.bf16.msra.mxu0 0
        %1881 = vmatprep.subr.bf16.mxu0 0
        %1882 = vmatpush2.bf16.msra.mxu0 0
        %1883 = vmatprep.subr.bf16.mxu0 0
        %1884 = vmatpush2.bf16.msra.mxu0 0
        %1885 = vmatprep.subr.bf16.mxu0 0
        %1886 = vmatpush2.bf16.msra.mxu0 0
        %1887 = vmatprep.mubr.bf16.mxu0 0
        %1888 = vmatmul.mubr.bf16.gmra.mxu0 %v1850
        %v1889 = vpop.f32.mrf.mxu0
        %v1890 = vadd.f32 0.0, %v1889
        %v1891 = vpop.f32.mrf.mxu0
        %v1892 = vpop.f32.mrf.mxu0
        %v1893 = vpop.f32.mrf.mxu0
        %1894 = vdwg.mxu0
        %v1896 = vsel %vm1465, %v1784, 0
        %v1899 = vsel %vm1469, %v1842, 0
        %1901 = vmatprep.subr.bf16.mxu0 0
        %1902 = vmatpush1.bf16.msra.mxu0 0
        %1903 = vmatprep.subr.bf16.mxu0 0
        %1904 = vmatpush1.bf16.msra.mxu0 0
        %1905 = vmatprep.subr.bf16.mxu0 0
        %1906 = vmatpush1.bf16.msra.mxu0 0
        %1907 = vmatprep.subr.bf16.mxu0 0
        %1908 = vmatpush1.bf16.msra.mxu0 0
        %1909 = vmatprep.subr.bf16.mxu0 0
        %1910 = vmatpush1.bf16.msra.mxu0 0
        %1911 = vmatprep.subr.bf16.mxu0 0
        %1912 = vmatpush1.bf16.msra.mxu0 0
        %1913 = vmatprep.subr.bf16.mxu0 0
        %1914 = vmatpush1.bf16.msra.mxu0 0
        %1915 = vmatprep.subr.bf16.mxu0 0
        %1916 = vmatpush1.bf16.msra.mxu0 %v1899
        %1917 = vmatprep.subr.bf16.mxu0 0
        %1918 = vmatpush2.bf16.msra.mxu0 0
        %1919 = vmatprep.subr.bf16.mxu0 0
        %1920 = vmatpush2.bf16.msra.mxu0 0
        %1921 = vmatprep.subr.bf16.mxu0 0
        %1922 = vmatpush2.bf16.msra.mxu0 0
        %1923 = vmatprep.subr.bf16.mxu0 0
        %1924 = vmatpush2.bf16.msra.mxu0 0
        %1925 = vmatprep.subr.bf16.mxu0 0
        %1926 = vmatpush2.bf16.msra.mxu0 0
        %1927 = vmatprep.subr.bf16.mxu0 0
        %1928 = vmatpush2.bf16.msra.mxu0 0
        %1929 = vmatprep.subr.bf16.mxu0 0
        %1930 = vmatpush2.bf16.msra.mxu0 0
        %1931 = vmatprep.subr.bf16.mxu0 0
        %1932 = vmatpush2.bf16.msra.mxu0 0
        %1933 = vmatprep.mubr.bf16.mxu0 0
        %1934 = vmatmul.mubr.bf16.gmra.mxu0 %v1896
        %v1935 = vpop.f32.mrf.mxu0
        %v1936 = vadd.f32 0.0, %v1935
        %v1937 = vpop.f32.mrf.mxu0
        %v1938 = vpop.f32.mrf.mxu0
        %v1939 = vpop.f32.mrf.mxu0
        %1940 = vdwg.mxu0
        %v1942 = vsel %vm1465, %v1785, 0
        %v1945 = vsel %vm1469, %v1845, 0
        %1947 = vmatprep.subr.bf16.mxu0 0
        %1948 = vmatpush1.bf16.msra.mxu0 0
        %1949 = vmatprep.subr.bf16.mxu0 0
        %1950 = vmatpush1.bf16.msra.mxu0 0
        %1951 = vmatprep.subr.bf16.mxu0 0
        %1952 = vmatpush1.bf16.msra.mxu0 0
        %1953 = vmatprep.subr.bf16.mxu0 0
        %1954 = vmatpush1.bf16.msra.mxu0 0
        %1955 = vmatprep.subr.bf16.mxu0 0
        %1956 = vmatpush1.bf16.msra.mxu0 0
        %1957 = vmatprep.subr.bf16.mxu0 0
        %1958 = vmatpush1.bf16.msra.mxu0 0
        %1959 = vmatprep.subr.bf16.mxu0 0
        %1960 = vmatpush1.bf16.msra.mxu0 0
        %1961 = vmatprep.subr.bf16.mxu0 0
        %1962 = vmatpush1.bf16.msra.mxu0 %v1945
        %1963 = vmatprep.subr.bf16.mxu0 0
        %1964 = vmatpush2.bf16.msra.mxu0 0
        %1965 = vmatprep.subr.bf16.mxu0 0
        %1966 = vmatpush2.bf16.msra.mxu0 0
        %1967 = vmatprep.subr.bf16.mxu0 0
        %1968 = vmatpush2.bf16.msra.mxu0 0
        %1969 = vmatprep.subr.bf16.mxu0 0
        %1970 = vmatpush2.bf16.msra.mxu0 0
        %1971 = vmatprep.subr.bf16.mxu0 0
        %1972 = vmatpush2.bf16.msra.mxu0 0
        %1973 = vmatprep.subr.bf16.mxu0 0
        %1974 = vmatpush2.bf16.msra.mxu0 0
        %1975 = vmatprep.subr.bf16.mxu0 0
        %1976 = vmatpush2.bf16.msra.mxu0 0
        %1977 = vmatprep.subr.bf16.mxu0 0
        %1978 = vmatpush2.bf16.msra.mxu0 0
        %1979 = vmatprep.mubr.bf16.mxu0 0
        %1980 = vmatmul.mubr.bf16.gmra.mxu0 %v1942
        %v1981 = vpop.f32.mrf.mxu0
        %v1982 = vadd.f32 0.0, %v1981
        %v1983 = vpop.f32.mrf.mxu0
        %v1984 = vpop.f32.mrf.mxu0
        %v1985 = vpop.f32.mrf.mxu0
        %1986 = vdwg.mxu0
        %v1988 = vsel %vm1465, %v1786, 0
        %v1991 = vsel %vm1469, %v1848, 0
        %1993 = vmatprep.subr.bf16.mxu0 0
        %1994 = vmatpush1.bf16.msra.mxu0 0
        %1995 = vmatprep.subr.bf16.mxu0 0
        %1996 = vmatpush1.bf16.msra.mxu0 0
        %1997 = vmatprep.subr.bf16.mxu0 0
        %1998 = vmatpush1.bf16.msra.mxu0 0
        %1999 = vmatprep.subr.bf16.mxu0 0
        %2000 = vmatpush1.bf16.msra.mxu0 0
        %2001 = vmatprep.subr.bf16.mxu0 0
        %2002 = vmatpush1.bf16.msra.mxu0 0
        %2003 = vmatprep.subr.bf16.mxu0 0
        %2004 = vmatpush1.bf16.msra.mxu0 0
        %2005 = vmatprep.subr.bf16.mxu0 0
        %2006 = vmatpush1.bf16.msra.mxu0 0
        %2007 = vmatprep.subr.bf16.mxu0 0
        %2008 = vmatpush1.bf16.msra.mxu0 %v1991
        %2009 = vmatprep.subr.bf16.mxu0 0
        %2010 = vmatpush2.bf16.msra.mxu0 0
        %2011 = vmatprep.subr.bf16.mxu0 0
        %2012 = vmatpush2.bf16.msra.mxu0 0
        %2013 = vmatprep.subr.bf16.mxu0 0
        %2014 = vmatpush2.bf16.msra.mxu0 0
        %2015 = vmatprep.subr.bf16.mxu0 0
        %2016 = vmatpush2.bf16.msra.mxu0 0
        %2017 = vmatprep.subr.bf16.mxu0 0
        %2018 = vmatpush2.bf16.msra.mxu0 0
        %2019 = vmatprep.subr.bf16.mxu0 0
        %2020 = vmatpush2.bf16.msra.mxu0 0
        %2021 = vmatprep.subr.bf16.mxu0 0
        %2022 = vmatpush2.bf16.msra.mxu0 0
        %2023 = vmatprep.subr.bf16.mxu0 0
        %2024 = vmatpush2.bf16.msra.mxu0 0
        %2025 = vmatprep.mubr.bf16.mxu0 0
        %2026 = vmatmul.mubr.bf16.gmra.mxu0 %v1988
        %v2027 = vpop.f32.mrf.mxu0
        %v2028 = vadd.f32 0.0, %v2027
        %v2029 = vpop.f32.mrf.mxu0
        %v2030 = vpop.f32.mrf.mxu0
        %v2031 = vpop.f32.mrf.mxu0
        %2032 = vdwg.mxu0
        %v2033 = vld [vmem:[#allocation5] sm:$0xff]
        %v2034 = vld [vmem:[#allocation5 + $0x8] sm:$0xff]
        %v2035 = vld [vmem:[#allocation5 + $0x10] sm:$0xff]
        %v2036 = vld [vmem:[#allocation5 + $0x18] sm:$0xff]
        %2038 = vset.pattern.permute.xlu0 0
        %2039 = vperm.xlu0 %2038, %v1715
        %v2040 = vpop.permute.xlu0 %2039
        %2043 = vset.pattern.permute.xlu0 0
        %2044 = vperm.xlu0 %2043, %v1717
        %v2045 = vpop.permute.xlu0 %2044
        %2048 = vset.pattern.permute.xlu0 0
        %2049 = vperm.xlu0 %2048, %v1719
        %v2050 = vpop.permute.xlu0 %2049
        %2053 = vset.pattern.permute.xlu0 0
        %2054 = vperm.xlu0 %2053, %v1721
        %v2055 = vpop.permute.xlu0 %2054
        %v2057 = vmul.f32 %v2040, %v2033
        %v2058 = vmul.f32 %v2045, %v2034
        %v2059 = vmul.f32 %v2050, %v2035
        %v2060 = vmul.f32 %v2055, %v2036
        %v2061 = vadd.f32 %v2057, %v1890
        %v2062 = vadd.f32 %v2058, %v1936
        %v2063 = vadd.f32 %v2059, %v1982
        %v2064 = vadd.f32 %v2060, %v2028
        %2065 = vst.msk [vmem:[#allocation5] sm:$0xff] %vm1465, %v2061
        %2066 = vst.msk [vmem:[#allocation5 + $0x8] sm:$0xff] %vm1465, %v2062
        %2067 = vst.msk [vmem:[#allocation5 + $0x10] sm:$0xff] %vm1465, %v2063
        %2068 = vst.msk [vmem:[#allocation5 + $0x18] sm:$0xff] %vm1465, %v2064
        %2069 = vst.msk [vmem:[#allocation3] sm:$0xff] %vm1778, %v1706
        %2070 = vst.msk [vmem:[#allocation3 + $0x8] sm:$0xff] %vm1778, %v1707
        %2071 = vst.msk [vmem:[#allocation3 + $0x10] sm:$0xff] %vm1778, %v1708
        %2072 = vst.msk [vmem:[#allocation3 + $0x18] sm:$0xff] %vm1778, %v1709
        // Predicated region
        $region81: #{decoder_forward_prepared.2} parent=59 // pred_check
          %p2073 = pneg %p494
        $region82: #{decoder_forward_prepared.2} parent=59 // pred_check_branch
          %2075 = sbr.rel (%p2073) target = $region84
        $region83: #{decoder_forward_prepared.2} parent=59 // pred_region
          %v2076 = vld [vmem:[#allocation4] sm:$0xff]
          %v2077 = vld [vmem:[#allocation4 + $0x8] sm:$0xff]
          %v2078 = vld [vmem:[#allocation4 + $0x10] sm:$0xff]
          %v2079 = vld [vmem:[#allocation4 + $0x18] sm:$0xff]
          %v2080 = vrcp.pop %v2076
          %v2081 = vmul.f32 1.0, %v2080
          %v2082 = vrcp.pop %v2077
          %v2083 = vmul.f32 1.0, %v2082
          %v2084 = vrcp.pop %v2078
          %v2085 = vmul.f32 1.0, %v2084
          %v2086 = vrcp.pop %v2079
          %v2087 = vmul.f32 1.0, %v2086
          %v2088 = vld [vmem:[#allocation5] sm:$0xff]
          %v2089 = vld [vmem:[#allocation5 + $0x8] sm:$0xff]
          %v2090 = vld [vmem:[#allocation5 + $0x10] sm:$0xff]
          %v2091 = vld [vmem:[#allocation5 + $0x18] sm:$0xff]
          %2093 = vset.pattern.permute.xlu0 0
          %2094 = vperm.xlu0 %2093, %v2081
          %v2095 = vpop.permute.xlu0 %2094
          %2098 = vset.pattern.permute.xlu0 0
          %2099 = vperm.xlu0 %2098, %v2083
          %v2100 = vpop.permute.xlu0 %2099
          %2103 = vset.pattern.permute.xlu0 0
          %2104 = vperm.xlu0 %2103, %v2085
          %v2105 = vpop.permute.xlu0 %2104
          %2108 = vset.pattern.permute.xlu0 0
          %2109 = vperm.xlu0 %2108, %v2087
          %v2110 = vpop.permute.xlu0 %2109
          %v2112 = vmul.f32 %v2088, %v2095
          %v2113 = vmul.f32 %v2089, %v2100
          %v2114 = vmul.f32 %v2090, %v2105
          %v2115 = vmul.f32 %v2091, %v2110
          %v2116 = vcombine.low %v2112, %v2114
          %v2117 = vcombine.high %v2112, %v2114
          %v2119 = vunpack.c.l.s4 1983009808
          %v2120 = vunpack.c.0.s8 %v2119
          %v2121 = vlaneseq
          %v2122 = vshrl.u32 %v2121, 7
          %v2123 = vsub.s32 %v2120, %v2122
          %v2124 = vrot.slane %v2116, %v2123
          %v2126 = vunpack.c.l.s4 1983009808
          %v2127 = vunpack.c.0.s8 %v2126
          %v2128 = vlaneseq
          %v2129 = vshrl.u32 %v2128, 7
          %v2130 = vsub.s32 %v2127, %v2129
          %v2131 = vrot.slane %v2117, %v2130
          %v2132 = vcombine.low %v2113, %v2115
          %v2133 = vcombine.high %v2113, %v2115
          %v2135 = vunpack.c.l.s4 1983009808
          %v2136 = vunpack.c.0.s8 %v2135
          %v2137 = vlaneseq
          %v2138 = vshrl.u32 %v2137, 7
          %v2139 = vsub.s32 %v2136, %v2138
          %v2140 = vrot.slane %v2132, %v2139
          %v2142 = vunpack.c.l.s4 1983009808
          %v2143 = vunpack.c.0.s8 %v2142
          %v2144 = vlaneseq
          %v2145 = vshrl.u32 %v2144, 7
          %v2146 = vsub.s32 %v2143, %v2145
          %v2147 = vrot.slane %v2133, %v2146
          %v2148 = vcombine.low %v2124, %v2140
          %v2149 = vcombine.high %v2124, %v2140
          %v2151 = vunpack.c.l.s4 1934713408
          %v2152 = vunpack.c.0.s8 %v2151
          %v2153 = vlaneseq
          %v2154 = vshrl.u32 %v2153, 7
          %v2155 = vsub.s32 %v2152, %v2154
          %v2156 = vrot.slane %v2148, %v2155
          %v2158 = vunpack.c.l.s4 1934713408
          %v2159 = vunpack.c.0.s8 %v2158
          %v2160 = vlaneseq
          %v2161 = vshrl.u32 %v2160, 7
          %v2162 = vsub.s32 %v2159, %v2161
          %v2163 = vrot.slane %v2149, %v2162
          %v2164 = vcombine.low %v2131, %v2147
          %v2165 = vcombine.high %v2131, %v2147
          %v2167 = vunpack.c.l.s4 1934713408
          %v2168 = vunpack.c.0.s8 %v2167
          %v2169 = vlaneseq
          %v2170 = vshrl.u32 %v2169, 7
          %v2171 = vsub.s32 %v2168, %v2170
          %v2172 = vrot.slane %v2164, %v2171
          %v2174 = vunpack.c.l.s4 1934713408
          %v2175 = vunpack.c.0.s8 %v2174
          %v2176 = vlaneseq
          %v2177 = vshrl.u32 %v2176, 7
          %v2178 = vsub.s32 %v2175, %v2177
          %v2179 = vrot.slane %v2165, %v2178
          %v2180 = vcombine.high %v2156, 0.0
          %v2181 = vcombine.high %v2163, 0.0
          %v2182 = vcombine.high %v2172, 0.0
          %v2183 = vcombine.high %v2179, 0.0
          %v2184 = vcombine.low %v2156, %v2163
          %v2186 = vunpack.c.l.s4 1983009808
          %v2187 = vunpack.c.0.s8 %v2186
          %v2188 = vlaneseq
          %v2189 = vshrl.u32 %v2188, 7
          %v2190 = vsub.s32 %v2187, %v2189
          %v2191 = vrot.slane %v2184, %v2190
          %v2192 = vcombine.low %v2180, %v2181
          %v2194 = vunpack.c.l.s4 1983009808
          %v2195 = vunpack.c.0.s8 %v2194
          %v2196 = vlaneseq
          %v2197 = vshrl.u32 %v2196, 7
          %v2198 = vsub.s32 %v2195, %v2197
          %v2199 = vrot.slane %v2192, %v2198
          %v2200 = vcombine.low %v2172, %v2179
          %v2202 = vunpack.c.l.s4 1983009808
          %v2203 = vunpack.c.0.s8 %v2202
          %v2204 = vlaneseq
          %v2205 = vshrl.u32 %v2204, 7
          %v2206 = vsub.s32 %v2203, %v2205
          %v2207 = vrot.slane %v2200, %v2206
          %v2208 = vcombine.low %v2182, %v2183
          %v2210 = vunpack.c.l.s4 1983009808
          %v2211 = vunpack.c.0.s8 %v2210
          %v2212 = vlaneseq
          %v2213 = vshrl.u32 %v2212, 7
          %v2214 = vsub.s32 %v2211, %v2213
          %v2215 = vrot.slane %v2208, %v2214
          %v2216 = vcombine.low %v2191, %v2199
          %v2217 = vcombine.high %v2191, %v2199
          %v2219 = vunpack.c.l.s4 1934713408
          %v2220 = vunpack.c.0.s8 %v2219
          %v2221 = vlaneseq
          %v2222 = vshrl.u32 %v2221, 7
          %v2223 = vsub.s32 %v2220, %v2222
          %v2224 = vrot.slane %v2216, %v2223
          %v2226 = vunpack.c.l.s4 1934713408
          %v2227 = vunpack.c.0.s8 %v2226
          %v2228 = vlaneseq
          %v2229 = vshrl.u32 %v2228, 7
          %v2230 = vsub.s32 %v2227, %v2229
          %v2231 = vrot.slane %v2217, %v2230
          %v2232 = vcombine.low %v2207, %v2215
          %v2233 = vcombine.high %v2207, %v2215
          %v2235 = vunpack.c.l.s4 1934713408
          %v2236 = vunpack.c.0.s8 %v2235
          %v2237 = vlaneseq
          %v2238 = vshrl.u32 %v2237, 7
          %v2239 = vsub.s32 %v2236, %v2238
          %v2240 = vrot.slane %v2232, %v2239
          %v2242 = vunpack.c.l.s4 1934713408
          %v2243 = vunpack.c.0.s8 %v2242
          %v2244 = vlaneseq
          %v2245 = vshrl.u32 %v2244, 7
          %v2246 = vsub.s32 %v2243, %v2245
          %v2247 = vrot.slane %v2233, %v2246
          %v2248 = vcombine.low %v2224, %v2240
          %v2249 = vcombine.high %v2224, %v2240
          %v2250 = vcombine.low %v2231, %v2247
          %v2251 = vcombine.high %v2231, %v2247
          %2253 = vrot.lane.b32.xlu0 %v2249, 8
          %v2254 = vpop.permute.xlu0 %2253
          %2257 = vrot.lane.b32.xlu0 %v2250, 16
          %v2258 = vpop.permute.xlu0 %2257
          %2261 = vrot.lane.b32.xlu0 %v2251, 24
          %v2262 = vpop.permute.xlu0 %2261
          %v2264 = vsel %vm1465, %v2248, %v2254
          %vm2265 = vcmask 130048
          %v2266 = vsel %vm2265, %v2264, %v2258
          %vm2267 = vcmask 195584
          %v2268 = vsel %vm2267, %v2266, %v2262
          %v2269 = vpack.c.bf16 %v2268, %v2268
          %v2270 = vld [vmem:[#allocation8] sm:$0xf]
          %v2271 = vld [vmem:[#allocation8 + $0x4] sm:$0xf]
          %v2272 = vld [vmem:[#allocation8 + $0x8] sm:$0xf]
          %v2273 = vld [vmem:[#allocation8 + $0xc] sm:$0xf]
          %v2274 = vlaneseq
          %v2275 = vshrl.u32 %v2274, 7
          %v2276 = vsub.s32 3, %v2275
          %v2277 = vrot.slane %v492, %v2276
          %v2282 = vunpack.c.l.b16 %v2270
          %v2283 = vunpack.c.l.b16 %v2271
          %v2284 = vunpack.c.l.b16 %v2272
          %v2285 = vunpack.c.l.b16 %v2273
          %v2286 = vpack.c.b16 %v2283, %v2282
          %v2287 = vpack.c.b16 %v2285, %v2284
          %v2291 = vsel %vm695, %v2269, 0
          %2293 = vmatprep.subr.bf16.mxu0 0
          %2294 = vmatpush1.bf16.msra.mxu0 0
          %2295 = vmatprep.subr.bf16.mxu0 0
          %2296 = vmatpush1.bf16.msra.mxu0 0
          %2297 = vmatprep.subr.bf16.mxu0 0
          %2298 = vmatpush1.bf16.msra.mxu0 0
          %2299 = vmatprep.subr.bf16.mxu0 0
          %2300 = vmatpush1.bf16.msra.mxu0 0
          %2301 = vmatprep.subr.bf16.mxu0 0
          %2302 = vmatpush1.bf16.msra.mxu0 0
          %2303 = vmatprep.subr.bf16.mxu0 0
          %2304 = vmatpush1.bf16.msra.mxu0 0
          %2305 = vmatprep.subr.bf16.mxu0 0
          %2306 = vmatpush1.bf16.msra.mxu0 %v2287
          %2307 = vmatprep.subr.bf16.mxu0 0
          %2308 = vmatpush1.bf16.msra.mxu0 %v2286
          %2309 = vmatprep.subr.bf16.mxu0 0
          %2310 = vmatpush2.bf16.msra.mxu0 0
          %2311 = vmatprep.subr.bf16.mxu0 0
          %2312 = vmatpush2.bf16.msra.mxu0 0
          %2313 = vmatprep.subr.bf16.mxu0 0
          %2314 = vmatpush2.bf16.msra.mxu0 0
          %2315 = vmatprep.subr.bf16.mxu0 0
          %2316 = vmatpush2.bf16.msra.mxu0 0
          %2317 = vmatprep.subr.bf16.mxu0 0
          %2318 = vmatpush2.bf16.msra.mxu0 0
          %2319 = vmatprep.subr.bf16.mxu0 0
          %2320 = vmatpush2.bf16.msra.mxu0 0
          %2321 = vmatprep.subr.bf16.mxu0 0
          %2322 = vmatpush2.bf16.msra.mxu0 0
          %2323 = vmatprep.subr.bf16.mxu0 0
          %2324 = vmatpush2.bf16.msra.mxu0 0
          %2325 = vmatprep.mubr.bf16.mxu0 0
          %2326 = vmatmul.mubr.bf16.gmra.mxu0 %v2291
          %v2327 = vpop.f32.mrf.mxu0
          %v2328 = vadd.f32 %v2277, %v2327
          %v2329 = vpop.f32.mrf.mxu0
          %v2330 = vpop.f32.mrf.mxu0
          %v2331 = vpop.f32.mrf.mxu0
          %2332 = vdwg.mxu0
          %v2333 = vld [vmem:[%s473] sm:$0xff]
          %v2334 = vadd.f32 %v2328, %v2333
          %v2335 = vsel %vm695, %v2334, 0.0
          %2336 = vadd.xlane.f32.xlu0 %v2335
          %v2337 = vpop.xlane.xlu0 %2336
          %v2338 = vrcp.pop 32.0
          %v2339 = vmul.f32 %v2337, %v2338
          %v2340 = vsub.f32 %v2334, %v2339
          %v2341 = vmul.f32 %v2340, %v2340
          %v2342 = vsel %vm695, %v2341, 0.0
          %2343 = vadd.xlane.f32.xlu0 %v2342
          %v2344 = vpop.xlane.xlu0 %2343
          %v2345 = vmul.f32 %v2344, %v2338
          %v2346 = vadd.f32 %v2345, 1e-05
          %v2347 = vrsqrt.pop %v2346
          %v2348 = vmul.f32 %v2340, %v2347
          %v2349 = vlaneseq
          %v2350 = vshrl.u32 %v2349, 7
          %v2351 = vsub.s32 5, %v2350
          %v2352 = vrot.slane %v492, %v2351
          %v2353 = vmul.f32 %v2348, %v2352
          %v2354 = vlaneseq
          %v2355 = vshrl.u32 %v2354, 7
          %v2356 = vsub.s32 6, %v2355
          %v2357 = vrot.slane %v492, %v2356
          %v2358 = vadd.f32 %v2353, %v2357
          %v2359 = vpack.c.bf16 %v2358, %v2358
          %v2360 = vld [vmem:[#allocation10] sm:$0xf]
          %v2361 = vld [vmem:[#allocation10 + $0x4] sm:$0xf]
          %v2362 = vld [vmem:[#allocation10 + $0x8] sm:$0xf]
          %v2363 = vld [vmem:[#allocation10 + $0xc] sm:$0xf]
          %v2364 = vld [vmem:[%s9] sm:$0x1]
          %v2366 = vlaneseq
          %v2367 = vshrl.u32 %v2366, 7
          %v2368 = vsub.s32 0, %v2367
          %v2369 = vrot.slane %v2364, %v2368
          %v2375 = vunpack.c.l.b16 %v2360
          %v2376 = vunpack.c.l.b16 %v2361
          %v2377 = vunpack.c.l.b16 %v2362
          %v2378 = vunpack.c.l.b16 %v2363
          %v2379 = vpack.c.b16 %v2376, %v2375
          %v2380 = vpack.c.b16 %v2378, %v2377
          %v2384 = vsel %vm695, %v2359, 0
          %2386 = vmatprep.subr.bf16.mxu0 0
          %2387 = vmatpush1.bf16.msra.mxu0 0
          %2388 = vmatprep.subr.bf16.mxu0 0
          %2389 = vmatpush1.bf16.msra.mxu0 0
          %2390 = vmatprep.subr.bf16.mxu0 0
          %2391 = vmatpush1.bf16.msra.mxu0 0
          %2392 = vmatprep.subr.bf16.mxu0 0
          %2393 = vmatpush1.bf16.msra.mxu0 0
          %2394 = vmatprep.subr.bf16.mxu0 0
          %2395 = vmatpush1.bf16.msra.mxu0 0
          %2396 = vmatprep.subr.bf16.mxu0 0
          %2397 = vmatpush1.bf16.msra.mxu0 0
          %2398 = vmatprep.subr.bf16.mxu0 0
          %2399 = vmatpush1.bf16.msra.mxu0 %v2380
          %2400 = vmatprep.subr.bf16.mxu0 0
          %2401 = vmatpush1.bf16.msra.mxu0 %v2379
          %2402 = vmatprep.subr.bf16.mxu0 0
          %2403 = vmatpush2.bf16.msra.mxu0 0
          %2404 = vmatprep.subr.bf16.mxu0 0
          %2405 = vmatpush2.bf16.msra.mxu0 0
          %2406 = vmatprep.subr.bf16.mxu0 0
          %2407 = vmatpush2.bf16.msra.mxu0 0
          %2408 = vmatprep.subr.bf16.mxu0 0
          %2409 = vmatpush2.bf16.msra.mxu0 0
          %2410 = vmatprep.subr.bf16.mxu0 0
          %2411 = vmatpush2.bf16.msra.mxu0 0
          %2412 = vmatprep.subr.bf16.mxu0 0
          %2413 = vmatpush2.bf16.msra.mxu0 0
          %2414 = vmatprep.subr.bf16.mxu0 0
          %2415 = vmatpush2.bf16.msra.mxu0 0
          %2416 = vmatprep.subr.bf16.mxu0 0
          %2417 = vmatpush2.bf16.msra.mxu0 0
          %2418 = vmatprep.mubr.bf16.mxu0 0
          %2419 = vmatmul.mubr.bf16.gmra.mxu0 %v2384
          %v2420 = vpop.f32.mrf.mxu0
          %v2421 = vadd.f32 %v2369, %v2420
          %v2422 = vpop.f32.mrf.mxu0
          %v2423 = vpop.f32.mrf.mxu0
          %v2424 = vpop.f32.mrf.mxu0
          %2425 = vdwg.mxu0
          %v2426 = vmul.f32 %v2421, 0.5
          %v2427 = vmul.f32 %v2421, 0.70710677
          %v2428 = verf.f32.pop %v2427
          %v2429 = vadd.f32 %v2428, 1.0
          %v2430 = vmul.f32 %v2426, %v2429
          %v2431 = vpack.c.bf16 %v2430, %v2430
          %v2432 = vld [vmem:[%s7] sm:$0xf]
          %v2433 = vld [vmem:[%s7 + $0x4] sm:$0xf]
          %v2434 = vld [vmem:[%s7 + $0x8] sm:$0xf]
          %v2435 = vld [vmem:[%s7 + $0xc] sm:$0xf]
          %v2436 = vld [vmem:[%s7 + $0x10] sm:$0xf]
          %v2437 = vld [vmem:[%s7 + $0x14] sm:$0xf]
          %v2438 = vld [vmem:[%s7 + $0x18] sm:$0xf]
          %v2439 = vld [vmem:[%s7 + $0x1c] sm:$0xf]
          %v2440 = vlaneseq
          %v2441 = vshrl.u32 %v2440, 7
          %v2442 = vsub.s32 4, %v2441
          %v2443 = vrot.slane %v492, %v2442
          %v2452 = vunpack.c.l.b16 %v2432
          %v2453 = vunpack.c.l.b16 %v2433
          %v2454 = vunpack.c.l.b16 %v2434
          %v2455 = vunpack.c.l.b16 %v2435
          %v2456 = vunpack.c.l.b16 %v2436
          %v2457 = vunpack.c.l.b16 %v2437
          %v2458 = vunpack.c.l.b16 %v2438
          %v2459 = vunpack.c.l.b16 %v2439
          %v2460 = vpack.c.b16 %v2453, %v2452
          %v2461 = vpack.c.b16 %v2455, %v2454
          %v2462 = vpack.c.b16 %v2457, %v2456
          %v2463 = vpack.c.b16 %v2459, %v2458
          %vm2468 = vcmask 523264
          %v2470 = vsel %vm2468, %v2431, 0
          %2472 = vmatprep.subr.bf16.mxu0 0
          %2473 = vmatpush1.bf16.msra.mxu0 0
          %2474 = vmatprep.subr.bf16.mxu0 0
          %2475 = vmatpush1.bf16.msra.mxu0 0
          %2476 = vmatprep.subr.bf16.mxu0 0
          %2477 = vmatpush1.bf16.msra.mxu0 0
          %2478 = vmatprep.subr.bf16.mxu0 0
          %2479 = vmatpush1.bf16.msra.mxu0 0
          %2480 = vmatprep.subr.bf16.mxu0 0
          %2481 = vmatpush1.bf16.msra.mxu0 %v2463
          %2482 = vmatprep.subr.bf16.mxu0 0
          %2483 = vmatpush1.bf16.msra.mxu0 %v2462
          %2484 = vmatprep.subr.bf16.mxu0 0
          %2485 = vmatpush1.bf16.msra.mxu0 %v2461
          %2486 = vmatprep.subr.bf16.mxu0 0
          %2487 = vmatpush1.bf16.msra.mxu0 %v2460
          %2488 = vmatprep.subr.bf16.mxu0 0
          %2489 = vmatpush2.bf16.msra.mxu0 0
          %2490 = vmatprep.subr.bf16.mxu0 0
          %2491 = vmatpush2.bf16.msra.mxu0 0
          %2492 = vmatprep.subr.bf16.mxu0 0
          %2493 = vmatpush2.bf16.msra.mxu0 0
          %2494 = vmatprep.subr.bf16.mxu0 0
          %2495 = vmatpush2.bf16.msra.mxu0 0
          %2496 = vmatprep.subr.bf16.mxu0 0
          %2497 = vmatpush2.bf16.msra.mxu0 0
          %2498 = vmatprep.subr.bf16.mxu0 0
          %2499 = vmatpush2.bf16.msra.mxu0 0
          %2500 = vmatprep.subr.bf16.mxu0 0
          %2501 = vmatpush2.bf16.msra.mxu0 0
          %2502 = vmatprep.subr.bf16.mxu0 0
          %2503 = vmatpush2.bf16.msra.mxu0 0
          %2504 = vmatprep.mubr.bf16.mxu0 0
          %2505 = vmatmul.mubr.bf16.gmra.mxu0 %v2470
          %v2506 = vpop.f32.mrf.mxu0
          %v2507 = vadd.f32 %v2443, %v2506
          %v2508 = vpop.f32.mrf.mxu0
          %v2509 = vpop.f32.mrf.mxu0
          %v2510 = vpop.f32.mrf.mxu0
          %2511 = vdwg.mxu0
          %v2512 = vadd.f32 %v2507, %v2358
          %v2513 = vsel %vm695, %v2512, 0.0
          %2514 = vadd.xlane.f32.xlu0 %v2513
          %v2515 = vpop.xlane.xlu0 %2514
          %v2516 = vmul.f32 %v2515, %v2338
          %v2517 = vsub.f32 %v2512, %v2516
          %v2518 = vmul.f32 %v2517, %v2517
          %v2519 = vsel %vm695, %v2518, 0.0
          %2520 = vadd.xlane.f32.xlu0 %v2519
          %v2521 = vpop.xlane.xlu0 %2520
          %v2522 = vmul.f32 %v2521, %v2338
          %v2523 = vadd.f32 %v2522, 1e-05
          %v2524 = vrsqrt.pop %v2523
          %v2525 = vmul.f32 %v2517, %v2524
          %v2526 = vlaneseq
          %v2527 = vshrl.u32 %v2526, 7
          %v2528 = vsub.s32 7, %v2527
          %v2529 = vrot.slane %v492, %v2528
          %v2530 = vmul.f32 %v2525, %v2529
          %v2531 = vlaneseq
          %v2532 = vshrl.u32 %v2531, 7
          %v2533 = vsub.s32 0, %v2532
          %v2534 = vrot.slane %v493, %v2533
          %v2535 = vadd.f32 %v2530, %v2534
          %2536 = vst.msk [vmem:[%s490] sm:$0xff] %vm695, %v2535
        $region84: #{decoder_forward_prepared.2} parent=59 // pred_fallthru
          _
        %p2537 = scmp.lt.s32.totalorder %s29, 1
        %s2538 = scalar_select %p2537, %s29, 1
        %p2539 = scmp.lt.s32.totalorder %s30, 0
        %s2540 = scalar_select %p2539, %s30, 0
        %s2541 = sadd.s32 %s2540, %s2538
        %s2542 = smul.addr %s2541, 8
        %s2543 = scalar_lea.vmem %s10, %s2542
        // Predicated region
        $region85: #{decoder_forward_prepared.2} parent=59 // pred_check
          %p2544 = pneg %p289
        $region86: #{decoder_forward_prepared.2} parent=59 // pred_check_branch
          %2546 = sbr.rel (%p2544) target = $region88
        $region87: #{decoder_forward_prepared.2} parent=59 // pred_region
          _
        $region88: #{decoder_forward_prepared.2} parent=59 // pred_fallthru
          _
      $region60: #{decoder_forward_prepared.2} parent=5 // pred_fallthru
        _
      %p2547 = scmp.le.s32.totalorder 2, %s19
      // Predicated region
      $region89: #{decoder_forward_prepared.2} parent=5 // pred_check
        %p2548 = pneg %p2547
      $region90: #{decoder_forward_prepared.2} parent=5 // pred_check_branch
        %2550 = sbr.rel (%p2548) target = $region92
      $region91: #{decoder_forward_prepared.2} parent=5 // pred_region
        %s2551 = ssub.s32 %s19, 2
        // Predicated region
        $region93: #{decoder_forward_prepared.2} parent=91 // pred_check
          %p2552 = pneg %p295
        $region94: #{decoder_forward_prepared.2} parent=91 // pred_check_branch
          %2554 = sbr.rel (%p2552) target = $region96
        $region95: #{decoder_forward_prepared.2} parent=91 // pred_region
          %p2555 = scmp.lt.s32.totalorder %s32, 1
          %s2556 = scalar_select %p2555, %s32, 1
          %p2557 = scmp.lt.s32.totalorder %s33, 0
          %s2558 = scalar_select %p2557, %s33, 0
          %s2559 = sadd.s32 %s2558, %s2556
          %s2560 = smul.addr %s2559, 8
          %s2561 = scalar_lea.vmem %s10, %s2560
        $region96: #{decoder_forward_prepared.2} parent=91 // pred_fallthru
          _
      $region92: #{decoder_forward_prepared.2} parent=5 // pred_fallthru
        _
    $region6: #{decoder_forward_prepared.2} parent=1 // loop_footer
      %s23 = sadd.s32 1, %s19
    $region7: #{decoder_forward_prepared.2} parent=1 // loop_footer_branch
      %18 = sbr.rel target = $region3
    $region8: #{decoder_forward_prepared.2} parent=1 // loop_exit
      _
    %2562 = vsyncpa [#allocation7], 1
    %s2563 = scalar_lea.sflag [#allocation7], 1
    %2564 = vsyncpa %s2563, 1
    %2565 = vsyncpa [#allocation9], 1
    %2566 = vsyncpa [#allocation12], 1

</llo_original>
